<compile_context>
chip_gen: v6e
topology: v6e:2x2x1
jax: 0.10.0
libtpu: 0.0.40
codegen_flags: <defaults>
</compile_context>

<pallas_src>
import functools

import jax
import jax.numpy as jnp
from jax import lax
from jax.experimental import pallas as pl
from jax.experimental.pallas import tpu as pltpu

# Explicit MXU precision: match the f32 reference (documented choice; default
# precision would be faster but numerically weaker for PINN use).
_HP = lax.Precision.HIGHEST


def _mlp_kernel(x_ref, w_in_ref, b_in_ref, w_hid_ref, b_hid_ref,
                w_out_ref, b_out_ref, o_ref, *, chunk):
    """One batch tile.

    x_ref: (TILE_B, input_dim)   -- natural HBM layout, no wrapper transpose.
    o_ref: (output_dim, TILE_B)  -- batch on the lane axis => lane-dense store.
    Weights keep PyTorch (out_features, in_features) orientation.
    """
    tile_b = x_ref.shape[0]
    num_hidden = w_hid_ref.shape[0]
    n_chunks = tile_b // chunk

    # Visible loop over batch chunks bounds vreg live ranges: each chunk keeps
    # only a (hidden, chunk) activation alive while the full layer stack runs.
    @pl.loop(0, n_chunks)
    def _(c):
        start = pl.multiple_of(c * chunk, chunk)
        xc = x_ref[pl.ds(start, chunk), :]                    # (chunk, in_dim)
        # First layer: W_in @ xc^T by contracting the input_dim axis of both
        # operands directly on the MXU (no explicit activation transpose).
        h = jnp.tanh(
            lax.dot_general(w_in_ref[...], xc, (((1,), (1,)), ((), ())),
                            preferred_element_type=jnp.float32, precision=_HP)
            + b_in_ref[...])                                  # (hidden, chunk)
        # Hidden layers + tanh (static Python loop; L known at trace time and
        # small). jnp.tanh lowers to the native EUP tanh on Mosaic.
        for i in range(num_hidden):
            h = jnp.tanh(
                jnp.dot(w_hid_ref[i], h,
                        preferred_element_type=jnp.float32, precision=_HP)
                + b_hid_ref[i])
        # Output layer (no activation), lane-dense store into this chunk.
        o_ref[:, pl.ds(start, chunk)] = (
            jnp.dot(w_out_ref[...], h,
                    preferred_element_type=jnp.float32, precision=_HP)
            + b_out_ref[...]).astype(o_ref.dtype)


def ann_pinn_forward(x, params, *, tile_b=2048, chunk=512):
    """Full ANN_PINN forward pass: one pallas_call, gridded over the batch."""
    w_in, b_in, w_hid, b_hid, w_out, b_out = params
    batch, input_dim = x.shape
    hidden_dim = w_in.shape[0]
    output_dim = w_out.shape[0]
    num_hidden = w_hid.shape[0]

    # Clamp the batch tile: a multiple of 128 keeps the (output_dim, tile_b)
    # output block lane-aligned for any batch, and small batches don't get
    # inflated to the full default tile.
    tile_b = max(128, min(tile_b, ((batch + 127) // 128) * 128))
    # Chunk must divide tile_b; tile_b is always a multiple of 128.
    chunk = chunk if (chunk <= tile_b and tile_b % chunk == 0) else 128
    num_tiles = pl.cdiv(batch, tile_b)

    flops = 2 * batch * (input_dim * hidden_dim
                         + num_hidden * hidden_dim * hidden_dim
                         + hidden_dim * output_dim)
    transcendentals = batch * (num_hidden + 1) * hidden_dim
    weight_bytes = 4 * sum(int(p.size) for p in params)
    bytes_accessed = 4 * batch * (input_dim + output_dim) + weight_bytes

    out_t = pl.pallas_call(
        functools.partial(_mlp_kernel, chunk=chunk),
        out_shape=jax.ShapeDtypeStruct((output_dim, batch), jnp.float32),
        grid=(num_tiles,),
        in_specs=[
            # x streams per batch tile in its natural (batch, input_dim) layout.
            pl.BlockSpec((tile_b, input_dim), lambda i: (i, 0)),
            # Tiny weights (~13 KB total) stay resident via constant index maps.
            pl.BlockSpec((hidden_dim, input_dim), lambda i: (0, 0)),
            pl.BlockSpec((hidden_dim, 1), lambda i: (0, 0)),
            pl.BlockSpec((num_hidden, hidden_dim, hidden_dim),
                         lambda i: (0, 0, 0)),
            pl.BlockSpec((num_hidden, hidden_dim, 1), lambda i: (0, 0, 0)),
            pl.BlockSpec((output_dim, hidden_dim), lambda i: (0, 0)),
            pl.BlockSpec((output_dim, 1), lambda i: (0, 0)),
        ],
        out_specs=pl.BlockSpec((output_dim, tile_b), lambda i: (0, i)),
        compiler_params=pltpu.CompilerParams(
            dimension_semantics=("parallel",)),
        cost_estimate=pl.CostEstimate(
            flops=flops,
            transcendentals=transcendentals,
            bytes_accessed=bytes_accessed),
    )(x, w_in, b_in, w_hid, b_hid, w_out, b_out)

    # Return the standard (batch, output_dim) layout (tiny transpose).
    return out_t.T


def init_params(key, input_dim, hidden_dim, output_dim, num_hidden_layers):
    """PyTorch-style U(-1/sqrt(fan_in), 1/sqrt(fan_in)) init.

    Weights keep nn.Linear orientation (out_features, in_features); biases are
    stored as (out_features, 1) columns for the transposed kernel layout.
    """
    keys = jax.random.split(key, 6)

    def uni(k, shape, fan_in):
        bound = float(fan_in) ** -0.5
        return jax.random.uniform(k, shape, jnp.float32, -bound, bound)

    w_in = uni(keys[0], (hidden_dim, input_dim), input_dim)
    b_in = uni(keys[1], (hidden_dim, 1), input_dim)
    w_hid = uni(keys[2], (num_hidden_layers, hidden_dim, hidden_dim), hidden_dim)
    b_hid = uni(keys[3], (num_hidden_layers, hidden_dim, 1), hidden_dim)
    w_out = uni(keys[4], (output_dim, hidden_dim), hidden_dim)
    b_out = uni(keys[5], (output_dim, 1), hidden_dim)
    return (w_in, b_in, w_hid, b_hid, w_out, b_out)


def reference_forward(x, params):
    """Pure-JAX reference (batch-major, like the PyTorch module)."""
    w_in, b_in, w_hid, b_hid, w_out, b_out = params
    h = jnp.tanh(jnp.dot(x, w_in.T, precision=_HP) + b_in[:, 0])
    for i in range(w_hid.shape[0]):
        h = jnp.tanh(jnp.dot(h, w_hid[i].T, precision=_HP) + b_hid[i, :, 0])
    return jnp.dot(h, w_out.T, precision=_HP) + b_out[:, 0]


if __name__ == "__main__":
    # Small PINN-style shapes: 2 input coords (x, t), 1 output, 32 hidden.
    input_dim = 2
    hidden_dim = 32
    output_dim = 1
    num_hidden_layers = 3
    batch = 8

    key = jax.random.PRNGKey(0)
    k_x, k_p = jax.random.split(key)
    x = jax.random.normal(k_x, (batch, input_dim), jnp.float32)
    params = init_params(k_p, input_dim, hidden_dim, output_dim,
                         num_hidden_layers)

    out = ann_pinn_forward(x, params)
    out = jax.block_until_ready(out)

    ref = reference_forward(x, params)
    assert out.shape == (batch, output_dim), out.shape
    assert jnp.allclose(out, ref, atol=1e-5, rtol=1e-5), (out, ref)

    print("KERNEL_OK")
</pallas_src>

<mosaic_0001>
module attributes {stable_mosaic.version = 11 : i64} {
  func.func @_mlp_kernel(%arg0: i32, %arg1: memref<128x2xf32, #tpu.memory_space<vmem>>, %arg2: memref<32x2xf32, #tpu.memory_space<vmem>>, %arg3: memref<32x1xf32, #tpu.memory_space<vmem>>, %arg4: memref<3x32x32xf32, #tpu.memory_space<vmem>>, %arg5: memref<3x32x1xf32, #tpu.memory_space<vmem>>, %arg6: memref<1x32xf32, #tpu.memory_space<vmem>>, %arg7: memref<1x1xf32, #tpu.memory_space<vmem>>, %arg8: memref<1x128xf32, #tpu.memory_space<vmem>>) attributes {dimension_semantics = [#tpu.dimension_semantics<parallel>], iteration_bounds = array<i64: 1>, scalar_prefetch = 0 : i64, scratch_operands = 0 : i64, tpu.core_type = #tpu.core_type<tc>, window_params = [{transform_indices = @transform_0, window_bounds = array<i64: 128, 2>}, {pipeline_mode = #tpu.pipeline_mode<synchronous>, transform_indices = @transform_1, window_bounds = array<i64: 32, 2>}, {pipeline_mode = #tpu.pipeline_mode<synchronous>, transform_indices = @transform_2, window_bounds = array<i64: 32, 1>}, {pipeline_mode = #tpu.pipeline_mode<synchronous>, transform_indices = @transform_3, window_bounds = array<i64: 3, 32, 32>}, {pipeline_mode = #tpu.pipeline_mode<synchronous>, transform_indices = @transform_4, window_bounds = array<i64: 3, 32, 1>}, {pipeline_mode = #tpu.pipeline_mode<synchronous>, transform_indices = @transform_5, window_bounds = array<i64: 1, 32>}, {pipeline_mode = #tpu.pipeline_mode<synchronous>, transform_indices = @transform_6, window_bounds = array<i64: 1, 1>}, {transform_indices = @transform_7, window_bounds = array<i64: 1, 128>}]} {
    %c0_i32 = arith.constant 0 : i32
    %c1_i32 = arith.constant 1 : i32
    %0 = arith.muli %c0_i32, %c1_i32 : i32
    %c0_i32_0 = arith.constant 0 : i32
    %1 = arith.addi %c0_i32_0, %0 : i32
    %c128_i32 = arith.constant 128 : i32
    %2 = arith.muli %1, %c128_i32 : i32
    %3 = tpu.assume_multiple %2, 128 : i32
    %4 = arith.index_cast %3 : i32 to index
    %c0 = arith.constant 0 : index
    %5 = vector.load %arg1[%4, %c0] : memref<128x2xf32, #tpu.memory_space<vmem>>, vector<128x2xf32>
    %c0_1 = arith.constant 0 : index
    %c0_2 = arith.constant 0 : index
    %6 = vector.load %arg2[%c0_1, %c0_2] : memref<32x2xf32, #tpu.memory_space<vmem>>, vector<32x2xf32>
    %cst = arith.constant dense<0.000000e+00> : vector<32x128xf32>
    %7 = tpu.matmul %6, %5, %cst {dimension_numbers = #tpu.dot_dimension_numbers<[1], [1], [0], [0], [0, 0, 1, 0], [], []>, precision = #tpu.contract_precision<fp32>} : vector<32x2xf32>, vector<128x2xf32>, vector<32x128xf32> -> vector<32x128xf32>
    %c0_3 = arith.constant 0 : index
    %c0_4 = arith.constant 0 : index
    %8 = vector.load %arg3[%c0_3, %c0_4] : memref<32x1xf32, #tpu.memory_space<vmem>>, vector<32x1xf32>
    %9 = vector.broadcast %8 : vector<32x1xf32> to vector<32x128xf32>
    %10 = arith.addf %7, %9 : vector<32x128xf32>
    %11 = math.tanh %10 : vector<32x128xf32>
    %c0_5 = arith.constant 0 : index
    %c0_6 = arith.constant 0 : index
    %c0_7 = arith.constant 0 : index
    %12 = vector.load %arg4[%c0_5, %c0_6, %c0_7] : memref<3x32x32xf32, #tpu.memory_space<vmem>>, vector<1x32x32xf32>
    %13 = vector.shape_cast %12 : vector<1x32x32xf32> to vector<32x32xf32>
    %cst_8 = arith.constant dense<0.000000e+00> : vector<32x128xf32>
    %14 = tpu.matmul %13, %11, %cst_8 {dimension_numbers = #tpu.dot_dimension_numbers<[1], [0], [0], [1], [0, 0, 1, 1], [], []>, precision = #tpu.contract_precision<fp32>} : vector<32x32xf32>, vector<32x128xf32>, vector<32x128xf32> -> vector<32x128xf32>
    %c0_9 = arith.constant 0 : index
    %c0_10 = arith.constant 0 : index
    %c0_11 = arith.constant 0 : index
    %15 = vector.load %arg5[%c0_9, %c0_10, %c0_11] : memref<3x32x1xf32, #tpu.memory_space<vmem>>, vector<1x32x1xf32>
    %16 = vector.shape_cast %15 : vector<1x32x1xf32> to vector<32x1xf32>
    %17 = vector.broadcast %16 : vector<32x1xf32> to vector<32x128xf32>
    %18 = arith.addf %14, %17 : vector<32x128xf32>
    %19 = math.tanh %18 : vector<32x128xf32>
    %c1 = arith.constant 1 : index
    %c0_12 = arith.constant 0 : index
    %c0_13 = arith.constant 0 : index
    %20 = vector.load %arg4[%c1, %c0_12, %c0_13] : memref<3x32x32xf32, #tpu.memory_space<vmem>>, vector<1x32x32xf32>
    %21 = vector.shape_cast %20 : vector<1x32x32xf32> to vector<32x32xf32>
    %cst_14 = arith.constant dense<0.000000e+00> : vector<32x128xf32>
    %22 = tpu.matmul %21, %19, %cst_14 {dimension_numbers = #tpu.dot_dimension_numbers<[1], [0], [0], [1], [0, 0, 1, 1], [], []>, precision = #tpu.contract_precision<fp32>} : vector<32x32xf32>, vector<32x128xf32>, vector<32x128xf32> -> vector<32x128xf32>
    %c1_15 = arith.constant 1 : index
    %c0_16 = arith.constant 0 : index
    %c0_17 = arith.constant 0 : index
    %23 = vector.load %arg5[%c1_15, %c0_16, %c0_17] : memref<3x32x1xf32, #tpu.memory_space<vmem>>, vector<1x32x1xf32>
    %24 = vector.shape_cast %23 : vector<1x32x1xf32> to vector<32x1xf32>
    %25 = vector.broadcast %24 : vector<32x1xf32> to vector<32x128xf32>
    %26 = arith.addf %22, %25 : vector<32x128xf32>
    %27 = math.tanh %26 : vector<32x128xf32>
    %c2 = arith.constant 2 : index
    %c0_18 = arith.constant 0 : index
    %c0_19 = arith.constant 0 : index
    %28 = vector.load %arg4[%c2, %c0_18, %c0_19] : memref<3x32x32xf32, #tpu.memory_space<vmem>>, vector<1x32x32xf32>
    %29 = vector.shape_cast %28 : vector<1x32x32xf32> to vector<32x32xf32>
    %cst_20 = arith.constant dense<0.000000e+00> : vector<32x128xf32>
    %30 = tpu.matmul %29, %27, %cst_20 {dimension_numbers = #tpu.dot_dimension_numbers<[1], [0], [0], [1], [0, 0, 1, 1], [], []>, precision = #tpu.contract_precision<fp32>} : vector<32x32xf32>, vector<32x128xf32>, vector<32x128xf32> -> vector<32x128xf32>
    %c2_21 = arith.constant 2 : index
    %c0_22 = arith.constant 0 : index
    %c0_23 = arith.constant 0 : index
    %31 = vector.load %arg5[%c2_21, %c0_22, %c0_23] : memref<3x32x1xf32, #tpu.memory_space<vmem>>, vector<1x32x1xf32>
    %32 = vector.shape_cast %31 : vector<1x32x1xf32> to vector<32x1xf32>
    %33 = vector.broadcast %32 : vector<32x1xf32> to vector<32x128xf32>
    %34 = arith.addf %30, %33 : vector<32x128xf32>
    %35 = math.tanh %34 : vector<32x128xf32>
    %c0_24 = arith.constant 0 : index
    %c0_25 = arith.constant 0 : index
    %36 = vector.load %arg6[%c0_24, %c0_25] : memref<1x32xf32, #tpu.memory_space<vmem>>, vector<1x32xf32>
    %cst_26 = arith.constant dense<0.000000e+00> : vector<1x128xf32>
    %37 = tpu.matmul %36, %35, %cst_26 {dimension_numbers = #tpu.dot_dimension_numbers<[1], [0], [0], [1], [0, 0, 1, 1], [], []>, precision = #tpu.contract_precision<fp32>} : vector<1x32xf32>, vector<32x128xf32>, vector<1x128xf32> -> vector<1x128xf32>
    %c0_27 = arith.constant 0 : index
    %c0_28 = arith.constant 0 : index
    %38 = vector.load %arg7[%c0_27, %c0_28] : memref<1x1xf32, #tpu.memory_space<vmem>>, vector<1x1xf32>
    %39 = vector.broadcast %38 : vector<1x1xf32> to vector<1x128xf32>
    %40 = arith.addf %37, %39 : vector<1x128xf32>
    %c0_29 = arith.constant 0 : index
    %41 = arith.index_cast %3 : i32 to index
    %42 = vector.load %arg8[%c0_29, %41] : memref<1x128xf32, #tpu.memory_space<vmem>>, vector<1x128xf32>
    tpu.vector_store %arg8[%c0_29, %41], %40 {strides = array<i32>} : memref<1x128xf32, #tpu.memory_space<vmem>>, vector<1x128xf32>,
    %c1_i32_30 = arith.constant 1 : i32
    return
  }
  func.func @transform_0(%arg0: i32) -> (i32, i32) {
    %c0_i32 = arith.constant 0 : i32
    %c0_i32_0 = arith.constant 0 : i32
    return %arg0, %c0_i32 : i32, i32
  }
  func.func @transform_1(%arg0: i32) -> (i32, i32) {
    %c0_i32 = arith.constant 0 : i32
    %c0_i32_0 = arith.constant 0 : i32
    %c0_i32_1 = arith.constant 0 : i32
    return %c0_i32, %c0_i32_0 : i32, i32
  }
  func.func @transform_2(%arg0: i32) -> (i32, i32) {
    %c0_i32 = arith.constant 0 : i32
    %c0_i32_0 = arith.constant 0 : i32
    %c0_i32_1 = arith.constant 0 : i32
    return %c0_i32, %c0_i32_0 : i32, i32
  }
  func.func @transform_3(%arg0: i32) -> (i32, i32, i32) {
    %c0_i32 = arith.constant 0 : i32
    %c0_i32_0 = arith.constant 0 : i32
    %c0_i32_1 = arith.constant 0 : i32
    %c0_i32_2 = arith.constant 0 : i32
    return %c0_i32, %c0_i32_0, %c0_i32_1 : i32, i32, i32
  }
  func.func @transform_4(%arg0: i32) -> (i32, i32, i32) {
    %c0_i32 = arith.constant 0 : i32
    %c0_i32_0 = arith.constant 0 : i32
    %c0_i32_1 = arith.constant 0 : i32
    %c0_i32_2 = arith.constant 0 : i32
    return %c0_i32, %c0_i32_0, %c0_i32_1 : i32, i32, i32
  }
  func.func @transform_5(%arg0: i32) -> (i32, i32) {
    %c0_i32 = arith.constant 0 : i32
    %c0_i32_0 = arith.constant 0 : i32
    %c0_i32_1 = arith.constant 0 : i32
    return %c0_i32, %c0_i32_0 : i32, i32
  }
  func.func @transform_6(%arg0: i32) -> (i32, i32) {
    %c0_i32 = arith.constant 0 : i32
    %c0_i32_0 = arith.constant 0 : i32
    %c0_i32_1 = arith.constant 0 : i32
    return %c0_i32, %c0_i32_0 : i32, i32
  }
  func.func @transform_7(%arg0: i32) -> (i32, i32) {
    %c0_i32 = arith.constant 0 : i32
    %c0_i32_0 = arith.constant 0 : i32
    return %c0_i32, %arg0 : i32, i32
  }
}

</mosaic_0001>

<llo_original>
// kernel: tpu_custom_call.1
$region0: #{tpu_custom_call.1}
  #allocation0 [shape = 'u32[]', space=smem, size = 0x4, offset = 0x4, fixed_abs, tag = 'smem constant byte address 0x4 - core index']
  #allocation1 [shape = 'u32[144,128]{1,0:T(1,128)}', space=vmem, size = 0x12000, scoped, tag = 'internal scratch']
  #allocation2 [shape = 'f32[1,1]{1,0:T(1,128)S(1)}', space=vmem, size = 0x200, scoped, tag = 'scoped memory for tpu_custom_call.1']
  %s0 = inlined_call_operand.vmem [shape: f32[8,2], index: 0, kind: input, shape index: {}]
  %s1 = inlined_call_operand.vmem [shape: f32[32,2], index: 1, kind: input, shape index: {}]
  %s2 = inlined_call_operand.vmem [shape: f32[32,1], index: 2, kind: input, shape index: {}]
  %s3 = inlined_call_operand.vmem [shape: f32[3,32,32], index: 3, kind: input, shape index: {}]
  %s4 = inlined_call_operand.vmem [shape: f32[3,32,1], index: 4, kind: input, shape index: {}]
  %s5 = inlined_call_operand.vmem [shape: f32[1,32], index: 5, kind: input, shape index: {}]
  %s6 = inlined_call_operand.<no memory space> [shape: f32[1,1], index: 6, kind: input, shape index: {}]
  %s7 = inlined_call_operand.hbm [shape: f32[1,8], index: 7, kind: output, shape index: {}]
  %s8 = sld [smem:[#allocation0]]
  $region38: #{tpu_custom_call.1} parent=0
    _
  %s10 = ssub.s32 1, %s8
  %s11 = scalar_select 0, %s10, %s8
  %v12 = vstv %s6
  %13 = vst [vmem:[#allocation2] sm:$0x1] %v12
  $region1: #{tpu_custom_call.1} parent=0
    #allocation3 [shape = 'u8[512]{0}', space=vmem, size = 0x400, scoped, tag = 'output window, operand 0, single buffered']
    #allocation4 [shape = 's32[1]{0}', space=sflag, size = 0x4, scoped, tag = 'scoped memory for tpu_custom_call.1']
    %14 = vsyncpa [#allocation4], 0
    // Predicated region
    $region2: #{tpu_custom_call.1} parent=1 // pred_check
      _
    $region3: #{tpu_custom_call.1} parent=1 // pred_check_branch
      %16 = sbr.rel (0) target = $region5
    $region4: #{tpu_custom_call.1} parent=1 // pred_region
      _
    $region5: #{tpu_custom_call.1} parent=1 // pred_fallthru
      _
    // Predicated region
    $region6: #{tpu_custom_call.1} parent=1 // pred_check
      _
    $region7: #{tpu_custom_call.1} parent=1 // pred_check_branch
      %18 = sbr.rel (0) target = $region9
    $region8: #{tpu_custom_call.1} parent=1 // pred_region
      _
    $region9: #{tpu_custom_call.1} parent=1 // pred_fallthru
      _
    // Predicated region
    $region10: #{tpu_custom_call.1} parent=1 // pred_check
      _
    $region11: #{tpu_custom_call.1} parent=1 // pred_check_branch
      %20 = sbr.rel (0) target = $region13
    $region12: #{tpu_custom_call.1} parent=1 // pred_region
      _
    $region13: #{tpu_custom_call.1} parent=1 // pred_fallthru
      _
    // Predicated region
    $region14: #{tpu_custom_call.1} parent=1 // pred_check
      _
    $region15: #{tpu_custom_call.1} parent=1 // pred_check_branch
      %22 = sbr.rel (0) target = $region17
    $region16: #{tpu_custom_call.1} parent=1 // pred_region
      _
    $region17: #{tpu_custom_call.1} parent=1 // pred_fallthru
      _
    // Predicated region
    $region18: #{tpu_custom_call.1} parent=1 // pred_check
      _
    $region19: #{tpu_custom_call.1} parent=1 // pred_check_branch
      %24 = sbr.rel (0) target = $region21
    $region20: #{tpu_custom_call.1} parent=1 // pred_region
      _
    $region21: #{tpu_custom_call.1} parent=1 // pred_fallthru
      _
    // Predicated region
    $region22: #{tpu_custom_call.1} parent=1 // pred_check
      _
    $region23: #{tpu_custom_call.1} parent=1 // pred_check_branch
      %26 = sbr.rel (0) target = $region25
    $region24: #{tpu_custom_call.1} parent=1 // pred_region
      _
    $region25: #{tpu_custom_call.1} parent=1 // pred_fallthru
      _
    // Predicated region
    $region26: #{tpu_custom_call.1} parent=1 // pred_check
      _
    $region27: #{tpu_custom_call.1} parent=1 // pred_check_branch
      %28 = sbr.rel (0) target = $region29
    $region28: #{tpu_custom_call.1} parent=1 // pred_region
      _
    $region29: #{tpu_custom_call.1} parent=1 // pred_fallthru
      _
    %v29 = vld [vmem:[%s0] sm:$0xff]
    %v30 = vld [vmem:[%s0 + $0x8] sm:$0xff]
    %v31 = vld [vmem:[%s0 + $0x10] sm:$0xff]
    %v32 = vld [vmem:[%s0 + $0x18] sm:$0xff]
    %v33 = vld [vmem:[%s0 + $0x20] sm:$0xff]
    %v34 = vld [vmem:[%s0 + $0x28] sm:$0xff]
    %v35 = vld [vmem:[%s0 + $0x30] sm:$0xff]
    %v36 = vld [vmem:[%s0 + $0x38] sm:$0xff]
    %v37 = vld [vmem:[%s0 + $0x40] sm:$0xff]
    %v38 = vld [vmem:[%s0 + $0x48] sm:$0xff]
    %v39 = vld [vmem:[%s0 + $0x50] sm:$0xff]
    %v40 = vld [vmem:[%s0 + $0x58] sm:$0xff]
    %v41 = vld [vmem:[%s0 + $0x60] sm:$0xff]
    %v42 = vld [vmem:[%s0 + $0x68] sm:$0xff]
    %v43 = vld [vmem:[%s0 + $0x70] sm:$0xff]
    %v44 = vld [vmem:[%s0 + $0x78] sm:$0xff]
    %v45 = vld [vmem:[%s1] sm:$0xff]
    %v46 = vld [vmem:[%s1 + $0x8] sm:$0xff]
    %v47 = vld [vmem:[%s1 + $0x10] sm:$0xff]
    %v48 = vld [vmem:[%s1 + $0x18] sm:$0xff]
    %v49 = vld [vmem:[%s2] sm:$0xff]
    %v50 = vld [vmem:[%s2 + $0x8] sm:$0xff]
    %v51 = vld [vmem:[%s2 + $0x10] sm:$0xff]
    %v52 = vld [vmem:[%s2 + $0x18] sm:$0xff]
    %54 = vset.pattern.permute.xlu0 0
    %55 = vperm.xlu0 %54, %v49
    %v56 = vpop.permute.xlu0 %55
    %59 = vset.pattern.permute.xlu0 0
    %60 = vperm.xlu0 %59, %v50
    %v61 = vpop.permute.xlu0 %60
    %64 = vset.pattern.permute.xlu0 0
    %65 = vperm.xlu0 %64, %v51
    %v66 = vpop.permute.xlu0 %65
    %69 = vset.pattern.permute.xlu0 0
    %70 = vperm.xlu0 %69, %v52
    %v71 = vpop.permute.xlu0 %70
    %vm73 = vcmask 15360
    %v75 = vsel %vm73, %v45, 0
    %v78 = vsel %vm73, %v46, 0
    %v81 = vsel %vm73, %v47, 0
    %v84 = vsel %vm73, %v48, 0
    %v87 = vsel %vm73, %v29, 0
    %v90 = vsel %vm73, %v30, 0
    %v93 = vsel %vm73, %v31, 0
    %v96 = vsel %vm73, %v32, 0
    %v99 = vsel %vm73, %v33, 0
    %v102 = vsel %vm73, %v34, 0
    %v105 = vsel %vm73, %v35, 0
    %v108 = vsel %vm73, %v36, 0
    %v111 = vsel %vm73, %v37, 0
    %v114 = vsel %vm73, %v38, 0
    %v117 = vsel %vm73, %v39, 0
    %v120 = vsel %vm73, %v40, 0
    %v123 = vsel %vm73, %v41, 0
    %v126 = vsel %vm73, %v42, 0
    %v129 = vsel %vm73, %v43, 0
    %v132 = vsel %vm73, %v44, 0
    %134 = vmatprep.subr.mxu0 0.0
    %v135 = vand.u32 %v132, 4294901760
    %136 = vmatpush1.xpose.msra.mxu0 %v135
    %137 = vmatprep.subr.mxu0 0.0
    %v138 = vand.u32 %v129, 4294901760
    %139 = vmatpush1.xpose.msra.mxu0 %v138
    %140 = vmatprep.subr.mxu0 0.0
    %v141 = vand.u32 %v126, 4294901760
    %142 = vmatpush1.xpose.msra.mxu0 %v141
    %143 = vmatprep.subr.mxu0 0.0
    %v144 = vand.u32 %v123, 4294901760
    %145 = vmatpush1.xpose.msra.mxu0 %v144
    %146 = vmatprep.subr.mxu0 0.0
    %v147 = vand.u32 %v120, 4294901760
    %148 = vmatpush1.xpose.msra.mxu0 %v147
    %149 = vmatprep.subr.mxu0 0.0
    %v150 = vand.u32 %v117, 4294901760
    %151 = vmatpush1.xpose.msra.mxu0 %v150
    %152 = vmatprep.subr.mxu0 0.0
    %v153 = vand.u32 %v114, 4294901760
    %154 = vmatpush1.xpose.msra.mxu0 %v153
    %155 = vmatprep.subr.mxu0 0.0
    %v156 = vand.u32 %v111, 4294901760
    %157 = vmatpush1.xpose.msra.mxu0 %v156
    %158 = vmatprep.subr.mxu0 0.0
    %v159 = vand.u32 %v108, 4294901760
    %160 = vmatpush1.xpose.msra.mxu0 %v159
    %161 = vmatprep.subr.mxu0 0.0
    %v162 = vand.u32 %v105, 4294901760
    %163 = vmatpush1.xpose.msra.mxu0 %v162
    %164 = vmatprep.subr.mxu0 0.0
    %v165 = vand.u32 %v102, 4294901760
    %166 = vmatpush1.xpose.msra.mxu0 %v165
    %167 = vmatprep.subr.mxu0 0.0
    %v168 = vand.u32 %v99, 4294901760
    %169 = vmatpush1.xpose.msra.mxu0 %v168
    %170 = vmatprep.subr.mxu0 0.0
    %v171 = vand.u32 %v96, 4294901760
    %172 = vmatpush1.xpose.msra.mxu0 %v171
    %173 = vmatprep.subr.mxu0 0.0
    %v174 = vand.u32 %v93, 4294901760
    %175 = vmatpush1.xpose.msra.mxu0 %v174
    %176 = vmatprep.subr.mxu0 0.0
    %v177 = vand.u32 %v90, 4294901760
    %178 = vmatpush1.xpose.msra.mxu0 %v177
    %179 = vmatprep.subr.mxu0 0.0
    %v180 = vand.u32 %v87, 4294901760
    %181 = vmatpush1.xpose.msra.mxu0 %v180
    %182 = vmatprep.subr.mxu0 0.0
    %183 = vmatpush2.xpose.msra.mxu0 0.0
    %184 = vmatprep.subr.mxu0 0.0
    %185 = vmatpush2.xpose.msra.mxu0 0.0
    %186 = vmatprep.subr.mxu0 0.0
    %187 = vmatpush2.xpose.msra.mxu0 0.0
    %188 = vmatprep.subr.mxu0 0.0
    %189 = vmatpush2.xpose.msra.mxu0 0.0
    %190 = vmatprep.subr.mxu0 0.0
    %191 = vmatpush2.xpose.msra.mxu0 0.0
    %192 = vmatprep.subr.mxu0 0.0
    %193 = vmatpush2.xpose.msra.mxu0 0.0
    %194 = vmatprep.subr.mxu0 0.0
    %195 = vmatpush2.xpose.msra.mxu0 0.0
    %196 = vmatprep.subr.mxu0 0.0
    %197 = vmatpush2.xpose.msra.mxu0 0.0
    %198 = vmatprep.subr.mxu0 0.0
    %199 = vmatpush2.xpose.msra.mxu0 0.0
    %200 = vmatprep.subr.mxu0 0.0
    %201 = vmatpush2.xpose.msra.mxu0 0.0
    %202 = vmatprep.subr.mxu0 0.0
    %203 = vmatpush2.xpose.msra.mxu0 0.0
    %204 = vmatprep.subr.mxu0 0.0
    %205 = vmatpush2.xpose.msra.mxu0 0.0
    %206 = vmatprep.subr.mxu0 0.0
    %207 = vmatpush2.xpose.msra.mxu0 0.0
    %208 = vmatprep.subr.mxu0 0.0
    %209 = vmatpush2.xpose.msra.mxu0 0.0
    %210 = vmatprep.subr.mxu0 0.0
    %211 = vmatpush2.xpose.msra.mxu0 0.0
    %212 = vmatprep.subr.mxu0 0.0
    %213 = vmatpush2.xpose.msra.mxu0 0.0
    %214 = vmatprep.mubr.f32.mxu0 0.0
    %v215 = vand.u32 %v75, 4294901760
    %v216 = vsub.f32 %v75, %v215
    %v217 = vand.u32 %v216, 4294901760
    %v218 = vsub.f32 %v216, %v217
    %v219 = vand.u32 %v218, 4294901760
    %220 = vmatmul.mubr.f32.gmra.mxu0 %v219
    %v221 = vpop.f32.mrf.mxu0
    %v222 = vadd.f32 %v56, %v221
    %v223 = vpop.f32.mrf.mxu0
    %224 = vmatprep.mubr.f32.mxu0 0.0
    %v225 = vand.u32 %v78, 4294901760
    %v226 = vsub.f32 %v78, %v225
    %v227 = vand.u32 %v226, 4294901760
    %v228 = vsub.f32 %v226, %v227
    %v229 = vand.u32 %v228, 4294901760
    %230 = vmatmul.mubr.f32.gmra.mxu0 %v229
    %v231 = vpop.f32.mrf.mxu0
    %v232 = vadd.f32 %v61, %v231
    %v233 = vpop.f32.mrf.mxu0
    %234 = vmatprep.mubr.f32.mxu0 0.0
    %v235 = vand.u32 %v81, 4294901760
    %v236 = vsub.f32 %v81, %v235
    %v237 = vand.u32 %v236, 4294901760
    %v238 = vsub.f32 %v236, %v237
    %v239 = vand.u32 %v238, 4294901760
    %240 = vmatmul.mubr.f32.gmra.mxu0 %v239
    %v241 = vpop.f32.mrf.mxu0
    %v242 = vadd.f32 %v66, %v241
    %v243 = vpop.f32.mrf.mxu0
    %244 = vmatprep.mubr.f32.mxu0 0.0
    %v245 = vand.u32 %v84, 4294901760
    %v246 = vsub.f32 %v84, %v245
    %v247 = vand.u32 %v246, 4294901760
    %v248 = vsub.f32 %v246, %v247
    %v249 = vand.u32 %v248, 4294901760
    %250 = vmatmul.mubr.f32.gmra.mxu0 %v249
    %v251 = vpop.f32.mrf.mxu0
    %v252 = vadd.f32 %v71, %v251
    %v253 = vpop.f32.mrf.mxu0
    %254 = vdwg.mxu0
    %255 = vmatprep.subr.mxu0 0.0
    %v256 = vand.u32 %v132, 4294901760
    %v257 = vsub.f32 %v132, %v256
    %v258 = vand.u32 %v257, 4294901760
    %v259 = vsub.f32 %v257, %v258
    %v260 = vand.u32 %v259, 4294901760
    %261 = vmatpush1.xpose.msra.mxu0 %v260
    %262 = vmatprep.subr.mxu0 0.0
    %v263 = vand.u32 %v129, 4294901760
    %v264 = vsub.f32 %v129, %v263
    %v265 = vand.u32 %v264, 4294901760
    %v266 = vsub.f32 %v264, %v265
    %v267 = vand.u32 %v266, 4294901760
    %268 = vmatpush1.xpose.msra.mxu0 %v267
    %269 = vmatprep.subr.mxu0 0.0
    %v270 = vand.u32 %v126, 4294901760
    %v271 = vsub.f32 %v126, %v270
    %v272 = vand.u32 %v271, 4294901760
    %v273 = vsub.f32 %v271, %v272
    %v274 = vand.u32 %v273, 4294901760
    %275 = vmatpush1.xpose.msra.mxu0 %v274
    %276 = vmatprep.subr.mxu0 0.0
    %v277 = vand.u32 %v123, 4294901760
    %v278 = vsub.f32 %v123, %v277
    %v279 = vand.u32 %v278, 4294901760
    %v280 = vsub.f32 %v278, %v279
    %v281 = vand.u32 %v280, 4294901760
    %282 = vmatpush1.xpose.msra.mxu0 %v281
    %283 = vmatprep.subr.mxu0 0.0
    %v284 = vand.u32 %v120, 4294901760
    %v285 = vsub.f32 %v120, %v284
    %v286 = vand.u32 %v285, 4294901760
    %v287 = vsub.f32 %v285, %v286
    %v288 = vand.u32 %v287, 4294901760
    %289 = vmatpush1.xpose.msra.mxu0 %v288
    %290 = vmatprep.subr.mxu0 0.0
    %v291 = vand.u32 %v117, 4294901760
    %v292 = vsub.f32 %v117, %v291
    %v293 = vand.u32 %v292, 4294901760
    %v294 = vsub.f32 %v292, %v293
    %v295 = vand.u32 %v294, 4294901760
    %296 = vmatpush1.xpose.msra.mxu0 %v295
    %297 = vmatprep.subr.mxu0 0.0
    %v298 = vand.u32 %v114, 4294901760
    %v299 = vsub.f32 %v114, %v298
    %v300 = vand.u32 %v299, 4294901760
    %v301 = vsub.f32 %v299, %v300
    %v302 = vand.u32 %v301, 4294901760
    %303 = vmatpush1.xpose.msra.mxu0 %v302
    %304 = vmatprep.subr.mxu0 0.0
    %v305 = vand.u32 %v111, 4294901760
    %v306 = vsub.f32 %v111, %v305
    %v307 = vand.u32 %v306, 4294901760
    %v308 = vsub.f32 %v306, %v307
    %v309 = vand.u32 %v308, 4294901760
    %310 = vmatpush1.xpose.msra.mxu0 %v309
    %311 = vmatprep.subr.mxu0 0.0
    %v312 = vand.u32 %v108, 4294901760
    %v313 = vsub.f32 %v108, %v312
    %v314 = vand.u32 %v313, 4294901760
    %v315 = vsub.f32 %v313, %v314
    %v316 = vand.u32 %v315, 4294901760
    %317 = vmatpush1.xpose.msra.mxu0 %v316
    %318 = vmatprep.subr.mxu0 0.0
    %v319 = vand.u32 %v105, 4294901760
    %v320 = vsub.f32 %v105, %v319
    %v321 = vand.u32 %v320, 4294901760
    %v322 = vsub.f32 %v320, %v321
    %v323 = vand.u32 %v322, 4294901760
    %324 = vmatpush1.xpose.msra.mxu0 %v323
    %325 = vmatprep.subr.mxu0 0.0
    %v326 = vand.u32 %v102, 4294901760
    %v327 = vsub.f32 %v102, %v326
    %v328 = vand.u32 %v327, 4294901760
    %v329 = vsub.f32 %v327, %v328
    %v330 = vand.u32 %v329, 4294901760
    %331 = vmatpush1.xpose.msra.mxu0 %v330
    %332 = vmatprep.subr.mxu0 0.0
    %v333 = vand.u32 %v99, 4294901760
    %v334 = vsub.f32 %v99, %v333
    %v335 = vand.u32 %v334, 4294901760
    %v336 = vsub.f32 %v334, %v335
    %v337 = vand.u32 %v336, 4294901760
    %338 = vmatpush1.xpose.msra.mxu0 %v337
    %339 = vmatprep.subr.mxu0 0.0
    %v340 = vand.u32 %v96, 4294901760
    %v341 = vsub.f32 %v96, %v340
    %v342 = vand.u32 %v341, 4294901760
    %v343 = vsub.f32 %v341, %v342
    %v344 = vand.u32 %v343, 4294901760
    %345 = vmatpush1.xpose.msra.mxu0 %v344
    %346 = vmatprep.subr.mxu0 0.0
    %v347 = vand.u32 %v93, 4294901760
    %v348 = vsub.f32 %v93, %v347
    %v349 = vand.u32 %v348, 4294901760
    %v350 = vsub.f32 %v348, %v349
    %v351 = vand.u32 %v350, 4294901760
    %352 = vmatpush1.xpose.msra.mxu0 %v351
    %353 = vmatprep.subr.mxu0 0.0
    %v354 = vand.u32 %v90, 4294901760
    %v355 = vsub.f32 %v90, %v354
    %v356 = vand.u32 %v355, 4294901760
    %v357 = vsub.f32 %v355, %v356
    %v358 = vand.u32 %v357, 4294901760
    %359 = vmatpush1.xpose.msra.mxu0 %v358
    %360 = vmatprep.subr.mxu0 0.0
    %v361 = vand.u32 %v87, 4294901760
    %v362 = vsub.f32 %v87, %v361
    %v363 = vand.u32 %v362, 4294901760
    %v364 = vsub.f32 %v362, %v363
    %v365 = vand.u32 %v364, 4294901760
    %366 = vmatpush1.xpose.msra.mxu0 %v365
    %367 = vmatprep.subr.mxu0 0.0
    %368 = vmatpush2.xpose.msra.mxu0 0.0
    %369 = vmatprep.subr.mxu0 0.0
    %370 = vmatpush2.xpose.msra.mxu0 0.0
    %371 = vmatprep.subr.mxu0 0.0
    %372 = vmatpush2.xpose.msra.mxu0 0.0
    %373 = vmatprep.subr.mxu0 0.0
    %374 = vmatpush2.xpose.msra.mxu0 0.0
    %375 = vmatprep.subr.mxu0 0.0
    %376 = vmatpush2.xpose.msra.mxu0 0.0
    %377 = vmatprep.subr.mxu0 0.0
    %378 = vmatpush2.xpose.msra.mxu0 0.0
    %379 = vmatprep.subr.mxu0 0.0
    %380 = vmatpush2.xpose.msra.mxu0 0.0
    %381 = vmatprep.subr.mxu0 0.0
    %382 = vmatpush2.xpose.msra.mxu0 0.0
    %383 = vmatprep.subr.mxu0 0.0
    %384 = vmatpush2.xpose.msra.mxu0 0.0
    %385 = vmatprep.subr.mxu0 0.0
    %386 = vmatpush2.xpose.msra.mxu0 0.0
    %387 = vmatprep.subr.mxu0 0.0
    %388 = vmatpush2.xpose.msra.mxu0 0.0
    %389 = vmatprep.subr.mxu0 0.0
    %390 = vmatpush2.xpose.msra.mxu0 0.0
    %391 = vmatprep.subr.mxu0 0.0
    %392 = vmatpush2.xpose.msra.mxu0 0.0
    %393 = vmatprep.subr.mxu0 0.0
    %394 = vmatpush2.xpose.msra.mxu0 0.0
    %395 = vmatprep.subr.mxu0 0.0
    %396 = vmatpush2.xpose.msra.mxu0 0.0
    %397 = vmatprep.subr.mxu0 0.0
    %398 = vmatpush2.xpose.msra.mxu0 0.0
    %399 = vmatprep.mubr.f32.mxu0 0.0
    %v400 = vand.u32 %v75, 4294901760
    %401 = vmatmul.mubr.f32.gmra.mxu0 %v400
    %v402 = vpop.f32.mrf.mxu0
    %v403 = vadd.f32 %v222, %v402
    %v404 = vpop.f32.mrf.mxu0
    %405 = vmatprep.mubr.f32.mxu0 0.0
    %v406 = vand.u32 %v78, 4294901760
    %407 = vmatmul.mubr.f32.gmra.mxu0 %v406
    %v408 = vpop.f32.mrf.mxu0
    %v409 = vadd.f32 %v232, %v408
    %v410 = vpop.f32.mrf.mxu0
    %411 = vmatprep.mubr.f32.mxu0 0.0
    %v412 = vand.u32 %v81, 4294901760
    %413 = vmatmul.mubr.f32.gmra.mxu0 %v412
    %v414 = vpop.f32.mrf.mxu0
    %v415 = vadd.f32 %v242, %v414
    %v416 = vpop.f32.mrf.mxu0
    %417 = vmatprep.mubr.f32.mxu0 0.0
    %v418 = vand.u32 %v84, 4294901760
    %419 = vmatmul.mubr.f32.gmra.mxu0 %v418
    %v420 = vpop.f32.mrf.mxu0
    %v421 = vadd.f32 %v252, %v420
    %v422 = vpop.f32.mrf.mxu0
    %423 = vdwg.mxu0
    %424 = vmatprep.subr.mxu0 0.0
    %v425 = vand.u32 %v132, 4294901760
    %v426 = vsub.f32 %v132, %v425
    %427 = vmatpush1.xpose.msra.mxu0 %v426
    %428 = vmatprep.subr.mxu0 0.0
    %v429 = vand.u32 %v129, 4294901760
    %v430 = vsub.f32 %v129, %v429
    %431 = vmatpush1.xpose.msra.mxu0 %v430
    %432 = vmatprep.subr.mxu0 0.0
    %v433 = vand.u32 %v126, 4294901760
    %v434 = vsub.f32 %v126, %v433
    %435 = vmatpush1.xpose.msra.mxu0 %v434
    %436 = vmatprep.subr.mxu0 0.0
    %v437 = vand.u32 %v123, 4294901760
    %v438 = vsub.f32 %v123, %v437
    %439 = vmatpush1.xpose.msra.mxu0 %v438
    %440 = vmatprep.subr.mxu0 0.0
    %v441 = vand.u32 %v120, 4294901760
    %v442 = vsub.f32 %v120, %v441
    %443 = vmatpush1.xpose.msra.mxu0 %v442
    %444 = vmatprep.subr.mxu0 0.0
    %v445 = vand.u32 %v117, 4294901760
    %v446 = vsub.f32 %v117, %v445
    %447 = vmatpush1.xpose.msra.mxu0 %v446
    %448 = vmatprep.subr.mxu0 0.0
    %v449 = vand.u32 %v114, 4294901760
    %v450 = vsub.f32 %v114, %v449
    %451 = vmatpush1.xpose.msra.mxu0 %v450
    %452 = vmatprep.subr.mxu0 0.0
    %v453 = vand.u32 %v111, 4294901760
    %v454 = vsub.f32 %v111, %v453
    %455 = vmatpush1.xpose.msra.mxu0 %v454
    %456 = vmatprep.subr.mxu0 0.0
    %v457 = vand.u32 %v108, 4294901760
    %v458 = vsub.f32 %v108, %v457
    %459 = vmatpush1.xpose.msra.mxu0 %v458
    %460 = vmatprep.subr.mxu0 0.0
    %v461 = vand.u32 %v105, 4294901760
    %v462 = vsub.f32 %v105, %v461
    %463 = vmatpush1.xpose.msra.mxu0 %v462
    %464 = vmatprep.subr.mxu0 0.0
    %v465 = vand.u32 %v102, 4294901760
    %v466 = vsub.f32 %v102, %v465
    %467 = vmatpush1.xpose.msra.mxu0 %v466
    %468 = vmatprep.subr.mxu0 0.0
    %v469 = vand.u32 %v99, 4294901760
    %v470 = vsub.f32 %v99, %v469
    %471 = vmatpush1.xpose.msra.mxu0 %v470
    %472 = vmatprep.subr.mxu0 0.0
    %v473 = vand.u32 %v96, 4294901760
    %v474 = vsub.f32 %v96, %v473
    %475 = vmatpush1.xpose.msra.mxu0 %v474
    %476 = vmatprep.subr.mxu0 0.0
    %v477 = vand.u32 %v93, 4294901760
    %v478 = vsub.f32 %v93, %v477
    %479 = vmatpush1.xpose.msra.mxu0 %v478
    %480 = vmatprep.subr.mxu0 0.0
    %v481 = vand.u32 %v90, 4294901760
    %v482 = vsub.f32 %v90, %v481
    %483 = vmatpush1.xpose.msra.mxu0 %v482
    %484 = vmatprep.subr.mxu0 0.0
    %v485 = vand.u32 %v87, 4294901760
    %v486 = vsub.f32 %v87, %v485
    %487 = vmatpush1.xpose.msra.mxu0 %v486
    %488 = vmatprep.subr.mxu0 0.0
    %489 = vmatpush2.xpose.msra.mxu0 0.0
    %490 = vmatprep.subr.mxu0 0.0
    %491 = vmatpush2.xpose.msra.mxu0 0.0
    %492 = vmatprep.subr.mxu0 0.0
    %493 = vmatpush2.xpose.msra.mxu0 0.0
    %494 = vmatprep.subr.mxu0 0.0
    %495 = vmatpush2.xpose.msra.mxu0 0.0
    %496 = vmatprep.subr.mxu0 0.0
    %497 = vmatpush2.xpose.msra.mxu0 0.0
    %498 = vmatprep.subr.mxu0 0.0
    %499 = vmatpush2.xpose.msra.mxu0 0.0
    %500 = vmatprep.subr.mxu0 0.0
    %501 = vmatpush2.xpose.msra.mxu0 0.0
    %502 = vmatprep.subr.mxu0 0.0
    %503 = vmatpush2.xpose.msra.mxu0 0.0
    %504 = vmatprep.subr.mxu0 0.0
    %505 = vmatpush2.xpose.msra.mxu0 0.0
    %506 = vmatprep.subr.mxu0 0.0
    %507 = vmatpush2.xpose.msra.mxu0 0.0
    %508 = vmatprep.subr.mxu0 0.0
    %509 = vmatpush2.xpose.msra.mxu0 0.0
    %510 = vmatprep.subr.mxu0 0.0
    %511 = vmatpush2.xpose.msra.mxu0 0.0
    %512 = vmatprep.subr.mxu0 0.0
    %513 = vmatpush2.xpose.msra.mxu0 0.0
    %514 = vmatprep.subr.mxu0 0.0
    %515 = vmatpush2.xpose.msra.mxu0 0.0
    %516 = vmatprep.subr.mxu0 0.0
    %517 = vmatpush2.xpose.msra.mxu0 0.0
    %518 = vmatprep.subr.mxu0 0.0
    %519 = vmatpush2.xpose.msra.mxu0 0.0
    %520 = vmatprep.mubr.f32.mxu0 0.0
    %v521 = vand.u32 %v75, 4294901760
    %v522 = vsub.f32 %v75, %v521
    %523 = vmatmul.mubr.f32.gmra.mxu0 %v522
    %v524 = vpop.f32.mrf.mxu0
    %v525 = vadd.f32 %v403, %v524
    %v526 = vpop.f32.mrf.mxu0
    %527 = vmatprep.mubr.f32.mxu0 0.0
    %v528 = vand.u32 %v78, 4294901760
    %v529 = vsub.f32 %v78, %v528
    %530 = vmatmul.mubr.f32.gmra.mxu0 %v529
    %v531 = vpop.f32.mrf.mxu0
    %v532 = vadd.f32 %v409, %v531
    %v533 = vpop.f32.mrf.mxu0
    %534 = vmatprep.mubr.f32.mxu0 0.0
    %v535 = vand.u32 %v81, 4294901760
    %v536 = vsub.f32 %v81, %v535
    %537 = vmatmul.mubr.f32.gmra.mxu0 %v536
    %v538 = vpop.f32.mrf.mxu0
    %v539 = vadd.f32 %v415, %v538
    %v540 = vpop.f32.mrf.mxu0
    %541 = vmatprep.mubr.f32.mxu0 0.0
    %v542 = vand.u32 %v84, 4294901760
    %v543 = vsub.f32 %v84, %v542
    %544 = vmatmul.mubr.f32.gmra.mxu0 %v543
    %v545 = vpop.f32.mrf.mxu0
    %v546 = vadd.f32 %v421, %v545
    %v547 = vpop.f32.mrf.mxu0
    %548 = vdwg.mxu0
    %549 = vmatprep.subr.mxu0 0.0
    %v550 = vand.u32 %v132, 4294901760
    %551 = vmatpush1.xpose.msra.mxu0 %v550
    %552 = vmatprep.subr.mxu0 0.0
    %v553 = vand.u32 %v129, 4294901760
    %554 = vmatpush1.xpose.msra.mxu0 %v553
    %555 = vmatprep.subr.mxu0 0.0
    %v556 = vand.u32 %v126, 4294901760
    %557 = vmatpush1.xpose.msra.mxu0 %v556
    %558 = vmatprep.subr.mxu0 0.0
    %v559 = vand.u32 %v123, 4294901760
    %560 = vmatpush1.xpose.msra.mxu0 %v559
    %561 = vmatprep.subr.mxu0 0.0
    %v562 = vand.u32 %v120, 4294901760
    %563 = vmatpush1.xpose.msra.mxu0 %v562
    %564 = vmatprep.subr.mxu0 0.0
    %v565 = vand.u32 %v117, 4294901760
    %566 = vmatpush1.xpose.msra.mxu0 %v565
    %567 = vmatprep.subr.mxu0 0.0
    %v568 = vand.u32 %v114, 4294901760
    %569 = vmatpush1.xpose.msra.mxu0 %v568
    %570 = vmatprep.subr.mxu0 0.0
    %v571 = vand.u32 %v111, 4294901760
    %572 = vmatpush1.xpose.msra.mxu0 %v571
    %573 = vmatprep.subr.mxu0 0.0
    %v574 = vand.u32 %v108, 4294901760
    %575 = vmatpush1.xpose.msra.mxu0 %v574
    %576 = vmatprep.subr.mxu0 0.0
    %v577 = vand.u32 %v105, 4294901760
    %578 = vmatpush1.xpose.msra.mxu0 %v577
    %579 = vmatprep.subr.mxu0 0.0
    %v580 = vand.u32 %v102, 4294901760
    %581 = vmatpush1.xpose.msra.mxu0 %v580
    %582 = vmatprep.subr.mxu0 0.0
    %v583 = vand.u32 %v99, 4294901760
    %584 = vmatpush1.xpose.msra.mxu0 %v583
    %585 = vmatprep.subr.mxu0 0.0
    %v586 = vand.u32 %v96, 4294901760
    %587 = vmatpush1.xpose.msra.mxu0 %v586
    %588 = vmatprep.subr.mxu0 0.0
    %v589 = vand.u32 %v93, 4294901760
    %590 = vmatpush1.xpose.msra.mxu0 %v589
    %591 = vmatprep.subr.mxu0 0.0
    %v592 = vand.u32 %v90, 4294901760
    %593 = vmatpush1.xpose.msra.mxu0 %v592
    %594 = vmatprep.subr.mxu0 0.0
    %v595 = vand.u32 %v87, 4294901760
    %596 = vmatpush1.xpose.msra.mxu0 %v595
    %597 = vmatprep.subr.mxu0 0.0
    %598 = vmatpush2.xpose.msra.mxu0 0.0
    %599 = vmatprep.subr.mxu0 0.0
    %600 = vmatpush2.xpose.msra.mxu0 0.0
    %601 = vmatprep.subr.mxu0 0.0
    %602 = vmatpush2.xpose.msra.mxu0 0.0
    %603 = vmatprep.subr.mxu0 0.0
    %604 = vmatpush2.xpose.msra.mxu0 0.0
    %605 = vmatprep.subr.mxu0 0.0
    %606 = vmatpush2.xpose.msra.mxu0 0.0
    %607 = vmatprep.subr.mxu0 0.0
    %608 = vmatpush2.xpose.msra.mxu0 0.0
    %609 = vmatprep.subr.mxu0 0.0
    %610 = vmatpush2.xpose.msra.mxu0 0.0
    %611 = vmatprep.subr.mxu0 0.0
    %612 = vmatpush2.xpose.msra.mxu0 0.0
    %613 = vmatprep.subr.mxu0 0.0
    %614 = vmatpush2.xpose.msra.mxu0 0.0
    %615 = vmatprep.subr.mxu0 0.0
    %616 = vmatpush2.xpose.msra.mxu0 0.0
    %617 = vmatprep.subr.mxu0 0.0
    %618 = vmatpush2.xpose.msra.mxu0 0.0
    %619 = vmatprep.subr.mxu0 0.0
    %620 = vmatpush2.xpose.msra.mxu0 0.0
    %621 = vmatprep.subr.mxu0 0.0
    %622 = vmatpush2.xpose.msra.mxu0 0.0
    %623 = vmatprep.subr.mxu0 0.0
    %624 = vmatpush2.xpose.msra.mxu0 0.0
    %625 = vmatprep.subr.mxu0 0.0
    %626 = vmatpush2.xpose.msra.mxu0 0.0
    %627 = vmatprep.subr.mxu0 0.0
    %628 = vmatpush2.xpose.msra.mxu0 0.0
    %629 = vmatprep.mubr.f32.mxu0 0.0
    %v630 = vand.u32 %v75, 4294901760
    %v631 = vsub.f32 %v75, %v630
    %v632 = vand.u32 %v631, 4294901760
    %633 = vmatmul.mubr.f32.gmra.mxu0 %v632
    %v634 = vpop.f32.mrf.mxu0
    %v635 = vadd.f32 %v525, %v634
    %v636 = vpop.f32.mrf.mxu0
    %637 = vmatprep.mubr.f32.mxu0 0.0
    %v638 = vand.u32 %v78, 4294901760
    %v639 = vsub.f32 %v78, %v638
    %v640 = vand.u32 %v639, 4294901760
    %641 = vmatmul.mubr.f32.gmra.mxu0 %v640
    %v642 = vpop.f32.mrf.mxu0
    %v643 = vadd.f32 %v532, %v642
    %v644 = vpop.f32.mrf.mxu0
    %645 = vmatprep.mubr.f32.mxu0 0.0
    %v646 = vand.u32 %v81, 4294901760
    %v647 = vsub.f32 %v81, %v646
    %v648 = vand.u32 %v647, 4294901760
    %649 = vmatmul.mubr.f32.gmra.mxu0 %v648
    %v650 = vpop.f32.mrf.mxu0
    %v651 = vadd.f32 %v539, %v650
    %v652 = vpop.f32.mrf.mxu0
    %653 = vmatprep.mubr.f32.mxu0 0.0
    %v654 = vand.u32 %v84, 4294901760
    %v655 = vsub.f32 %v84, %v654
    %v656 = vand.u32 %v655, 4294901760
    %657 = vmatmul.mubr.f32.gmra.mxu0 %v656
    %v658 = vpop.f32.mrf.mxu0
    %v659 = vadd.f32 %v546, %v658
    %v660 = vpop.f32.mrf.mxu0
    %661 = vdwg.mxu0
    %662 = vmatprep.subr.mxu0 0.0
    %v663 = vand.u32 %v132, 4294901760
    %v664 = vsub.f32 %v132, %v663
    %v665 = vand.u32 %v664, 4294901760
    %666 = vmatpush1.xpose.msra.mxu0 %v665
    %667 = vmatprep.subr.mxu0 0.0
    %v668 = vand.u32 %v129, 4294901760
    %v669 = vsub.f32 %v129, %v668
    %v670 = vand.u32 %v669, 4294901760
    %671 = vmatpush1.xpose.msra.mxu0 %v670
    %672 = vmatprep.subr.mxu0 0.0
    %v673 = vand.u32 %v126, 4294901760
    %v674 = vsub.f32 %v126, %v673
    %v675 = vand.u32 %v674, 4294901760
    %676 = vmatpush1.xpose.msra.mxu0 %v675
    %677 = vmatprep.subr.mxu0 0.0
    %v678 = vand.u32 %v123, 4294901760
    %v679 = vsub.f32 %v123, %v678
    %v680 = vand.u32 %v679, 4294901760
    %681 = vmatpush1.xpose.msra.mxu0 %v680
    %682 = vmatprep.subr.mxu0 0.0
    %v683 = vand.u32 %v120, 4294901760
    %v684 = vsub.f32 %v120, %v683
    %v685 = vand.u32 %v684, 4294901760
    %686 = vmatpush1.xpose.msra.mxu0 %v685
    %687 = vmatprep.subr.mxu0 0.0
    %v688 = vand.u32 %v117, 4294901760
    %v689 = vsub.f32 %v117, %v688
    %v690 = vand.u32 %v689, 4294901760
    %691 = vmatpush1.xpose.msra.mxu0 %v690
    %692 = vmatprep.subr.mxu0 0.0
    %v693 = vand.u32 %v114, 4294901760
    %v694 = vsub.f32 %v114, %v693
    %v695 = vand.u32 %v694, 4294901760
    %696 = vmatpush1.xpose.msra.mxu0 %v695
    %697 = vmatprep.subr.mxu0 0.0
    %v698 = vand.u32 %v111, 4294901760
    %v699 = vsub.f32 %v111, %v698
    %v700 = vand.u32 %v699, 4294901760
    %701 = vmatpush1.xpose.msra.mxu0 %v700
    %702 = vmatprep.subr.mxu0 0.0
    %v703 = vand.u32 %v108, 4294901760
    %v704 = vsub.f32 %v108, %v703
    %v705 = vand.u32 %v704, 4294901760
    %706 = vmatpush1.xpose.msra.mxu0 %v705
    %707 = vmatprep.subr.mxu0 0.0
    %v708 = vand.u32 %v105, 4294901760
    %v709 = vsub.f32 %v105, %v708
    %v710 = vand.u32 %v709, 4294901760
    %711 = vmatpush1.xpose.msra.mxu0 %v710
    %712 = vmatprep.subr.mxu0 0.0
    %v713 = vand.u32 %v102, 4294901760
    %v714 = vsub.f32 %v102, %v713
    %v715 = vand.u32 %v714, 4294901760
    %716 = vmatpush1.xpose.msra.mxu0 %v715
    %717 = vmatprep.subr.mxu0 0.0
    %v718 = vand.u32 %v99, 4294901760
    %v719 = vsub.f32 %v99, %v718
    %v720 = vand.u32 %v719, 4294901760
    %721 = vmatpush1.xpose.msra.mxu0 %v720
    %722 = vmatprep.subr.mxu0 0.0
    %v723 = vand.u32 %v96, 4294901760
    %v724 = vsub.f32 %v96, %v723
    %v725 = vand.u32 %v724, 4294901760
    %726 = vmatpush1.xpose.msra.mxu0 %v725
    %727 = vmatprep.subr.mxu0 0.0
    %v728 = vand.u32 %v93, 4294901760
    %v729 = vsub.f32 %v93, %v728
    %v730 = vand.u32 %v729, 4294901760
    %731 = vmatpush1.xpose.msra.mxu0 %v730
    %732 = vmatprep.subr.mxu0 0.0
    %v733 = vand.u32 %v90, 4294901760
    %v734 = vsub.f32 %v90, %v733
    %v735 = vand.u32 %v734, 4294901760
    %736 = vmatpush1.xpose.msra.mxu0 %v735
    %737 = vmatprep.subr.mxu0 0.0
    %v738 = vand.u32 %v87, 4294901760
    %v739 = vsub.f32 %v87, %v738
    %v740 = vand.u32 %v739, 4294901760
    %741 = vmatpush1.xpose.msra.mxu0 %v740
    %742 = vmatprep.subr.mxu0 0.0
    %743 = vmatpush2.xpose.msra.mxu0 0.0
    %744 = vmatprep.subr.mxu0 0.0
    %745 = vmatpush2.xpose.msra.mxu0 0.0
    %746 = vmatprep.subr.mxu0 0.0
    %747 = vmatpush2.xpose.msra.mxu0 0.0
    %748 = vmatprep.subr.mxu0 0.0
    %749 = vmatpush2.xpose.msra.mxu0 0.0
    %750 = vmatprep.subr.mxu0 0.0
    %751 = vmatpush2.xpose.msra.mxu0 0.0
    %752 = vmatprep.subr.mxu0 0.0
    %753 = vmatpush2.xpose.msra.mxu0 0.0
    %754 = vmatprep.subr.mxu0 0.0
    %755 = vmatpush2.xpose.msra.mxu0 0.0
    %756 = vmatprep.subr.mxu0 0.0
    %757 = vmatpush2.xpose.msra.mxu0 0.0
    %758 = vmatprep.subr.mxu0 0.0
    %759 = vmatpush2.xpose.msra.mxu0 0.0
    %760 = vmatprep.subr.mxu0 0.0
    %761 = vmatpush2.xpose.msra.mxu0 0.0
    %762 = vmatprep.subr.mxu0 0.0
    %763 = vmatpush2.xpose.msra.mxu0 0.0
    %764 = vmatprep.subr.mxu0 0.0
    %765 = vmatpush2.xpose.msra.mxu0 0.0
    %766 = vmatprep.subr.mxu0 0.0
    %767 = vmatpush2.xpose.msra.mxu0 0.0
    %768 = vmatprep.subr.mxu0 0.0
    %769 = vmatpush2.xpose.msra.mxu0 0.0
    %770 = vmatprep.subr.mxu0 0.0
    %771 = vmatpush2.xpose.msra.mxu0 0.0
    %772 = vmatprep.subr.mxu0 0.0
    %773 = vmatpush2.xpose.msra.mxu0 0.0
    %774 = vmatprep.mubr.f32.mxu0 0.0
    %v775 = vand.u32 %v75, 4294901760
    %776 = vmatmul.mubr.f32.gmra.mxu0 %v775
    %v777 = vpop.f32.mrf.mxu0
    %v778 = vadd.f32 %v635, %v777
    %v779 = vpop.f32.mrf.mxu0
    %780 = vmatprep.mubr.f32.mxu0 0.0
    %v781 = vand.u32 %v78, 4294901760
    %782 = vmatmul.mubr.f32.gmra.mxu0 %v781
    %v783 = vpop.f32.mrf.mxu0
    %v784 = vadd.f32 %v643, %v783
    %v785 = vpop.f32.mrf.mxu0
    %786 = vmatprep.mubr.f32.mxu0 0.0
    %v787 = vand.u32 %v81, 4294901760
    %788 = vmatmul.mubr.f32.gmra.mxu0 %v787
    %v789 = vpop.f32.mrf.mxu0
    %v790 = vadd.f32 %v651, %v789
    %v791 = vpop.f32.mrf.mxu0
    %792 = vmatprep.mubr.f32.mxu0 0.0
    %v793 = vand.u32 %v84, 4294901760
    %794 = vmatmul.mubr.f32.gmra.mxu0 %v793
    %v795 = vpop.f32.mrf.mxu0
    %v796 = vadd.f32 %v659, %v795
    %v797 = vpop.f32.mrf.mxu0
    %798 = vdwg.mxu0
    %799 = vmatprep.subr.mxu0 0.0
    %v800 = vand.u32 %v132, 4294901760
    %801 = vmatpush1.xpose.msra.mxu0 %v800
    %802 = vmatprep.subr.mxu0 0.0
    %v803 = vand.u32 %v129, 4294901760
    %804 = vmatpush1.xpose.msra.mxu0 %v803
    %805 = vmatprep.subr.mxu0 0.0
    %v806 = vand.u32 %v126, 4294901760
    %807 = vmatpush1.xpose.msra.mxu0 %v806
    %808 = vmatprep.subr.mxu0 0.0
    %v809 = vand.u32 %v123, 4294901760
    %810 = vmatpush1.xpose.msra.mxu0 %v809
    %811 = vmatprep.subr.mxu0 0.0
    %v812 = vand.u32 %v120, 4294901760
    %813 = vmatpush1.xpose.msra.mxu0 %v812
    %814 = vmatprep.subr.mxu0 0.0
    %v815 = vand.u32 %v117, 4294901760
    %816 = vmatpush1.xpose.msra.mxu0 %v815
    %817 = vmatprep.subr.mxu0 0.0
    %v818 = vand.u32 %v114, 4294901760
    %819 = vmatpush1.xpose.msra.mxu0 %v818
    %820 = vmatprep.subr.mxu0 0.0
    %v821 = vand.u32 %v111, 4294901760
    %822 = vmatpush1.xpose.msra.mxu0 %v821
    %823 = vmatprep.subr.mxu0 0.0
    %v824 = vand.u32 %v108, 4294901760
    %825 = vmatpush1.xpose.msra.mxu0 %v824
    %826 = vmatprep.subr.mxu0 0.0
    %v827 = vand.u32 %v105, 4294901760
    %828 = vmatpush1.xpose.msra.mxu0 %v827
    %829 = vmatprep.subr.mxu0 0.0
    %v830 = vand.u32 %v102, 4294901760
    %831 = vmatpush1.xpose.msra.mxu0 %v830
    %832 = vmatprep.subr.mxu0 0.0
    %v833 = vand.u32 %v99, 4294901760
    %834 = vmatpush1.xpose.msra.mxu0 %v833
    %835 = vmatprep.subr.mxu0 0.0
    %v836 = vand.u32 %v96, 4294901760
    %837 = vmatpush1.xpose.msra.mxu0 %v836
    %838 = vmatprep.subr.mxu0 0.0
    %v839 = vand.u32 %v93, 4294901760
    %840 = vmatpush1.xpose.msra.mxu0 %v839
    %841 = vmatprep.subr.mxu0 0.0
    %v842 = vand.u32 %v90, 4294901760
    %843 = vmatpush1.xpose.msra.mxu0 %v842
    %844 = vmatprep.subr.mxu0 0.0
    %v845 = vand.u32 %v87, 4294901760
    %846 = vmatpush1.xpose.msra.mxu0 %v845
    %847 = vmatprep.subr.mxu0 0.0
    %848 = vmatpush2.xpose.msra.mxu0 0.0
    %849 = vmatprep.subr.mxu0 0.0
    %850 = vmatpush2.xpose.msra.mxu0 0.0
    %851 = vmatprep.subr.mxu0 0.0
    %852 = vmatpush2.xpose.msra.mxu0 0.0
    %853 = vmatprep.subr.mxu0 0.0
    %854 = vmatpush2.xpose.msra.mxu0 0.0
    %855 = vmatprep.subr.mxu0 0.0
    %856 = vmatpush2.xpose.msra.mxu0 0.0
    %857 = vmatprep.subr.mxu0 0.0
    %858 = vmatpush2.xpose.msra.mxu0 0.0
    %859 = vmatprep.subr.mxu0 0.0
    %860 = vmatpush2.xpose.msra.mxu0 0.0
    %861 = vmatprep.subr.mxu0 0.0
    %862 = vmatpush2.xpose.msra.mxu0 0.0
    %863 = vmatprep.subr.mxu0 0.0
    %864 = vmatpush2.xpose.msra.mxu0 0.0
    %865 = vmatprep.subr.mxu0 0.0
    %866 = vmatpush2.xpose.msra.mxu0 0.0
    %867 = vmatprep.subr.mxu0 0.0
    %868 = vmatpush2.xpose.msra.mxu0 0.0
    %869 = vmatprep.subr.mxu0 0.0
    %870 = vmatpush2.xpose.msra.mxu0 0.0
    %871 = vmatprep.subr.mxu0 0.0
    %872 = vmatpush2.xpose.msra.mxu0 0.0
    %873 = vmatprep.subr.mxu0 0.0
    %874 = vmatpush2.xpose.msra.mxu0 0.0
    %875 = vmatprep.subr.mxu0 0.0
    %876 = vmatpush2.xpose.msra.mxu0 0.0
    %877 = vmatprep.subr.mxu0 0.0
    %878 = vmatpush2.xpose.msra.mxu0 0.0
    %879 = vmatprep.mubr.f32.mxu0 0.0
    %v880 = vand.u32 %v75, 4294901760
    %881 = vmatmul.mubr.f32.gmra.mxu0 %v880
    %v882 = vpop.f32.mrf.mxu0
    %v883 = vadd.f32 %v778, %v882
    %v884 = vpop.f32.mrf.mxu0
    %885 = vmatprep.mubr.f32.mxu0 0.0
    %v886 = vand.u32 %v78, 4294901760
    %887 = vmatmul.mubr.f32.gmra.mxu0 %v886
    %v888 = vpop.f32.mrf.mxu0
    %v889 = vadd.f32 %v784, %v888
    %v890 = vpop.f32.mrf.mxu0
    %891 = vmatprep.mubr.f32.mxu0 0.0
    %v892 = vand.u32 %v81, 4294901760
    %893 = vmatmul.mubr.f32.gmra.mxu0 %v892
    %v894 = vpop.f32.mrf.mxu0
    %v895 = vadd.f32 %v790, %v894
    %v896 = vpop.f32.mrf.mxu0
    %897 = vmatprep.mubr.f32.mxu0 0.0
    %v898 = vand.u32 %v84, 4294901760
    %899 = vmatmul.mubr.f32.gmra.mxu0 %v898
    %v900 = vpop.f32.mrf.mxu0
    %v901 = vadd.f32 %v796, %v900
    %v902 = vpop.f32.mrf.mxu0
    %903 = vdwg.mxu0
    %v904 = vtanh.pop %v883
    %v905 = vtanh.pop %v889
    %v906 = vtanh.pop %v895
    %v907 = vtanh.pop %v901
    %v908 = vld [vmem:[%s3] sm:$0xff]
    %v909 = vld [vmem:[%s3 + $0x8] sm:$0xff]
    %v910 = vld [vmem:[%s3 + $0x10] sm:$0xff]
    %v911 = vld [vmem:[%s3 + $0x18] sm:$0xff]
    %v912 = vld [vmem:[%s4] sm:$0xff]
    %v913 = vld [vmem:[%s4 + $0x8] sm:$0xff]
    %v914 = vld [vmem:[%s4 + $0x10] sm:$0xff]
    %v915 = vld [vmem:[%s4 + $0x18] sm:$0xff]
    %917 = vset.pattern.permute.xlu0 0
    %918 = vperm.xlu0 %917, %v912
    %v919 = vpop.permute.xlu0 %918
    %922 = vset.pattern.permute.xlu0 0
    %923 = vperm.xlu0 %922, %v913
    %v924 = vpop.permute.xlu0 %923
    %927 = vset.pattern.permute.xlu0 0
    %928 = vperm.xlu0 %927, %v914
    %v929 = vpop.permute.xlu0 %928
    %932 = vset.pattern.permute.xlu0 0
    %933 = vperm.xlu0 %932, %v915
    %v934 = vpop.permute.xlu0 %933
    %vm936 = vcmask 261120
    %v938 = vsel %vm936, %v908, 0
    %v941 = vsel %vm936, %v909, 0
    %v944 = vsel %vm936, %v910, 0
    %v947 = vsel %vm936, %v911, 0
    %949 = vmatprep.subr.mxu0 0.0
    %950 = vmatpush1.msra.mxu0 0.0
    %951 = vmatprep.subr.mxu0 0.0
    %952 = vmatpush1.msra.mxu0 0.0
    %953 = vmatprep.subr.mxu0 0.0
    %954 = vmatpush1.msra.mxu0 0.0
    %955 = vmatprep.subr.mxu0 0.0
    %956 = vmatpush1.msra.mxu0 0.0
    %957 = vmatprep.subr.mxu0 0.0
    %958 = vmatpush1.msra.mxu0 0.0
    %959 = vmatprep.subr.mxu0 0.0
    %960 = vmatpush1.msra.mxu0 0.0
    %961 = vmatprep.subr.mxu0 0.0
    %962 = vmatpush1.msra.mxu0 0.0
    %963 = vmatprep.subr.mxu0 0.0
    %964 = vmatpush1.msra.mxu0 0.0
    %965 = vmatprep.subr.mxu0 0.0
    %966 = vmatpush1.msra.mxu0 0.0
    %967 = vmatprep.subr.mxu0 0.0
    %968 = vmatpush1.msra.mxu0 0.0
    %969 = vmatprep.subr.mxu0 0.0
    %970 = vmatpush1.msra.mxu0 0.0
    %971 = vmatprep.subr.mxu0 0.0
    %972 = vmatpush1.msra.mxu0 0.0
    %973 = vmatprep.subr.mxu0 0.0
    %v974 = vand.u32 %v907, 4294901760
    %975 = vmatpush1.msra.mxu0 %v974
    %976 = vmatprep.subr.mxu0 0.0
    %v977 = vand.u32 %v906, 4294901760
    %978 = vmatpush1.msra.mxu0 %v977
    %979 = vmatprep.subr.mxu0 0.0
    %v980 = vand.u32 %v905, 4294901760
    %981 = vmatpush1.msra.mxu0 %v980
    %982 = vmatprep.subr.mxu0 0.0
    %v983 = vand.u32 %v904, 4294901760
    %984 = vmatpush1.msra.mxu0 %v983
    %985 = vmatprep.subr.mxu0 0.0
    %986 = vmatpush2.msra.mxu0 0.0
    %987 = vmatprep.subr.mxu0 0.0
    %988 = vmatpush2.msra.mxu0 0.0
    %989 = vmatprep.subr.mxu0 0.0
    %990 = vmatpush2.msra.mxu0 0.0
    %991 = vmatprep.subr.mxu0 0.0
    %992 = vmatpush2.msra.mxu0 0.0
    %993 = vmatprep.subr.mxu0 0.0
    %994 = vmatpush2.msra.mxu0 0.0
    %995 = vmatprep.subr.mxu0 0.0
    %996 = vmatpush2.msra.mxu0 0.0
    %997 = vmatprep.subr.mxu0 0.0
    %998 = vmatpush2.msra.mxu0 0.0
    %999 = vmatprep.subr.mxu0 0.0
    %1000 = vmatpush2.msra.mxu0 0.0
    %1001 = vmatprep.subr.mxu0 0.0
    %1002 = vmatpush2.msra.mxu0 0.0
    %1003 = vmatprep.subr.mxu0 0.0
    %1004 = vmatpush2.msra.mxu0 0.0
    %1005 = vmatprep.subr.mxu0 0.0
    %1006 = vmatpush2.msra.mxu0 0.0
    %1007 = vmatprep.subr.mxu0 0.0
    %1008 = vmatpush2.msra.mxu0 0.0
    %1009 = vmatprep.subr.mxu0 0.0
    %1010 = vmatpush2.msra.mxu0 0.0
    %1011 = vmatprep.subr.mxu0 0.0
    %1012 = vmatpush2.msra.mxu0 0.0
    %1013 = vmatprep.subr.mxu0 0.0
    %1014 = vmatpush2.msra.mxu0 0.0
    %1015 = vmatprep.subr.mxu0 0.0
    %1016 = vmatpush2.msra.mxu0 0.0
    %1017 = vmatprep.mubr.f32.mxu0 0.0
    %v1018 = vand.u32 %v938, 4294901760
    %v1019 = vsub.f32 %v938, %v1018
    %v1020 = vand.u32 %v1019, 4294901760
    %v1021 = vsub.f32 %v1019, %v1020
    %v1022 = vand.u32 %v1021, 4294901760
    %1023 = vmatmul.mubr.f32.gmra.mxu0 %v1022
    %v1024 = vpop.f32.mrf.mxu0
    %v1025 = vadd.f32 %v919, %v1024
    %v1026 = vpop.f32.mrf.mxu0
    %1027 = vmatprep.mubr.f32.mxu0 0.0
    %v1028 = vand.u32 %v941, 4294901760
    %v1029 = vsub.f32 %v941, %v1028
    %v1030 = vand.u32 %v1029, 4294901760
    %v1031 = vsub.f32 %v1029, %v1030
    %v1032 = vand.u32 %v1031, 4294901760
    %1033 = vmatmul.mubr.f32.gmra.mxu0 %v1032
    %v1034 = vpop.f32.mrf.mxu0
    %v1035 = vadd.f32 %v924, %v1034
    %v1036 = vpop.f32.mrf.mxu0
    %1037 = vmatprep.mubr.f32.mxu0 0.0
    %v1038 = vand.u32 %v944, 4294901760
    %v1039 = vsub.f32 %v944, %v1038
    %v1040 = vand.u32 %v1039, 4294901760
    %v1041 = vsub.f32 %v1039, %v1040
    %v1042 = vand.u32 %v1041, 4294901760
    %1043 = vmatmul.mubr.f32.gmra.mxu0 %v1042
    %v1044 = vpop.f32.mrf.mxu0
    %v1045 = vadd.f32 %v929, %v1044
    %v1046 = vpop.f32.mrf.mxu0
    %1047 = vmatprep.mubr.f32.mxu0 0.0
    %v1048 = vand.u32 %v947, 4294901760
    %v1049 = vsub.f32 %v947, %v1048
    %v1050 = vand.u32 %v1049, 4294901760
    %v1051 = vsub.f32 %v1049, %v1050
    %v1052 = vand.u32 %v1051, 4294901760
    %1053 = vmatmul.mubr.f32.gmra.mxu0 %v1052
    %v1054 = vpop.f32.mrf.mxu0
    %v1055 = vadd.f32 %v934, %v1054
    %v1056 = vpop.f32.mrf.mxu0
    %1057 = vdwg.mxu0
    %1058 = vmatprep.subr.mxu0 0.0
    %1059 = vmatpush1.msra.mxu0 0.0
    %1060 = vmatprep.subr.mxu0 0.0
    %1061 = vmatpush1.msra.mxu0 0.0
    %1062 = vmatprep.subr.mxu0 0.0
    %1063 = vmatpush1.msra.mxu0 0.0
    %1064 = vmatprep.subr.mxu0 0.0
    %1065 = vmatpush1.msra.mxu0 0.0
    %1066 = vmatprep.subr.mxu0 0.0
    %1067 = vmatpush1.msra.mxu0 0.0
    %1068 = vmatprep.subr.mxu0 0.0
    %1069 = vmatpush1.msra.mxu0 0.0
    %1070 = vmatprep.subr.mxu0 0.0
    %1071 = vmatpush1.msra.mxu0 0.0
    %1072 = vmatprep.subr.mxu0 0.0
    %1073 = vmatpush1.msra.mxu0 0.0
    %1074 = vmatprep.subr.mxu0 0.0
    %1075 = vmatpush1.msra.mxu0 0.0
    %1076 = vmatprep.subr.mxu0 0.0
    %1077 = vmatpush1.msra.mxu0 0.0
    %1078 = vmatprep.subr.mxu0 0.0
    %1079 = vmatpush1.msra.mxu0 0.0
    %1080 = vmatprep.subr.mxu0 0.0
    %1081 = vmatpush1.msra.mxu0 0.0
    %1082 = vmatprep.subr.mxu0 0.0
    %v1083 = vand.u32 %v907, 4294901760
    %v1084 = vsub.f32 %v907, %v1083
    %v1085 = vand.u32 %v1084, 4294901760
    %v1086 = vsub.f32 %v1084, %v1085
    %v1087 = vand.u32 %v1086, 4294901760
    %1088 = vmatpush1.msra.mxu0 %v1087
    %1089 = vmatprep.subr.mxu0 0.0
    %v1090 = vand.u32 %v906, 4294901760
    %v1091 = vsub.f32 %v906, %v1090
    %v1092 = vand.u32 %v1091, 4294901760
    %v1093 = vsub.f32 %v1091, %v1092
    %v1094 = vand.u32 %v1093, 4294901760
    %1095 = vmatpush1.msra.mxu0 %v1094
    %1096 = vmatprep.subr.mxu0 0.0
    %v1097 = vand.u32 %v905, 4294901760
    %v1098 = vsub.f32 %v905, %v1097
    %v1099 = vand.u32 %v1098, 4294901760
    %v1100 = vsub.f32 %v1098, %v1099
    %v1101 = vand.u32 %v1100, 4294901760
    %1102 = vmatpush1.msra.mxu0 %v1101
    %1103 = vmatprep.subr.mxu0 0.0
    %v1104 = vand.u32 %v904, 4294901760
    %v1105 = vsub.f32 %v904, %v1104
    %v1106 = vand.u32 %v1105, 4294901760
    %v1107 = vsub.f32 %v1105, %v1106
    %v1108 = vand.u32 %v1107, 4294901760
    %1109 = vmatpush1.msra.mxu0 %v1108
    %1110 = vmatprep.subr.mxu0 0.0
    %1111 = vmatpush2.msra.mxu0 0.0
    %1112 = vmatprep.subr.mxu0 0.0
    %1113 = vmatpush2.msra.mxu0 0.0
    %1114 = vmatprep.subr.mxu0 0.0
    %1115 = vmatpush2.msra.mxu0 0.0
    %1116 = vmatprep.subr.mxu0 0.0
    %1117 = vmatpush2.msra.mxu0 0.0
    %1118 = vmatprep.subr.mxu0 0.0
    %1119 = vmatpush2.msra.mxu0 0.0
    %1120 = vmatprep.subr.mxu0 0.0
    %1121 = vmatpush2.msra.mxu0 0.0
    %1122 = vmatprep.subr.mxu0 0.0
    %1123 = vmatpush2.msra.mxu0 0.0
    %1124 = vmatprep.subr.mxu0 0.0
    %1125 = vmatpush2.msra.mxu0 0.0
    %1126 = vmatprep.subr.mxu0 0.0
    %1127 = vmatpush2.msra.mxu0 0.0
    %1128 = vmatprep.subr.mxu0 0.0
    %1129 = vmatpush2.msra.mxu0 0.0
    %1130 = vmatprep.subr.mxu0 0.0
    %1131 = vmatpush2.msra.mxu0 0.0
    %1132 = vmatprep.subr.mxu0 0.0
    %1133 = vmatpush2.msra.mxu0 0.0
    %1134 = vmatprep.subr.mxu0 0.0
    %1135 = vmatpush2.msra.mxu0 0.0
    %1136 = vmatprep.subr.mxu0 0.0
    %1137 = vmatpush2.msra.mxu0 0.0
    %1138 = vmatprep.subr.mxu0 0.0
    %1139 = vmatpush2.msra.mxu0 0.0
    %1140 = vmatprep.subr.mxu0 0.0
    %1141 = vmatpush2.msra.mxu0 0.0
    %1142 = vmatprep.mubr.f32.mxu0 0.0
    %v1143 = vand.u32 %v938, 4294901760
    %1144 = vmatmul.mubr.f32.gmra.mxu0 %v1143
    %v1145 = vpop.f32.mrf.mxu0
    %v1146 = vadd.f32 %v1025, %v1145
    %v1147 = vpop.f32.mrf.mxu0
    %1148 = vmatprep.mubr.f32.mxu0 0.0
    %v1149 = vand.u32 %v941, 4294901760
    %1150 = vmatmul.mubr.f32.gmra.mxu0 %v1149
    %v1151 = vpop.f32.mrf.mxu0
    %v1152 = vadd.f32 %v1035, %v1151
    %v1153 = vpop.f32.mrf.mxu0
    %1154 = vmatprep.mubr.f32.mxu0 0.0
    %v1155 = vand.u32 %v944, 4294901760
    %1156 = vmatmul.mubr.f32.gmra.mxu0 %v1155
    %v1157 = vpop.f32.mrf.mxu0
    %v1158 = vadd.f32 %v1045, %v1157
    %v1159 = vpop.f32.mrf.mxu0
    %1160 = vmatprep.mubr.f32.mxu0 0.0
    %v1161 = vand.u32 %v947, 4294901760
    %1162 = vmatmul.mubr.f32.gmra.mxu0 %v1161
    %v1163 = vpop.f32.mrf.mxu0
    %v1164 = vadd.f32 %v1055, %v1163
    %v1165 = vpop.f32.mrf.mxu0
    %1166 = vdwg.mxu0
    %1167 = vmatprep.subr.mxu0 0.0
    %1168 = vmatpush1.msra.mxu0 0.0
    %1169 = vmatprep.subr.mxu0 0.0
    %1170 = vmatpush1.msra.mxu0 0.0
    %1171 = vmatprep.subr.mxu0 0.0
    %1172 = vmatpush1.msra.mxu0 0.0
    %1173 = vmatprep.subr.mxu0 0.0
    %1174 = vmatpush1.msra.mxu0 0.0
    %1175 = vmatprep.subr.mxu0 0.0
    %1176 = vmatpush1.msra.mxu0 0.0
    %1177 = vmatprep.subr.mxu0 0.0
    %1178 = vmatpush1.msra.mxu0 0.0
    %1179 = vmatprep.subr.mxu0 0.0
    %1180 = vmatpush1.msra.mxu0 0.0
    %1181 = vmatprep.subr.mxu0 0.0
    %1182 = vmatpush1.msra.mxu0 0.0
    %1183 = vmatprep.subr.mxu0 0.0
    %1184 = vmatpush1.msra.mxu0 0.0
    %1185 = vmatprep.subr.mxu0 0.0
    %1186 = vmatpush1.msra.mxu0 0.0
    %1187 = vmatprep.subr.mxu0 0.0
    %1188 = vmatpush1.msra.mxu0 0.0
    %1189 = vmatprep.subr.mxu0 0.0
    %1190 = vmatpush1.msra.mxu0 0.0
    %1191 = vmatprep.subr.mxu0 0.0
    %v1192 = vand.u32 %v907, 4294901760
    %v1193 = vsub.f32 %v907, %v1192
    %1194 = vmatpush1.msra.mxu0 %v1193
    %1195 = vmatprep.subr.mxu0 0.0
    %v1196 = vand.u32 %v906, 4294901760
    %v1197 = vsub.f32 %v906, %v1196
    %1198 = vmatpush1.msra.mxu0 %v1197
    %1199 = vmatprep.subr.mxu0 0.0
    %v1200 = vand.u32 %v905, 4294901760
    %v1201 = vsub.f32 %v905, %v1200
    %1202 = vmatpush1.msra.mxu0 %v1201
    %1203 = vmatprep.subr.mxu0 0.0
    %v1204 = vand.u32 %v904, 4294901760
    %v1205 = vsub.f32 %v904, %v1204
    %1206 = vmatpush1.msra.mxu0 %v1205
    %1207 = vmatprep.subr.mxu0 0.0
    %1208 = vmatpush2.msra.mxu0 0.0
    %1209 = vmatprep.subr.mxu0 0.0
    %1210 = vmatpush2.msra.mxu0 0.0
    %1211 = vmatprep.subr.mxu0 0.0
    %1212 = vmatpush2.msra.mxu0 0.0
    %1213 = vmatprep.subr.mxu0 0.0
    %1214 = vmatpush2.msra.mxu0 0.0
    %1215 = vmatprep.subr.mxu0 0.0
    %1216 = vmatpush2.msra.mxu0 0.0
    %1217 = vmatprep.subr.mxu0 0.0
    %1218 = vmatpush2.msra.mxu0 0.0
    %1219 = vmatprep.subr.mxu0 0.0
    %1220 = vmatpush2.msra.mxu0 0.0
    %1221 = vmatprep.subr.mxu0 0.0
    %1222 = vmatpush2.msra.mxu0 0.0
    %1223 = vmatprep.subr.mxu0 0.0
    %1224 = vmatpush2.msra.mxu0 0.0
    %1225 = vmatprep.subr.mxu0 0.0
    %1226 = vmatpush2.msra.mxu0 0.0
    %1227 = vmatprep.subr.mxu0 0.0
    %1228 = vmatpush2.msra.mxu0 0.0
    %1229 = vmatprep.subr.mxu0 0.0
    %1230 = vmatpush2.msra.mxu0 0.0
    %1231 = vmatprep.subr.mxu0 0.0
    %1232 = vmatpush2.msra.mxu0 0.0
    %1233 = vmatprep.subr.mxu0 0.0
    %1234 = vmatpush2.msra.mxu0 0.0
    %1235 = vmatprep.subr.mxu0 0.0
    %1236 = vmatpush2.msra.mxu0 0.0
    %1237 = vmatprep.subr.mxu0 0.0
    %1238 = vmatpush2.msra.mxu0 0.0
    %1239 = vmatprep.mubr.f32.mxu0 0.0
    %v1240 = vand.u32 %v938, 4294901760
    %v1241 = vsub.f32 %v938, %v1240
    %1242 = vmatmul.mubr.f32.gmra.mxu0 %v1241
    %v1243 = vpop.f32.mrf.mxu0
    %v1244 = vadd.f32 %v1146, %v1243
    %v1245 = vpop.f32.mrf.mxu0
    %1246 = vmatprep.mubr.f32.mxu0 0.0
    %v1247 = vand.u32 %v941, 4294901760
    %v1248 = vsub.f32 %v941, %v1247
    %1249 = vmatmul.mubr.f32.gmra.mxu0 %v1248
    %v1250 = vpop.f32.mrf.mxu0
    %v1251 = vadd.f32 %v1152, %v1250
    %v1252 = vpop.f32.mrf.mxu0
    %1253 = vmatprep.mubr.f32.mxu0 0.0
    %v1254 = vand.u32 %v944, 4294901760
    %v1255 = vsub.f32 %v944, %v1254
    %1256 = vmatmul.mubr.f32.gmra.mxu0 %v1255
    %v1257 = vpop.f32.mrf.mxu0
    %v1258 = vadd.f32 %v1158, %v1257
    %v1259 = vpop.f32.mrf.mxu0
    %1260 = vmatprep.mubr.f32.mxu0 0.0
    %v1261 = vand.u32 %v947, 4294901760
    %v1262 = vsub.f32 %v947, %v1261
    %1263 = vmatmul.mubr.f32.gmra.mxu0 %v1262
    %v1264 = vpop.f32.mrf.mxu0
    %v1265 = vadd.f32 %v1164, %v1264
    %v1266 = vpop.f32.mrf.mxu0
    %1267 = vdwg.mxu0
    %1268 = vmatprep.subr.mxu0 0.0
    %1269 = vmatpush1.msra.mxu0 0.0
    %1270 = vmatprep.subr.mxu0 0.0
    %1271 = vmatpush1.msra.mxu0 0.0
    %1272 = vmatprep.subr.mxu0 0.0
    %1273 = vmatpush1.msra.mxu0 0.0
    %1274 = vmatprep.subr.mxu0 0.0
    %1275 = vmatpush1.msra.mxu0 0.0
    %1276 = vmatprep.subr.mxu0 0.0
    %1277 = vmatpush1.msra.mxu0 0.0
    %1278 = vmatprep.subr.mxu0 0.0
    %1279 = vmatpush1.msra.mxu0 0.0
    %1280 = vmatprep.subr.mxu0 0.0
    %1281 = vmatpush1.msra.mxu0 0.0
    %1282 = vmatprep.subr.mxu0 0.0
    %1283 = vmatpush1.msra.mxu0 0.0
    %1284 = vmatprep.subr.mxu0 0.0
    %1285 = vmatpush1.msra.mxu0 0.0
    %1286 = vmatprep.subr.mxu0 0.0
    %1287 = vmatpush1.msra.mxu0 0.0
    %1288 = vmatprep.subr.mxu0 0.0
    %1289 = vmatpush1.msra.mxu0 0.0
    %1290 = vmatprep.subr.mxu0 0.0
    %1291 = vmatpush1.msra.mxu0 0.0
    %1292 = vmatprep.subr.mxu0 0.0
    %v1293 = vand.u32 %v907, 4294901760
    %1294 = vmatpush1.msra.mxu0 %v1293
    %1295 = vmatprep.subr.mxu0 0.0
    %v1296 = vand.u32 %v906, 4294901760
    %1297 = vmatpush1.msra.mxu0 %v1296
    %1298 = vmatprep.subr.mxu0 0.0
    %v1299 = vand.u32 %v905, 4294901760
    %1300 = vmatpush1.msra.mxu0 %v1299
    %1301 = vmatprep.subr.mxu0 0.0
    %v1302 = vand.u32 %v904, 4294901760
    %1303 = vmatpush1.msra.mxu0 %v1302
    %1304 = vmatprep.subr.mxu0 0.0
    %1305 = vmatpush2.msra.mxu0 0.0
    %1306 = vmatprep.subr.mxu0 0.0
    %1307 = vmatpush2.msra.mxu0 0.0
    %1308 = vmatprep.subr.mxu0 0.0
    %1309 = vmatpush2.msra.mxu0 0.0
    %1310 = vmatprep.subr.mxu0 0.0
    %1311 = vmatpush2.msra.mxu0 0.0
    %1312 = vmatprep.subr.mxu0 0.0
    %1313 = vmatpush2.msra.mxu0 0.0
    %1314 = vmatprep.subr.mxu0 0.0
    %1315 = vmatpush2.msra.mxu0 0.0
    %1316 = vmatprep.subr.mxu0 0.0
    %1317 = vmatpush2.msra.mxu0 0.0
    %1318 = vmatprep.subr.mxu0 0.0
    %1319 = vmatpush2.msra.mxu0 0.0
    %1320 = vmatprep.subr.mxu0 0.0
    %1321 = vmatpush2.msra.mxu0 0.0
    %1322 = vmatprep.subr.mxu0 0.0
    %1323 = vmatpush2.msra.mxu0 0.0
    %1324 = vmatprep.subr.mxu0 0.0
    %1325 = vmatpush2.msra.mxu0 0.0
    %1326 = vmatprep.subr.mxu0 0.0
    %1327 = vmatpush2.msra.mxu0 0.0
    %1328 = vmatprep.subr.mxu0 0.0
    %1329 = vmatpush2.msra.mxu0 0.0
    %1330 = vmatprep.subr.mxu0 0.0
    %1331 = vmatpush2.msra.mxu0 0.0
    %1332 = vmatprep.subr.mxu0 0.0
    %1333 = vmatpush2.msra.mxu0 0.0
    %1334 = vmatprep.subr.mxu0 0.0
    %1335 = vmatpush2.msra.mxu0 0.0
    %1336 = vmatprep.mubr.f32.mxu0 0.0
    %v1337 = vand.u32 %v938, 4294901760
    %v1338 = vsub.f32 %v938, %v1337
    %v1339 = vand.u32 %v1338, 4294901760
    %1340 = vmatmul.mubr.f32.gmra.mxu0 %v1339
    %v1341 = vpop.f32.mrf.mxu0
    %v1342 = vadd.f32 %v1244, %v1341
    %v1343 = vpop.f32.mrf.mxu0
    %1344 = vmatprep.mubr.f32.mxu0 0.0
    %v1345 = vand.u32 %v941, 4294901760
    %v1346 = vsub.f32 %v941, %v1345
    %v1347 = vand.u32 %v1346, 4294901760
    %1348 = vmatmul.mubr.f32.gmra.mxu0 %v1347
    %v1349 = vpop.f32.mrf.mxu0
    %v1350 = vadd.f32 %v1251, %v1349
    %v1351 = vpop.f32.mrf.mxu0
    %1352 = vmatprep.mubr.f32.mxu0 0.0
    %v1353 = vand.u32 %v944, 4294901760
    %v1354 = vsub.f32 %v944, %v1353
    %v1355 = vand.u32 %v1354, 4294901760
    %1356 = vmatmul.mubr.f32.gmra.mxu0 %v1355
    %v1357 = vpop.f32.mrf.mxu0
    %v1358 = vadd.f32 %v1258, %v1357
    %v1359 = vpop.f32.mrf.mxu0
    %1360 = vmatprep.mubr.f32.mxu0 0.0
    %v1361 = vand.u32 %v947, 4294901760
    %v1362 = vsub.f32 %v947, %v1361
    %v1363 = vand.u32 %v1362, 4294901760
    %1364 = vmatmul.mubr.f32.gmra.mxu0 %v1363
    %v1365 = vpop.f32.mrf.mxu0
    %v1366 = vadd.f32 %v1265, %v1365
    %v1367 = vpop.f32.mrf.mxu0
    %1368 = vdwg.mxu0
    %1369 = vmatprep.subr.mxu0 0.0
    %1370 = vmatpush1.msra.mxu0 0.0
    %1371 = vmatprep.subr.mxu0 0.0
    %1372 = vmatpush1.msra.mxu0 0.0
    %1373 = vmatprep.subr.mxu0 0.0
    %1374 = vmatpush1.msra.mxu0 0.0
    %1375 = vmatprep.subr.mxu0 0.0
    %1376 = vmatpush1.msra.mxu0 0.0
    %1377 = vmatprep.subr.mxu0 0.0
    %1378 = vmatpush1.msra.mxu0 0.0
    %1379 = vmatprep.subr.mxu0 0.0
    %1380 = vmatpush1.msra.mxu0 0.0
    %1381 = vmatprep.subr.mxu0 0.0
    %1382 = vmatpush1.msra.mxu0 0.0
    %1383 = vmatprep.subr.mxu0 0.0
    %1384 = vmatpush1.msra.mxu0 0.0
    %1385 = vmatprep.subr.mxu0 0.0
    %1386 = vmatpush1.msra.mxu0 0.0
    %1387 = vmatprep.subr.mxu0 0.0
    %1388 = vmatpush1.msra.mxu0 0.0
    %1389 = vmatprep.subr.mxu0 0.0
    %1390 = vmatpush1.msra.mxu0 0.0
    %1391 = vmatprep.subr.mxu0 0.0
    %1392 = vmatpush1.msra.mxu0 0.0
    %1393 = vmatprep.subr.mxu0 0.0
    %v1394 = vand.u32 %v907, 4294901760
    %v1395 = vsub.f32 %v907, %v1394
    %v1396 = vand.u32 %v1395, 4294901760
    %1397 = vmatpush1.msra.mxu0 %v1396
    %1398 = vmatprep.subr.mxu0 0.0
    %v1399 = vand.u32 %v906, 4294901760
    %v1400 = vsub.f32 %v906, %v1399
    %v1401 = vand.u32 %v1400, 4294901760
    %1402 = vmatpush1.msra.mxu0 %v1401
    %1403 = vmatprep.subr.mxu0 0.0
    %v1404 = vand.u32 %v905, 4294901760
    %v1405 = vsub.f32 %v905, %v1404
    %v1406 = vand.u32 %v1405, 4294901760
    %1407 = vmatpush1.msra.mxu0 %v1406
    %1408 = vmatprep.subr.mxu0 0.0
    %v1409 = vand.u32 %v904, 4294901760
    %v1410 = vsub.f32 %v904, %v1409
    %v1411 = vand.u32 %v1410, 4294901760
    %1412 = vmatpush1.msra.mxu0 %v1411
    %1413 = vmatprep.subr.mxu0 0.0
    %1414 = vmatpush2.msra.mxu0 0.0
    %1415 = vmatprep.subr.mxu0 0.0
    %1416 = vmatpush2.msra.mxu0 0.0
    %1417 = vmatprep.subr.mxu0 0.0
    %1418 = vmatpush2.msra.mxu0 0.0
    %1419 = vmatprep.subr.mxu0 0.0
    %1420 = vmatpush2.msra.mxu0 0.0
    %1421 = vmatprep.subr.mxu0 0.0
    %1422 = vmatpush2.msra.mxu0 0.0
    %1423 = vmatprep.subr.mxu0 0.0
    %1424 = vmatpush2.msra.mxu0 0.0
    %1425 = vmatprep.subr.mxu0 0.0
    %1426 = vmatpush2.msra.mxu0 0.0
    %1427 = vmatprep.subr.mxu0 0.0
    %1428 = vmatpush2.msra.mxu0 0.0
    %1429 = vmatprep.subr.mxu0 0.0
    %1430 = vmatpush2.msra.mxu0 0.0
    %1431 = vmatprep.subr.mxu0 0.0
    %1432 = vmatpush2.msra.mxu0 0.0
    %1433 = vmatprep.subr.mxu0 0.0
    %1434 = vmatpush2.msra.mxu0 0.0
    %1435 = vmatprep.subr.mxu0 0.0
    %1436 = vmatpush2.msra.mxu0 0.0
    %1437 = vmatprep.subr.mxu0 0.0
    %1438 = vmatpush2.msra.mxu0 0.0
    %1439 = vmatprep.subr.mxu0 0.0
    %1440 = vmatpush2.msra.mxu0 0.0
    %1441 = vmatprep.subr.mxu0 0.0
    %1442 = vmatpush2.msra.mxu0 0.0
    %1443 = vmatprep.subr.mxu0 0.0
    %1444 = vmatpush2.msra.mxu0 0.0
    %1445 = vmatprep.mubr.f32.mxu0 0.0
    %v1446 = vand.u32 %v938, 4294901760
    %1447 = vmatmul.mubr.f32.gmra.mxu0 %v1446
    %v1448 = vpop.f32.mrf.mxu0
    %v1449 = vadd.f32 %v1342, %v1448
    %v1450 = vpop.f32.mrf.mxu0
    %1451 = vmatprep.mubr.f32.mxu0 0.0
    %v1452 = vand.u32 %v941, 4294901760
    %1453 = vmatmul.mubr.f32.gmra.mxu0 %v1452
    %v1454 = vpop.f32.mrf.mxu0
    %v1455 = vadd.f32 %v1350, %v1454
    %v1456 = vpop.f32.mrf.mxu0
    %1457 = vmatprep.mubr.f32.mxu0 0.0
    %v1458 = vand.u32 %v944, 4294901760
    %1459 = vmatmul.mubr.f32.gmra.mxu0 %v1458
    %v1460 = vpop.f32.mrf.mxu0
    %v1461 = vadd.f32 %v1358, %v1460
    %v1462 = vpop.f32.mrf.mxu0
    %1463 = vmatprep.mubr.f32.mxu0 0.0
    %v1464 = vand.u32 %v947, 4294901760
    %1465 = vmatmul.mubr.f32.gmra.mxu0 %v1464
    %v1466 = vpop.f32.mrf.mxu0
    %v1467 = vadd.f32 %v1366, %v1466
    %v1468 = vpop.f32.mrf.mxu0
    %1469 = vdwg.mxu0
    %1470 = vmatprep.subr.mxu0 0.0
    %1471 = vmatpush1.msra.mxu0 0.0
    %1472 = vmatprep.subr.mxu0 0.0
    %1473 = vmatpush1.msra.mxu0 0.0
    %1474 = vmatprep.subr.mxu0 0.0
    %1475 = vmatpush1.msra.mxu0 0.0
    %1476 = vmatprep.subr.mxu0 0.0
    %1477 = vmatpush1.msra.mxu0 0.0
    %1478 = vmatprep.subr.mxu0 0.0
    %1479 = vmatpush1.msra.mxu0 0.0
    %1480 = vmatprep.subr.mxu0 0.0
    %1481 = vmatpush1.msra.mxu0 0.0
    %1482 = vmatprep.subr.mxu0 0.0
    %1483 = vmatpush1.msra.mxu0 0.0
    %1484 = vmatprep.subr.mxu0 0.0
    %1485 = vmatpush1.msra.mxu0 0.0
    %1486 = vmatprep.subr.mxu0 0.0
    %1487 = vmatpush1.msra.mxu0 0.0
    %1488 = vmatprep.subr.mxu0 0.0
    %1489 = vmatpush1.msra.mxu0 0.0
    %1490 = vmatprep.subr.mxu0 0.0
    %1491 = vmatpush1.msra.mxu0 0.0
    %1492 = vmatprep.subr.mxu0 0.0
    %1493 = vmatpush1.msra.mxu0 0.0
    %1494 = vmatprep.subr.mxu0 0.0
    %v1495 = vand.u32 %v907, 4294901760
    %1496 = vmatpush1.msra.mxu0 %v1495
    %1497 = vmatprep.subr.mxu0 0.0
    %v1498 = vand.u32 %v906, 4294901760
    %1499 = vmatpush1.msra.mxu0 %v1498
    %1500 = vmatprep.subr.mxu0 0.0
    %v1501 = vand.u32 %v905, 4294901760
    %1502 = vmatpush1.msra.mxu0 %v1501
    %1503 = vmatprep.subr.mxu0 0.0
    %v1504 = vand.u32 %v904, 4294901760
    %1505 = vmatpush1.msra.mxu0 %v1504
    %1506 = vmatprep.subr.mxu0 0.0
    %1507 = vmatpush2.msra.mxu0 0.0
    %1508 = vmatprep.subr.mxu0 0.0
    %1509 = vmatpush2.msra.mxu0 0.0
    %1510 = vmatprep.subr.mxu0 0.0
    %1511 = vmatpush2.msra.mxu0 0.0
    %1512 = vmatprep.subr.mxu0 0.0
    %1513 = vmatpush2.msra.mxu0 0.0
    %1514 = vmatprep.subr.mxu0 0.0
    %1515 = vmatpush2.msra.mxu0 0.0
    %1516 = vmatprep.subr.mxu0 0.0
    %1517 = vmatpush2.msra.mxu0 0.0
    %1518 = vmatprep.subr.mxu0 0.0
    %1519 = vmatpush2.msra.mxu0 0.0
    %1520 = vmatprep.subr.mxu0 0.0
    %1521 = vmatpush2.msra.mxu0 0.0
    %1522 = vmatprep.subr.mxu0 0.0
    %1523 = vmatpush2.msra.mxu0 0.0
    %1524 = vmatprep.subr.mxu0 0.0
    %1525 = vmatpush2.msra.mxu0 0.0
    %1526 = vmatprep.subr.mxu0 0.0
    %1527 = vmatpush2.msra.mxu0 0.0
    %1528 = vmatprep.subr.mxu0 0.0
    %1529 = vmatpush2.msra.mxu0 0.0
    %1530 = vmatprep.subr.mxu0 0.0
    %1531 = vmatpush2.msra.mxu0 0.0
    %1532 = vmatprep.subr.mxu0 0.0
    %1533 = vmatpush2.msra.mxu0 0.0
    %1534 = vmatprep.subr.mxu0 0.0
    %1535 = vmatpush2.msra.mxu0 0.0
    %1536 = vmatprep.subr.mxu0 0.0
    %1537 = vmatpush2.msra.mxu0 0.0
    %1538 = vmatprep.mubr.f32.mxu0 0.0
    %v1539 = vand.u32 %v938, 4294901760
    %1540 = vmatmul.mubr.f32.gmra.mxu0 %v1539
    %v1541 = vpop.f32.mrf.mxu0
    %v1542 = vadd.f32 %v1449, %v1541
    %v1543 = vpop.f32.mrf.mxu0
    %1544 = vmatprep.mubr.f32.mxu0 0.0
    %v1545 = vand.u32 %v941, 4294901760
    %1546 = vmatmul.mubr.f32.gmra.mxu0 %v1545
    %v1547 = vpop.f32.mrf.mxu0
    %v1548 = vadd.f32 %v1455, %v1547
    %v1549 = vpop.f32.mrf.mxu0
    %1550 = vmatprep.mubr.f32.mxu0 0.0
    %v1551 = vand.u32 %v944, 4294901760
    %1552 = vmatmul.mubr.f32.gmra.mxu0 %v1551
    %v1553 = vpop.f32.mrf.mxu0
    %v1554 = vadd.f32 %v1461, %v1553
    %v1555 = vpop.f32.mrf.mxu0
    %1556 = vmatprep.mubr.f32.mxu0 0.0
    %v1557 = vand.u32 %v947, 4294901760
    %1558 = vmatmul.mubr.f32.gmra.mxu0 %v1557
    %v1559 = vpop.f32.mrf.mxu0
    %v1560 = vadd.f32 %v1467, %v1559
    %v1561 = vpop.f32.mrf.mxu0
    %1562 = vdwg.mxu0
    %v1563 = vtanh.pop %v1542
    %v1564 = vtanh.pop %v1548
    %v1565 = vtanh.pop %v1554
    %v1566 = vtanh.pop %v1560
    %s1567 = scalar_lea.vmem %s3, 32
    %v1568 = vld [vmem:[%s1567] sm:$0xff]
    %v1569 = vld [vmem:[%s1567 + $0x8] sm:$0xff]
    %v1570 = vld [vmem:[%s1567 + $0x10] sm:$0xff]
    %v1571 = vld [vmem:[%s1567 + $0x18] sm:$0xff]
    %s1572 = scalar_lea.vmem %s4, 32
    %v1573 = vld [vmem:[%s1572] sm:$0xff]
    %v1574 = vld [vmem:[%s1572 + $0x8] sm:$0xff]
    %v1575 = vld [vmem:[%s1572 + $0x10] sm:$0xff]
    %v1576 = vld [vmem:[%s1572 + $0x18] sm:$0xff]
    %1578 = vset.pattern.permute.xlu0 0
    %1579 = vperm.xlu0 %1578, %v1573
    %v1580 = vpop.permute.xlu0 %1579
    %1583 = vset.pattern.permute.xlu0 0
    %1584 = vperm.xlu0 %1583, %v1574
    %v1585 = vpop.permute.xlu0 %1584
    %1588 = vset.pattern.permute.xlu0 0
    %1589 = vperm.xlu0 %1588, %v1575
    %v1590 = vpop.permute.xlu0 %1589
    %1593 = vset.pattern.permute.xlu0 0
    %1594 = vperm.xlu0 %1593, %v1576
    %v1595 = vpop.permute.xlu0 %1594
    %v1598 = vsel %vm936, %v1568, 0
    %v1601 = vsel %vm936, %v1569, 0
    %v1604 = vsel %vm936, %v1570, 0
    %v1607 = vsel %vm936, %v1571, 0
    %1609 = vmatprep.subr.mxu0 0.0
    %1610 = vmatpush1.msra.mxu0 0.0
    %1611 = vmatprep.subr.mxu0 0.0
    %1612 = vmatpush1.msra.mxu0 0.0
    %1613 = vmatprep.subr.mxu0 0.0
    %1614 = vmatpush1.msra.mxu0 0.0
    %1615 = vmatprep.subr.mxu0 0.0
    %1616 = vmatpush1.msra.mxu0 0.0
    %1617 = vmatprep.subr.mxu0 0.0
    %1618 = vmatpush1.msra.mxu0 0.0
    %1619 = vmatprep.subr.mxu0 0.0
    %1620 = vmatpush1.msra.mxu0 0.0
    %1621 = vmatprep.subr.mxu0 0.0
    %1622 = vmatpush1.msra.mxu0 0.0
    %1623 = vmatprep.subr.mxu0 0.0
    %1624 = vmatpush1.msra.mxu0 0.0
    %1625 = vmatprep.subr.mxu0 0.0
    %1626 = vmatpush1.msra.mxu0 0.0
    %1627 = vmatprep.subr.mxu0 0.0
    %1628 = vmatpush1.msra.mxu0 0.0
    %1629 = vmatprep.subr.mxu0 0.0
    %1630 = vmatpush1.msra.mxu0 0.0
    %1631 = vmatprep.subr.mxu0 0.0
    %1632 = vmatpush1.msra.mxu0 0.0
    %1633 = vmatprep.subr.mxu0 0.0
    %v1634 = vand.u32 %v1566, 4294901760
    %1635 = vmatpush1.msra.mxu0 %v1634
    %1636 = vmatprep.subr.mxu0 0.0
    %v1637 = vand.u32 %v1565, 4294901760
    %1638 = vmatpush1.msra.mxu0 %v1637
    %1639 = vmatprep.subr.mxu0 0.0
    %v1640 = vand.u32 %v1564, 4294901760
    %1641 = vmatpush1.msra.mxu0 %v1640
    %1642 = vmatprep.subr.mxu0 0.0
    %v1643 = vand.u32 %v1563, 4294901760
    %1644 = vmatpush1.msra.mxu0 %v1643
    %1645 = vmatprep.subr.mxu0 0.0
    %1646 = vmatpush2.msra.mxu0 0.0
    %1647 = vmatprep.subr.mxu0 0.0
    %1648 = vmatpush2.msra.mxu0 0.0
    %1649 = vmatprep.subr.mxu0 0.0
    %1650 = vmatpush2.msra.mxu0 0.0
    %1651 = vmatprep.subr.mxu0 0.0
    %1652 = vmatpush2.msra.mxu0 0.0
    %1653 = vmatprep.subr.mxu0 0.0
    %1654 = vmatpush2.msra.mxu0 0.0
    %1655 = vmatprep.subr.mxu0 0.0
    %1656 = vmatpush2.msra.mxu0 0.0
    %1657 = vmatprep.subr.mxu0 0.0
    %1658 = vmatpush2.msra.mxu0 0.0
    %1659 = vmatprep.subr.mxu0 0.0
    %1660 = vmatpush2.msra.mxu0 0.0
    %1661 = vmatprep.subr.mxu0 0.0
    %1662 = vmatpush2.msra.mxu0 0.0
    %1663 = vmatprep.subr.mxu0 0.0
    %1664 = vmatpush2.msra.mxu0 0.0
    %1665 = vmatprep.subr.mxu0 0.0
    %1666 = vmatpush2.msra.mxu0 0.0
    %1667 = vmatprep.subr.mxu0 0.0
    %1668 = vmatpush2.msra.mxu0 0.0
    %1669 = vmatprep.subr.mxu0 0.0
    %1670 = vmatpush2.msra.mxu0 0.0
    %1671 = vmatprep.subr.mxu0 0.0
    %1672 = vmatpush2.msra.mxu0 0.0
    %1673 = vmatprep.subr.mxu0 0.0
    %1674 = vmatpush2.msra.mxu0 0.0
    %1675 = vmatprep.subr.mxu0 0.0
    %1676 = vmatpush2.msra.mxu0 0.0
    %1677 = vmatprep.mubr.f32.mxu0 0.0
    %v1678 = vand.u32 %v1598, 4294901760
    %v1679 = vsub.f32 %v1598, %v1678
    %v1680 = vand.u32 %v1679, 4294901760
    %v1681 = vsub.f32 %v1679, %v1680
    %v1682 = vand.u32 %v1681, 4294901760
    %1683 = vmatmul.mubr.f32.gmra.mxu0 %v1682
    %v1684 = vpop.f32.mrf.mxu0
    %v1685 = vadd.f32 %v1580, %v1684
    %v1686 = vpop.f32.mrf.mxu0
    %1687 = vmatprep.mubr.f32.mxu0 0.0
    %v1688 = vand.u32 %v1601, 4294901760
    %v1689 = vsub.f32 %v1601, %v1688
    %v1690 = vand.u32 %v1689, 4294901760
    %v1691 = vsub.f32 %v1689, %v1690
    %v1692 = vand.u32 %v1691, 4294901760
    %1693 = vmatmul.mubr.f32.gmra.mxu0 %v1692
    %v1694 = vpop.f32.mrf.mxu0
    %v1695 = vadd.f32 %v1585, %v1694
    %v1696 = vpop.f32.mrf.mxu0
    %1697 = vmatprep.mubr.f32.mxu0 0.0
    %v1698 = vand.u32 %v1604, 4294901760
    %v1699 = vsub.f32 %v1604, %v1698
    %v1700 = vand.u32 %v1699, 4294901760
    %v1701 = vsub.f32 %v1699, %v1700
    %v1702 = vand.u32 %v1701, 4294901760
    %1703 = vmatmul.mubr.f32.gmra.mxu0 %v1702
    %v1704 = vpop.f32.mrf.mxu0
    %v1705 = vadd.f32 %v1590, %v1704
    %v1706 = vpop.f32.mrf.mxu0
    %1707 = vmatprep.mubr.f32.mxu0 0.0
    %v1708 = vand.u32 %v1607, 4294901760
    %v1709 = vsub.f32 %v1607, %v1708
    %v1710 = vand.u32 %v1709, 4294901760
    %v1711 = vsub.f32 %v1709, %v1710
    %v1712 = vand.u32 %v1711, 4294901760
    %1713 = vmatmul.mubr.f32.gmra.mxu0 %v1712
    %v1714 = vpop.f32.mrf.mxu0
    %v1715 = vadd.f32 %v1595, %v1714
    %v1716 = vpop.f32.mrf.mxu0
    %1717 = vdwg.mxu0
    %1718 = vmatprep.subr.mxu0 0.0
    %1719 = vmatpush1.msra.mxu0 0.0
    %1720 = vmatprep.subr.mxu0 0.0
    %1721 = vmatpush1.msra.mxu0 0.0
    %1722 = vmatprep.subr.mxu0 0.0
    %1723 = vmatpush1.msra.mxu0 0.0
    %1724 = vmatprep.subr.mxu0 0.0
    %1725 = vmatpush1.msra.mxu0 0.0
    %1726 = vmatprep.subr.mxu0 0.0
    %1727 = vmatpush1.msra.mxu0 0.0
    %1728 = vmatprep.subr.mxu0 0.0
    %1729 = vmatpush1.msra.mxu0 0.0
    %1730 = vmatprep.subr.mxu0 0.0
    %1731 = vmatpush1.msra.mxu0 0.0
    %1732 = vmatprep.subr.mxu0 0.0
    %1733 = vmatpush1.msra.mxu0 0.0
    %1734 = vmatprep.subr.mxu0 0.0
    %1735 = vmatpush1.msra.mxu0 0.0
    %1736 = vmatprep.subr.mxu0 0.0
    %1737 = vmatpush1.msra.mxu0 0.0
    %1738 = vmatprep.subr.mxu0 0.0
    %1739 = vmatpush1.msra.mxu0 0.0
    %1740 = vmatprep.subr.mxu0 0.0
    %1741 = vmatpush1.msra.mxu0 0.0
    %1742 = vmatprep.subr.mxu0 0.0
    %v1743 = vand.u32 %v1566, 4294901760
    %v1744 = vsub.f32 %v1566, %v1743
    %v1745 = vand.u32 %v1744, 4294901760
    %v1746 = vsub.f32 %v1744, %v1745
    %v1747 = vand.u32 %v1746, 4294901760
    %1748 = vmatpush1.msra.mxu0 %v1747
    %1749 = vmatprep.subr.mxu0 0.0
    %v1750 = vand.u32 %v1565, 4294901760
    %v1751 = vsub.f32 %v1565, %v1750
    %v1752 = vand.u32 %v1751, 4294901760
    %v1753 = vsub.f32 %v1751, %v1752
    %v1754 = vand.u32 %v1753, 4294901760
    %1755 = vmatpush1.msra.mxu0 %v1754
    %1756 = vmatprep.subr.mxu0 0.0
    %v1757 = vand.u32 %v1564, 4294901760
    %v1758 = vsub.f32 %v1564, %v1757
    %v1759 = vand.u32 %v1758, 4294901760
    %v1760 = vsub.f32 %v1758, %v1759
    %v1761 = vand.u32 %v1760, 4294901760
    %1762 = vmatpush1.msra.mxu0 %v1761
    %1763 = vmatprep.subr.mxu0 0.0
    %v1764 = vand.u32 %v1563, 4294901760
    %v1765 = vsub.f32 %v1563, %v1764
    %v1766 = vand.u32 %v1765, 4294901760
    %v1767 = vsub.f32 %v1765, %v1766
    %v1768 = vand.u32 %v1767, 4294901760
    %1769 = vmatpush1.msra.mxu0 %v1768
    %1770 = vmatprep.subr.mxu0 0.0
    %1771 = vmatpush2.msra.mxu0 0.0
    %1772 = vmatprep.subr.mxu0 0.0
    %1773 = vmatpush2.msra.mxu0 0.0
    %1774 = vmatprep.subr.mxu0 0.0
    %1775 = vmatpush2.msra.mxu0 0.0
    %1776 = vmatprep.subr.mxu0 0.0
    %1777 = vmatpush2.msra.mxu0 0.0
    %1778 = vmatprep.subr.mxu0 0.0
    %1779 = vmatpush2.msra.mxu0 0.0
    %1780 = vmatprep.subr.mxu0 0.0
    %1781 = vmatpush2.msra.mxu0 0.0
    %1782 = vmatprep.subr.mxu0 0.0
    %1783 = vmatpush2.msra.mxu0 0.0
    %1784 = vmatprep.subr.mxu0 0.0
    %1785 = vmatpush2.msra.mxu0 0.0
    %1786 = vmatprep.subr.mxu0 0.0
    %1787 = vmatpush2.msra.mxu0 0.0
    %1788 = vmatprep.subr.mxu0 0.0
    %1789 = vmatpush2.msra.mxu0 0.0
    %1790 = vmatprep.subr.mxu0 0.0
    %1791 = vmatpush2.msra.mxu0 0.0
    %1792 = vmatprep.subr.mxu0 0.0
    %1793 = vmatpush2.msra.mxu0 0.0
    %1794 = vmatprep.subr.mxu0 0.0
    %1795 = vmatpush2.msra.mxu0 0.0
    %1796 = vmatprep.subr.mxu0 0.0
    %1797 = vmatpush2.msra.mxu0 0.0
    %1798 = vmatprep.subr.mxu0 0.0
    %1799 = vmatpush2.msra.mxu0 0.0
    %1800 = vmatprep.subr.mxu0 0.0
    %1801 = vmatpush2.msra.mxu0 0.0
    %1802 = vmatprep.mubr.f32.mxu0 0.0
    %v1803 = vand.u32 %v1598, 4294901760
    %1804 = vmatmul.mubr.f32.gmra.mxu0 %v1803
    %v1805 = vpop.f32.mrf.mxu0
    %v1806 = vadd.f32 %v1685, %v1805
    %v1807 = vpop.f32.mrf.mxu0
    %1808 = vmatprep.mubr.f32.mxu0 0.0
    %v1809 = vand.u32 %v1601, 4294901760
    %1810 = vmatmul.mubr.f32.gmra.mxu0 %v1809
    %v1811 = vpop.f32.mrf.mxu0
    %v1812 = vadd.f32 %v1695, %v1811
    %v1813 = vpop.f32.mrf.mxu0
    %1814 = vmatprep.mubr.f32.mxu0 0.0
    %v1815 = vand.u32 %v1604, 4294901760
    %1816 = vmatmul.mubr.f32.gmra.mxu0 %v1815
    %v1817 = vpop.f32.mrf.mxu0
    %v1818 = vadd.f32 %v1705, %v1817
    %v1819 = vpop.f32.mrf.mxu0
    %1820 = vmatprep.mubr.f32.mxu0 0.0
    %v1821 = vand.u32 %v1607, 4294901760
    %1822 = vmatmul.mubr.f32.gmra.mxu0 %v1821
    %v1823 = vpop.f32.mrf.mxu0
    %v1824 = vadd.f32 %v1715, %v1823
    %v1825 = vpop.f32.mrf.mxu0
    %1826 = vdwg.mxu0
    %1827 = vmatprep.subr.mxu0 0.0
    %1828 = vmatpush1.msra.mxu0 0.0
    %1829 = vmatprep.subr.mxu0 0.0
    %1830 = vmatpush1.msra.mxu0 0.0
    %1831 = vmatprep.subr.mxu0 0.0
    %1832 = vmatpush1.msra.mxu0 0.0
    %1833 = vmatprep.subr.mxu0 0.0
    %1834 = vmatpush1.msra.mxu0 0.0
    %1835 = vmatprep.subr.mxu0 0.0
    %1836 = vmatpush1.msra.mxu0 0.0
    %1837 = vmatprep.subr.mxu0 0.0
    %1838 = vmatpush1.msra.mxu0 0.0
    %1839 = vmatprep.subr.mxu0 0.0
    %1840 = vmatpush1.msra.mxu0 0.0
    %1841 = vmatprep.subr.mxu0 0.0
    %1842 = vmatpush1.msra.mxu0 0.0
    %1843 = vmatprep.subr.mxu0 0.0
    %1844 = vmatpush1.msra.mxu0 0.0
    %1845 = vmatprep.subr.mxu0 0.0
    %1846 = vmatpush1.msra.mxu0 0.0
    %1847 = vmatprep.subr.mxu0 0.0
    %1848 = vmatpush1.msra.mxu0 0.0
    %1849 = vmatprep.subr.mxu0 0.0
    %1850 = vmatpush1.msra.mxu0 0.0
    %1851 = vmatprep.subr.mxu0 0.0
    %v1852 = vand.u32 %v1566, 4294901760
    %v1853 = vsub.f32 %v1566, %v1852
    %1854 = vmatpush1.msra.mxu0 %v1853
    %1855 = vmatprep.subr.mxu0 0.0
    %v1856 = vand.u32 %v1565, 4294901760
    %v1857 = vsub.f32 %v1565, %v1856
    %1858 = vmatpush1.msra.mxu0 %v1857
    %1859 = vmatprep.subr.mxu0 0.0
    %v1860 = vand.u32 %v1564, 4294901760
    %v1861 = vsub.f32 %v1564, %v1860
    %1862 = vmatpush1.msra.mxu0 %v1861
    %1863 = vmatprep.subr.mxu0 0.0
    %v1864 = vand.u32 %v1563, 4294901760
    %v1865 = vsub.f32 %v1563, %v1864
    %1866 = vmatpush1.msra.mxu0 %v1865
    %1867 = vmatprep.subr.mxu0 0.0
    %1868 = vmatpush2.msra.mxu0 0.0
    %1869 = vmatprep.subr.mxu0 0.0
    %1870 = vmatpush2.msra.mxu0 0.0
    %1871 = vmatprep.subr.mxu0 0.0
    %1872 = vmatpush2.msra.mxu0 0.0
    %1873 = vmatprep.subr.mxu0 0.0
    %1874 = vmatpush2.msra.mxu0 0.0
    %1875 = vmatprep.subr.mxu0 0.0
    %1876 = vmatpush2.msra.mxu0 0.0
    %1877 = vmatprep.subr.mxu0 0.0
    %1878 = vmatpush2.msra.mxu0 0.0
    %1879 = vmatprep.subr.mxu0 0.0
    %1880 = vmatpush2.msra.mxu0 0.0
    %1881 = vmatprep.subr.mxu0 0.0
    %1882 = vmatpush2.msra.mxu0 0.0
    %1883 = vmatprep.subr.mxu0 0.0
    %1884 = vmatpush2.msra.mxu0 0.0
    %1885 = vmatprep.subr.mxu0 0.0
    %1886 = vmatpush2.msra.mxu0 0.0
    %1887 = vmatprep.subr.mxu0 0.0
    %1888 = vmatpush2.msra.mxu0 0.0
    %1889 = vmatprep.subr.mxu0 0.0
    %1890 = vmatpush2.msra.mxu0 0.0
    %1891 = vmatprep.subr.mxu0 0.0
    %1892 = vmatpush2.msra.mxu0 0.0
    %1893 = vmatprep.subr.mxu0 0.0
    %1894 = vmatpush2.msra.mxu0 0.0
    %1895 = vmatprep.subr.mxu0 0.0
    %1896 = vmatpush2.msra.mxu0 0.0
    %1897 = vmatprep.subr.mxu0 0.0
    %1898 = vmatpush2.msra.mxu0 0.0
    %1899 = vmatprep.mubr.f32.mxu0 0.0
    %v1900 = vand.u32 %v1598, 4294901760
    %v1901 = vsub.f32 %v1598, %v1900
    %1902 = vmatmul.mubr.f32.gmra.mxu0 %v1901
    %v1903 = vpop.f32.mrf.mxu0
    %v1904 = vadd.f32 %v1806, %v1903
    %v1905 = vpop.f32.mrf.mxu0
    %1906 = vmatprep.mubr.f32.mxu0 0.0
    %v1907 = vand.u32 %v1601, 4294901760
    %v1908 = vsub.f32 %v1601, %v1907
    %1909 = vmatmul.mubr.f32.gmra.mxu0 %v1908
    %v1910 = vpop.f32.mrf.mxu0
    %v1911 = vadd.f32 %v1812, %v1910
    %v1912 = vpop.f32.mrf.mxu0
    %1913 = vmatprep.mubr.f32.mxu0 0.0
    %v1914 = vand.u32 %v1604, 4294901760
    %v1915 = vsub.f32 %v1604, %v1914
    %1916 = vmatmul.mubr.f32.gmra.mxu0 %v1915
    %v1917 = vpop.f32.mrf.mxu0
    %v1918 = vadd.f32 %v1818, %v1917
    %v1919 = vpop.f32.mrf.mxu0
    %1920 = vmatprep.mubr.f32.mxu0 0.0
    %v1921 = vand.u32 %v1607, 4294901760
    %v1922 = vsub.f32 %v1607, %v1921
    %1923 = vmatmul.mubr.f32.gmra.mxu0 %v1922
    %v1924 = vpop.f32.mrf.mxu0
    %v1925 = vadd.f32 %v1824, %v1924
    %v1926 = vpop.f32.mrf.mxu0
    %1927 = vdwg.mxu0
    %1928 = vmatprep.subr.mxu0 0.0
    %1929 = vmatpush1.msra.mxu0 0.0
    %1930 = vmatprep.subr.mxu0 0.0
    %1931 = vmatpush1.msra.mxu0 0.0
    %1932 = vmatprep.subr.mxu0 0.0
    %1933 = vmatpush1.msra.mxu0 0.0
    %1934 = vmatprep.subr.mxu0 0.0
    %1935 = vmatpush1.msra.mxu0 0.0
    %1936 = vmatprep.subr.mxu0 0.0
    %1937 = vmatpush1.msra.mxu0 0.0
    %1938 = vmatprep.subr.mxu0 0.0
    %1939 = vmatpush1.msra.mxu0 0.0
    %1940 = vmatprep.subr.mxu0 0.0
    %1941 = vmatpush1.msra.mxu0 0.0
    %1942 = vmatprep.subr.mxu0 0.0
    %1943 = vmatpush1.msra.mxu0 0.0
    %1944 = vmatprep.subr.mxu0 0.0
    %1945 = vmatpush1.msra.mxu0 0.0
    %1946 = vmatprep.subr.mxu0 0.0
    %1947 = vmatpush1.msra.mxu0 0.0
    %1948 = vmatprep.subr.mxu0 0.0
    %1949 = vmatpush1.msra.mxu0 0.0
    %1950 = vmatprep.subr.mxu0 0.0
    %1951 = vmatpush1.msra.mxu0 0.0
    %1952 = vmatprep.subr.mxu0 0.0
    %v1953 = vand.u32 %v1566, 4294901760
    %1954 = vmatpush1.msra.mxu0 %v1953
    %1955 = vmatprep.subr.mxu0 0.0
    %v1956 = vand.u32 %v1565, 4294901760
    %1957 = vmatpush1.msra.mxu0 %v1956
    %1958 = vmatprep.subr.mxu0 0.0
    %v1959 = vand.u32 %v1564, 4294901760
    %1960 = vmatpush1.msra.mxu0 %v1959
    %1961 = vmatprep.subr.mxu0 0.0
    %v1962 = vand.u32 %v1563, 4294901760
    %1963 = vmatpush1.msra.mxu0 %v1962
    %1964 = vmatprep.subr.mxu0 0.0
    %1965 = vmatpush2.msra.mxu0 0.0
    %1966 = vmatprep.subr.mxu0 0.0
    %1967 = vmatpush2.msra.mxu0 0.0
    %1968 = vmatprep.subr.mxu0 0.0
    %1969 = vmatpush2.msra.mxu0 0.0
    %1970 = vmatprep.subr.mxu0 0.0
    %1971 = vmatpush2.msra.mxu0 0.0
    %1972 = vmatprep.subr.mxu0 0.0
    %1973 = vmatpush2.msra.mxu0 0.0
    %1974 = vmatprep.subr.mxu0 0.0
    %1975 = vmatpush2.msra.mxu0 0.0
    %1976 = vmatprep.subr.mxu0 0.0
    %1977 = vmatpush2.msra.mxu0 0.0
    %1978 = vmatprep.subr.mxu0 0.0
    %1979 = vmatpush2.msra.mxu0 0.0
    %1980 = vmatprep.subr.mxu0 0.0
    %1981 = vmatpush2.msra.mxu0 0.0
    %1982 = vmatprep.subr.mxu0 0.0
    %1983 = vmatpush2.msra.mxu0 0.0
    %1984 = vmatprep.subr.mxu0 0.0
    %1985 = vmatpush2.msra.mxu0 0.0
    %1986 = vmatprep.subr.mxu0 0.0
    %1987 = vmatpush2.msra.mxu0 0.0
    %1988 = vmatprep.subr.mxu0 0.0
    %1989 = vmatpush2.msra.mxu0 0.0
    %1990 = vmatprep.subr.mxu0 0.0
    %1991 = vmatpush2.msra.mxu0 0.0
    %1992 = vmatprep.subr.mxu0 0.0
    %1993 = vmatpush2.msra.mxu0 0.0
    %1994 = vmatprep.subr.mxu0 0.0
    %1995 = vmatpush2.msra.mxu0 0.0
    %1996 = vmatprep.mubr.f32.mxu0 0.0
    %v1997 = vand.u32 %v1598, 4294901760
    %v1998 = vsub.f32 %v1598, %v1997
    %v1999 = vand.u32 %v1998, 4294901760
    %2000 = vmatmul.mubr.f32.gmra.mxu0 %v1999
    %v2001 = vpop.f32.mrf.mxu0
    %v2002 = vadd.f32 %v1904, %v2001
    %v2003 = vpop.f32.mrf.mxu0
    %2004 = vmatprep.mubr.f32.mxu0 0.0
    %v2005 = vand.u32 %v1601, 4294901760
    %v2006 = vsub.f32 %v1601, %v2005
    %v2007 = vand.u32 %v2006, 4294901760
    %2008 = vmatmul.mubr.f32.gmra.mxu0 %v2007
    %v2009 = vpop.f32.mrf.mxu0
    %v2010 = vadd.f32 %v1911, %v2009
    %v2011 = vpop.f32.mrf.mxu0
    %2012 = vmatprep.mubr.f32.mxu0 0.0
    %v2013 = vand.u32 %v1604, 4294901760
    %v2014 = vsub.f32 %v1604, %v2013
    %v2015 = vand.u32 %v2014, 4294901760
    %2016 = vmatmul.mubr.f32.gmra.mxu0 %v2015
    %v2017 = vpop.f32.mrf.mxu0
    %v2018 = vadd.f32 %v1918, %v2017
    %v2019 = vpop.f32.mrf.mxu0
    %2020 = vmatprep.mubr.f32.mxu0 0.0
    %v2021 = vand.u32 %v1607, 4294901760
    %v2022 = vsub.f32 %v1607, %v2021
    %v2023 = vand.u32 %v2022, 4294901760
    %2024 = vmatmul.mubr.f32.gmra.mxu0 %v2023
    %v2025 = vpop.f32.mrf.mxu0
    %v2026 = vadd.f32 %v1925, %v2025
    %v2027 = vpop.f32.mrf.mxu0
    %2028 = vdwg.mxu0
    %2029 = vmatprep.subr.mxu0 0.0
    %2030 = vmatpush1.msra.mxu0 0.0
    %2031 = vmatprep.subr.mxu0 0.0
    %2032 = vmatpush1.msra.mxu0 0.0
    %2033 = vmatprep.subr.mxu0 0.0
    %2034 = vmatpush1.msra.mxu0 0.0
    %2035 = vmatprep.subr.mxu0 0.0
    %2036 = vmatpush1.msra.mxu0 0.0
    %2037 = vmatprep.subr.mxu0 0.0
    %2038 = vmatpush1.msra.mxu0 0.0
    %2039 = vmatprep.subr.mxu0 0.0
    %2040 = vmatpush1.msra.mxu0 0.0
    %2041 = vmatprep.subr.mxu0 0.0
    %2042 = vmatpush1.msra.mxu0 0.0
    %2043 = vmatprep.subr.mxu0 0.0
    %2044 = vmatpush1.msra.mxu0 0.0
    %2045 = vmatprep.subr.mxu0 0.0
    %2046 = vmatpush1.msra.mxu0 0.0
    %2047 = vmatprep.subr.mxu0 0.0
    %2048 = vmatpush1.msra.mxu0 0.0
    %2049 = vmatprep.subr.mxu0 0.0
    %2050 = vmatpush1.msra.mxu0 0.0
    %2051 = vmatprep.subr.mxu0 0.0
    %2052 = vmatpush1.msra.mxu0 0.0
    %2053 = vmatprep.subr.mxu0 0.0
    %v2054 = vand.u32 %v1566, 4294901760
    %v2055 = vsub.f32 %v1566, %v2054
    %v2056 = vand.u32 %v2055, 4294901760
    %2057 = vmatpush1.msra.mxu0 %v2056
    %2058 = vmatprep.subr.mxu0 0.0
    %v2059 = vand.u32 %v1565, 4294901760
    %v2060 = vsub.f32 %v1565, %v2059
    %v2061 = vand.u32 %v2060, 4294901760
    %2062 = vmatpush1.msra.mxu0 %v2061
    %2063 = vmatprep.subr.mxu0 0.0
    %v2064 = vand.u32 %v1564, 4294901760
    %v2065 = vsub.f32 %v1564, %v2064
    %v2066 = vand.u32 %v2065, 4294901760
    %2067 = vmatpush1.msra.mxu0 %v2066
    %2068 = vmatprep.subr.mxu0 0.0
    %v2069 = vand.u32 %v1563, 4294901760
    %v2070 = vsub.f32 %v1563, %v2069
    %v2071 = vand.u32 %v2070, 4294901760
    %2072 = vmatpush1.msra.mxu0 %v2071
    %2073 = vmatprep.subr.mxu0 0.0
    %2074 = vmatpush2.msra.mxu0 0.0
    %2075 = vmatprep.subr.mxu0 0.0
    %2076 = vmatpush2.msra.mxu0 0.0
    %2077 = vmatprep.subr.mxu0 0.0
    %2078 = vmatpush2.msra.mxu0 0.0
    %2079 = vmatprep.subr.mxu0 0.0
    %2080 = vmatpush2.msra.mxu0 0.0
    %2081 = vmatprep.subr.mxu0 0.0
    %2082 = vmatpush2.msra.mxu0 0.0
    %2083 = vmatprep.subr.mxu0 0.0
    %2084 = vmatpush2.msra.mxu0 0.0
    %2085 = vmatprep.subr.mxu0 0.0
    %2086 = vmatpush2.msra.mxu0 0.0
    %2087 = vmatprep.subr.mxu0 0.0
    %2088 = vmatpush2.msra.mxu0 0.0
    %2089 = vmatprep.subr.mxu0 0.0
    %2090 = vmatpush2.msra.mxu0 0.0
    %2091 = vmatprep.subr.mxu0 0.0
    %2092 = vmatpush2.msra.mxu0 0.0
    %2093 = vmatprep.subr.mxu0 0.0
    %2094 = vmatpush2.msra.mxu0 0.0
    %2095 = vmatprep.subr.mxu0 0.0
    %2096 = vmatpush2.msra.mxu0 0.0
    %2097 = vmatprep.subr.mxu0 0.0
    %2098 = vmatpush2.msra.mxu0 0.0
    %2099 = vmatprep.subr.mxu0 0.0
    %2100 = vmatpush2.msra.mxu0 0.0
    %2101 = vmatprep.subr.mxu0 0.0
    %2102 = vmatpush2.msra.mxu0 0.0
    %2103 = vmatprep.subr.mxu0 0.0
    %2104 = vmatpush2.msra.mxu0 0.0
    %2105 = vmatprep.mubr.f32.mxu0 0.0
    %v2106 = vand.u32 %v1598, 4294901760
    %2107 = vmatmul.mubr.f32.gmra.mxu0 %v2106
    %v2108 = vpop.f32.mrf.mxu0
    %v2109 = vadd.f32 %v2002, %v2108
    %v2110 = vpop.f32.mrf.mxu0
    %2111 = vmatprep.mubr.f32.mxu0 0.0
    %v2112 = vand.u32 %v1601, 4294901760
    %2113 = vmatmul.mubr.f32.gmra.mxu0 %v2112
    %v2114 = vpop.f32.mrf.mxu0
    %v2115 = vadd.f32 %v2010, %v2114
    %v2116 = vpop.f32.mrf.mxu0
    %2117 = vmatprep.mubr.f32.mxu0 0.0
    %v2118 = vand.u32 %v1604, 4294901760
    %2119 = vmatmul.mubr.f32.gmra.mxu0 %v2118
    %v2120 = vpop.f32.mrf.mxu0
    %v2121 = vadd.f32 %v2018, %v2120
    %v2122 = vpop.f32.mrf.mxu0
    %2123 = vmatprep.mubr.f32.mxu0 0.0
    %v2124 = vand.u32 %v1607, 4294901760
    %2125 = vmatmul.mubr.f32.gmra.mxu0 %v2124
    %v2126 = vpop.f32.mrf.mxu0
    %v2127 = vadd.f32 %v2026, %v2126
    %v2128 = vpop.f32.mrf.mxu0
    %2129 = vdwg.mxu0
    %2130 = vmatprep.subr.mxu0 0.0
    %2131 = vmatpush1.msra.mxu0 0.0
    %2132 = vmatprep.subr.mxu0 0.0
    %2133 = vmatpush1.msra.mxu0 0.0
    %2134 = vmatprep.subr.mxu0 0.0
    %2135 = vmatpush1.msra.mxu0 0.0
    %2136 = vmatprep.subr.mxu0 0.0
    %2137 = vmatpush1.msra.mxu0 0.0
    %2138 = vmatprep.subr.mxu0 0.0
    %2139 = vmatpush1.msra.mxu0 0.0
    %2140 = vmatprep.subr.mxu0 0.0
    %2141 = vmatpush1.msra.mxu0 0.0
    %2142 = vmatprep.subr.mxu0 0.0
    %2143 = vmatpush1.msra.mxu0 0.0
    %2144 = vmatprep.subr.mxu0 0.0
    %2145 = vmatpush1.msra.mxu0 0.0
    %2146 = vmatprep.subr.mxu0 0.0
    %2147 = vmatpush1.msra.mxu0 0.0
    %2148 = vmatprep.subr.mxu0 0.0
    %2149 = vmatpush1.msra.mxu0 0.0
    %2150 = vmatprep.subr.mxu0 0.0
    %2151 = vmatpush1.msra.mxu0 0.0
    %2152 = vmatprep.subr.mxu0 0.0
    %2153 = vmatpush1.msra.mxu0 0.0
    %2154 = vmatprep.subr.mxu0 0.0
    %v2155 = vand.u32 %v1566, 4294901760
    %2156 = vmatpush1.msra.mxu0 %v2155
    %2157 = vmatprep.subr.mxu0 0.0
    %v2158 = vand.u32 %v1565, 4294901760
    %2159 = vmatpush1.msra.mxu0 %v2158
    %2160 = vmatprep.subr.mxu0 0.0
    %v2161 = vand.u32 %v1564, 4294901760
    %2162 = vmatpush1.msra.mxu0 %v2161
    %2163 = vmatprep.subr.mxu0 0.0
    %v2164 = vand.u32 %v1563, 4294901760
    %2165 = vmatpush1.msra.mxu0 %v2164
    %2166 = vmatprep.subr.mxu0 0.0
    %2167 = vmatpush2.msra.mxu0 0.0
    %2168 = vmatprep.subr.mxu0 0.0
    %2169 = vmatpush2.msra.mxu0 0.0
    %2170 = vmatprep.subr.mxu0 0.0
    %2171 = vmatpush2.msra.mxu0 0.0
    %2172 = vmatprep.subr.mxu0 0.0
    %2173 = vmatpush2.msra.mxu0 0.0
    %2174 = vmatprep.subr.mxu0 0.0
    %2175 = vmatpush2.msra.mxu0 0.0
    %2176 = vmatprep.subr.mxu0 0.0
    %2177 = vmatpush2.msra.mxu0 0.0
    %2178 = vmatprep.subr.mxu0 0.0
    %2179 = vmatpush2.msra.mxu0 0.0
    %2180 = vmatprep.subr.mxu0 0.0
    %2181 = vmatpush2.msra.mxu0 0.0
    %2182 = vmatprep.subr.mxu0 0.0
    %2183 = vmatpush2.msra.mxu0 0.0
    %2184 = vmatprep.subr.mxu0 0.0
    %2185 = vmatpush2.msra.mxu0 0.0
    %2186 = vmatprep.subr.mxu0 0.0
    %2187 = vmatpush2.msra.mxu0 0.0
    %2188 = vmatprep.subr.mxu0 0.0
    %2189 = vmatpush2.msra.mxu0 0.0
    %2190 = vmatprep.subr.mxu0 0.0
    %2191 = vmatpush2.msra.mxu0 0.0
    %2192 = vmatprep.subr.mxu0 0.0
    %2193 = vmatpush2.msra.mxu0 0.0
    %2194 = vmatprep.subr.mxu0 0.0
    %2195 = vmatpush2.msra.mxu0 0.0
    %2196 = vmatprep.subr.mxu0 0.0
    %2197 = vmatpush2.msra.mxu0 0.0
    %2198 = vmatprep.mubr.f32.mxu0 0.0
    %v2199 = vand.u32 %v1598, 4294901760
    %2200 = vmatmul.mubr.f32.gmra.mxu0 %v2199
    %v2201 = vpop.f32.mrf.mxu0
    %v2202 = vadd.f32 %v2109, %v2201
    %v2203 = vpop.f32.mrf.mxu0
    %2204 = vmatprep.mubr.f32.mxu0 0.0
    %v2205 = vand.u32 %v1601, 4294901760
    %2206 = vmatmul.mubr.f32.gmra.mxu0 %v2205
    %v2207 = vpop.f32.mrf.mxu0
    %v2208 = vadd.f32 %v2115, %v2207
    %v2209 = vpop.f32.mrf.mxu0
    %2210 = vmatprep.mubr.f32.mxu0 0.0
    %v2211 = vand.u32 %v1604, 4294901760
    %2212 = vmatmul.mubr.f32.gmra.mxu0 %v2211
    %v2213 = vpop.f32.mrf.mxu0
    %v2214 = vadd.f32 %v2121, %v2213
    %v2215 = vpop.f32.mrf.mxu0
    %2216 = vmatprep.mubr.f32.mxu0 0.0
    %v2217 = vand.u32 %v1607, 4294901760
    %2218 = vmatmul.mubr.f32.gmra.mxu0 %v2217
    %v2219 = vpop.f32.mrf.mxu0
    %v2220 = vadd.f32 %v2127, %v2219
    %v2221 = vpop.f32.mrf.mxu0
    %2222 = vdwg.mxu0
    %v2223 = vtanh.pop %v2202
    %v2224 = vtanh.pop %v2208
    %v2225 = vtanh.pop %v2214
    %v2226 = vtanh.pop %v2220
    %s2227 = scalar_lea.vmem %s3, 64
    %v2228 = vld [vmem:[%s2227] sm:$0xff]
    %v2229 = vld [vmem:[%s2227 + $0x8] sm:$0xff]
    %v2230 = vld [vmem:[%s2227 + $0x10] sm:$0xff]
    %v2231 = vld [vmem:[%s2227 + $0x18] sm:$0xff]
    %s2232 = scalar_lea.vmem %s4, 64
    %v2233 = vld [vmem:[%s2232] sm:$0xff]
    %v2234 = vld [vmem:[%s2232 + $0x8] sm:$0xff]
    %v2235 = vld [vmem:[%s2232 + $0x10] sm:$0xff]
    %v2236 = vld [vmem:[%s2232 + $0x18] sm:$0xff]
    %2238 = vset.pattern.permute.xlu0 0
    %2239 = vperm.xlu0 %2238, %v2233
    %v2240 = vpop.permute.xlu0 %2239
    %2243 = vset.pattern.permute.xlu0 0
    %2244 = vperm.xlu0 %2243, %v2234
    %v2245 = vpop.permute.xlu0 %2244
    %2248 = vset.pattern.permute.xlu0 0
    %2249 = vperm.xlu0 %2248, %v2235
    %v2250 = vpop.permute.xlu0 %2249
    %2253 = vset.pattern.permute.xlu0 0
    %2254 = vperm.xlu0 %2253, %v2236
    %v2255 = vpop.permute.xlu0 %2254
    %v2258 = vsel %vm936, %v2228, 0
    %v2261 = vsel %vm936, %v2229, 0
    %v2264 = vsel %vm936, %v2230, 0
    %v2267 = vsel %vm936, %v2231, 0
    %2269 = vmatprep.subr.mxu0 0.0
    %2270 = vmatpush1.msra.mxu0 0.0
    %2271 = vmatprep.subr.mxu0 0.0
    %2272 = vmatpush1.msra.mxu0 0.0
    %2273 = vmatprep.subr.mxu0 0.0
    %2274 = vmatpush1.msra.mxu0 0.0
    %2275 = vmatprep.subr.mxu0 0.0
    %2276 = vmatpush1.msra.mxu0 0.0
    %2277 = vmatprep.subr.mxu0 0.0
    %2278 = vmatpush1.msra.mxu0 0.0
    %2279 = vmatprep.subr.mxu0 0.0
    %2280 = vmatpush1.msra.mxu0 0.0
    %2281 = vmatprep.subr.mxu0 0.0
    %2282 = vmatpush1.msra.mxu0 0.0
    %2283 = vmatprep.subr.mxu0 0.0
    %2284 = vmatpush1.msra.mxu0 0.0
    %2285 = vmatprep.subr.mxu0 0.0
    %2286 = vmatpush1.msra.mxu0 0.0
    %2287 = vmatprep.subr.mxu0 0.0
    %2288 = vmatpush1.msra.mxu0 0.0
    %2289 = vmatprep.subr.mxu0 0.0
    %2290 = vmatpush1.msra.mxu0 0.0
    %2291 = vmatprep.subr.mxu0 0.0
    %2292 = vmatpush1.msra.mxu0 0.0
    %2293 = vmatprep.subr.mxu0 0.0
    %v2294 = vand.u32 %v2226, 4294901760
    %2295 = vmatpush1.msra.mxu0 %v2294
    %2296 = vmatprep.subr.mxu0 0.0
    %v2297 = vand.u32 %v2225, 4294901760
    %2298 = vmatpush1.msra.mxu0 %v2297
    %2299 = vmatprep.subr.mxu0 0.0
    %v2300 = vand.u32 %v2224, 4294901760
    %2301 = vmatpush1.msra.mxu0 %v2300
    %2302 = vmatprep.subr.mxu0 0.0
    %v2303 = vand.u32 %v2223, 4294901760
    %2304 = vmatpush1.msra.mxu0 %v2303
    %2305 = vmatprep.subr.mxu0 0.0
    %2306 = vmatpush2.msra.mxu0 0.0
    %2307 = vmatprep.subr.mxu0 0.0
    %2308 = vmatpush2.msra.mxu0 0.0
    %2309 = vmatprep.subr.mxu0 0.0
    %2310 = vmatpush2.msra.mxu0 0.0
    %2311 = vmatprep.subr.mxu0 0.0
    %2312 = vmatpush2.msra.mxu0 0.0
    %2313 = vmatprep.subr.mxu0 0.0
    %2314 = vmatpush2.msra.mxu0 0.0
    %2315 = vmatprep.subr.mxu0 0.0
    %2316 = vmatpush2.msra.mxu0 0.0
    %2317 = vmatprep.subr.mxu0 0.0
    %2318 = vmatpush2.msra.mxu0 0.0
    %2319 = vmatprep.subr.mxu0 0.0
    %2320 = vmatpush2.msra.mxu0 0.0
    %2321 = vmatprep.subr.mxu0 0.0
    %2322 = vmatpush2.msra.mxu0 0.0
    %2323 = vmatprep.subr.mxu0 0.0
    %2324 = vmatpush2.msra.mxu0 0.0
    %2325 = vmatprep.subr.mxu0 0.0
    %2326 = vmatpush2.msra.mxu0 0.0
    %2327 = vmatprep.subr.mxu0 0.0
    %2328 = vmatpush2.msra.mxu0 0.0
    %2329 = vmatprep.subr.mxu0 0.0
    %2330 = vmatpush2.msra.mxu0 0.0
    %2331 = vmatprep.subr.mxu0 0.0
    %2332 = vmatpush2.msra.mxu0 0.0
    %2333 = vmatprep.subr.mxu0 0.0
    %2334 = vmatpush2.msra.mxu0 0.0
    %2335 = vmatprep.subr.mxu0 0.0
    %2336 = vmatpush2.msra.mxu0 0.0
    %2337 = vmatprep.mubr.f32.mxu0 0.0
    %v2338 = vand.u32 %v2258, 4294901760
    %v2339 = vsub.f32 %v2258, %v2338
    %v2340 = vand.u32 %v2339, 4294901760
    %v2341 = vsub.f32 %v2339, %v2340
    %v2342 = vand.u32 %v2341, 4294901760
    %2343 = vmatmul.mubr.f32.gmra.mxu0 %v2342
    %v2344 = vpop.f32.mrf.mxu0
    %v2345 = vadd.f32 %v2240, %v2344
    %v2346 = vpop.f32.mrf.mxu0
    %2347 = vmatprep.mubr.f32.mxu0 0.0
    %v2348 = vand.u32 %v2261, 4294901760
    %v2349 = vsub.f32 %v2261, %v2348
    %v2350 = vand.u32 %v2349, 4294901760
    %v2351 = vsub.f32 %v2349, %v2350
    %v2352 = vand.u32 %v2351, 4294901760
    %2353 = vmatmul.mubr.f32.gmra.mxu0 %v2352
    %v2354 = vpop.f32.mrf.mxu0
    %v2355 = vadd.f32 %v2245, %v2354
    %v2356 = vpop.f32.mrf.mxu0
    %2357 = vmatprep.mubr.f32.mxu0 0.0
    %v2358 = vand.u32 %v2264, 4294901760
    %v2359 = vsub.f32 %v2264, %v2358
    %v2360 = vand.u32 %v2359, 4294901760
    %v2361 = vsub.f32 %v2359, %v2360
    %v2362 = vand.u32 %v2361, 4294901760
    %2363 = vmatmul.mubr.f32.gmra.mxu0 %v2362
    %v2364 = vpop.f32.mrf.mxu0
    %v2365 = vadd.f32 %v2250, %v2364
    %v2366 = vpop.f32.mrf.mxu0
    %2367 = vmatprep.mubr.f32.mxu0 0.0
    %v2368 = vand.u32 %v2267, 4294901760
    %v2369 = vsub.f32 %v2267, %v2368
    %v2370 = vand.u32 %v2369, 4294901760
    %v2371 = vsub.f32 %v2369, %v2370
    %v2372 = vand.u32 %v2371, 4294901760
    %2373 = vmatmul.mubr.f32.gmra.mxu0 %v2372
    %v2374 = vpop.f32.mrf.mxu0
    %v2375 = vadd.f32 %v2255, %v2374
    %v2376 = vpop.f32.mrf.mxu0
    %2377 = vdwg.mxu0
    %2378 = vmatprep.subr.mxu0 0.0
    %2379 = vmatpush1.msra.mxu0 0.0
    %2380 = vmatprep.subr.mxu0 0.0
    %2381 = vmatpush1.msra.mxu0 0.0
    %2382 = vmatprep.subr.mxu0 0.0
    %2383 = vmatpush1.msra.mxu0 0.0
    %2384 = vmatprep.subr.mxu0 0.0
    %2385 = vmatpush1.msra.mxu0 0.0
    %2386 = vmatprep.subr.mxu0 0.0
    %2387 = vmatpush1.msra.mxu0 0.0
    %2388 = vmatprep.subr.mxu0 0.0
    %2389 = vmatpush1.msra.mxu0 0.0
    %2390 = vmatprep.subr.mxu0 0.0
    %2391 = vmatpush1.msra.mxu0 0.0
    %2392 = vmatprep.subr.mxu0 0.0
    %2393 = vmatpush1.msra.mxu0 0.0
    %2394 = vmatprep.subr.mxu0 0.0
    %2395 = vmatpush1.msra.mxu0 0.0
    %2396 = vmatprep.subr.mxu0 0.0
    %2397 = vmatpush1.msra.mxu0 0.0
    %2398 = vmatprep.subr.mxu0 0.0
    %2399 = vmatpush1.msra.mxu0 0.0
    %2400 = vmatprep.subr.mxu0 0.0
    %2401 = vmatpush1.msra.mxu0 0.0
    %2402 = vmatprep.subr.mxu0 0.0
    %v2403 = vand.u32 %v2226, 4294901760
    %v2404 = vsub.f32 %v2226, %v2403
    %v2405 = vand.u32 %v2404, 4294901760
    %v2406 = vsub.f32 %v2404, %v2405
    %v2407 = vand.u32 %v2406, 4294901760
    %2408 = vmatpush1.msra.mxu0 %v2407
    %2409 = vmatprep.subr.mxu0 0.0
    %v2410 = vand.u32 %v2225, 4294901760
    %v2411 = vsub.f32 %v2225, %v2410
    %v2412 = vand.u32 %v2411, 4294901760
    %v2413 = vsub.f32 %v2411, %v2412
    %v2414 = vand.u32 %v2413, 4294901760
    %2415 = vmatpush1.msra.mxu0 %v2414
    %2416 = vmatprep.subr.mxu0 0.0
    %v2417 = vand.u32 %v2224, 4294901760
    %v2418 = vsub.f32 %v2224, %v2417
    %v2419 = vand.u32 %v2418, 4294901760
    %v2420 = vsub.f32 %v2418, %v2419
    %v2421 = vand.u32 %v2420, 4294901760
    %2422 = vmatpush1.msra.mxu0 %v2421
    %2423 = vmatprep.subr.mxu0 0.0
    %v2424 = vand.u32 %v2223, 4294901760
    %v2425 = vsub.f32 %v2223, %v2424
    %v2426 = vand.u32 %v2425, 4294901760
    %v2427 = vsub.f32 %v2425, %v2426
    %v2428 = vand.u32 %v2427, 4294901760
    %2429 = vmatpush1.msra.mxu0 %v2428
    %2430 = vmatprep.subr.mxu0 0.0
    %2431 = vmatpush2.msra.mxu0 0.0
    %2432 = vmatprep.subr.mxu0 0.0
    %2433 = vmatpush2.msra.mxu0 0.0
    %2434 = vmatprep.subr.mxu0 0.0
    %2435 = vmatpush2.msra.mxu0 0.0
    %2436 = vmatprep.subr.mxu0 0.0
    %2437 = vmatpush2.msra.mxu0 0.0
    %2438 = vmatprep.subr.mxu0 0.0
    %2439 = vmatpush2.msra.mxu0 0.0
    %2440 = vmatprep.subr.mxu0 0.0
    %2441 = vmatpush2.msra.mxu0 0.0
    %2442 = vmatprep.subr.mxu0 0.0
    %2443 = vmatpush2.msra.mxu0 0.0
    %2444 = vmatprep.subr.mxu0 0.0
    %2445 = vmatpush2.msra.mxu0 0.0
    %2446 = vmatprep.subr.mxu0 0.0
    %2447 = vmatpush2.msra.mxu0 0.0
    %2448 = vmatprep.subr.mxu0 0.0
    %2449 = vmatpush2.msra.mxu0 0.0
    %2450 = vmatprep.subr.mxu0 0.0
    %2451 = vmatpush2.msra.mxu0 0.0
    %2452 = vmatprep.subr.mxu0 0.0
    %2453 = vmatpush2.msra.mxu0 0.0
    %2454 = vmatprep.subr.mxu0 0.0
    %2455 = vmatpush2.msra.mxu0 0.0
    %2456 = vmatprep.subr.mxu0 0.0
    %2457 = vmatpush2.msra.mxu0 0.0
    %2458 = vmatprep.subr.mxu0 0.0
    %2459 = vmatpush2.msra.mxu0 0.0
    %2460 = vmatprep.subr.mxu0 0.0
    %2461 = vmatpush2.msra.mxu0 0.0
    %2462 = vmatprep.mubr.f32.mxu0 0.0
    %v2463 = vand.u32 %v2258, 4294901760
    %2464 = vmatmul.mubr.f32.gmra.mxu0 %v2463
    %v2465 = vpop.f32.mrf.mxu0
    %v2466 = vadd.f32 %v2345, %v2465
    %v2467 = vpop.f32.mrf.mxu0
    %2468 = vmatprep.mubr.f32.mxu0 0.0
    %v2469 = vand.u32 %v2261, 4294901760
    %2470 = vmatmul.mubr.f32.gmra.mxu0 %v2469
    %v2471 = vpop.f32.mrf.mxu0
    %v2472 = vadd.f32 %v2355, %v2471
    %v2473 = vpop.f32.mrf.mxu0
    %2474 = vmatprep.mubr.f32.mxu0 0.0
    %v2475 = vand.u32 %v2264, 4294901760
    %2476 = vmatmul.mubr.f32.gmra.mxu0 %v2475
    %v2477 = vpop.f32.mrf.mxu0
    %v2478 = vadd.f32 %v2365, %v2477
    %v2479 = vpop.f32.mrf.mxu0
    %2480 = vmatprep.mubr.f32.mxu0 0.0
    %v2481 = vand.u32 %v2267, 4294901760
    %2482 = vmatmul.mubr.f32.gmra.mxu0 %v2481
    %v2483 = vpop.f32.mrf.mxu0
    %v2484 = vadd.f32 %v2375, %v2483
    %v2485 = vpop.f32.mrf.mxu0
    %2486 = vdwg.mxu0
    %2487 = vmatprep.subr.mxu0 0.0
    %2488 = vmatpush1.msra.mxu0 0.0
    %2489 = vmatprep.subr.mxu0 0.0
    %2490 = vmatpush1.msra.mxu0 0.0
    %2491 = vmatprep.subr.mxu0 0.0
    %2492 = vmatpush1.msra.mxu0 0.0
    %2493 = vmatprep.subr.mxu0 0.0
    %2494 = vmatpush1.msra.mxu0 0.0
    %2495 = vmatprep.subr.mxu0 0.0
    %2496 = vmatpush1.msra.mxu0 0.0
    %2497 = vmatprep.subr.mxu0 0.0
    %2498 = vmatpush1.msra.mxu0 0.0
    %2499 = vmatprep.subr.mxu0 0.0
    %2500 = vmatpush1.msra.mxu0 0.0
    %2501 = vmatprep.subr.mxu0 0.0
    %2502 = vmatpush1.msra.mxu0 0.0
    %2503 = vmatprep.subr.mxu0 0.0
    %2504 = vmatpush1.msra.mxu0 0.0
    %2505 = vmatprep.subr.mxu0 0.0
    %2506 = vmatpush1.msra.mxu0 0.0
    %2507 = vmatprep.subr.mxu0 0.0
    %2508 = vmatpush1.msra.mxu0 0.0
    %2509 = vmatprep.subr.mxu0 0.0
    %2510 = vmatpush1.msra.mxu0 0.0
    %2511 = vmatprep.subr.mxu0 0.0
    %v2512 = vand.u32 %v2226, 4294901760
    %v2513 = vsub.f32 %v2226, %v2512
    %2514 = vmatpush1.msra.mxu0 %v2513
    %2515 = vmatprep.subr.mxu0 0.0
    %v2516 = vand.u32 %v2225, 4294901760
    %v2517 = vsub.f32 %v2225, %v2516
    %2518 = vmatpush1.msra.mxu0 %v2517
    %2519 = vmatprep.subr.mxu0 0.0
    %v2520 = vand.u32 %v2224, 4294901760
    %v2521 = vsub.f32 %v2224, %v2520
    %2522 = vmatpush1.msra.mxu0 %v2521
    %2523 = vmatprep.subr.mxu0 0.0
    %v2524 = vand.u32 %v2223, 4294901760
    %v2525 = vsub.f32 %v2223, %v2524
    %2526 = vmatpush1.msra.mxu0 %v2525
    %2527 = vmatprep.subr.mxu0 0.0
    %2528 = vmatpush2.msra.mxu0 0.0
    %2529 = vmatprep.subr.mxu0 0.0
    %2530 = vmatpush2.msra.mxu0 0.0
    %2531 = vmatprep.subr.mxu0 0.0
    %2532 = vmatpush2.msra.mxu0 0.0
    %2533 = vmatprep.subr.mxu0 0.0
    %2534 = vmatpush2.msra.mxu0 0.0
    %2535 = vmatprep.subr.mxu0 0.0
    %2536 = vmatpush2.msra.mxu0 0.0
    %2537 = vmatprep.subr.mxu0 0.0
    %2538 = vmatpush2.msra.mxu0 0.0
    %2539 = vmatprep.subr.mxu0 0.0
    %2540 = vmatpush2.msra.mxu0 0.0
    %2541 = vmatprep.subr.mxu0 0.0
    %2542 = vmatpush2.msra.mxu0 0.0
    %2543 = vmatprep.subr.mxu0 0.0
    %2544 = vmatpush2.msra.mxu0 0.0
    %2545 = vmatprep.subr.mxu0 0.0
    %2546 = vmatpush2.msra.mxu0 0.0
    %2547 = vmatprep.subr.mxu0 0.0
    %2548 = vmatpush2.msra.mxu0 0.0
    %2549 = vmatprep.subr.mxu0 0.0
    %2550 = vmatpush2.msra.mxu0 0.0
    %2551 = vmatprep.subr.mxu0 0.0
    %2552 = vmatpush2.msra.mxu0 0.0
    %2553 = vmatprep.subr.mxu0 0.0
    %2554 = vmatpush2.msra.mxu0 0.0
    %2555 = vmatprep.subr.mxu0 0.0
    %2556 = vmatpush2.msra.mxu0 0.0
    %2557 = vmatprep.subr.mxu0 0.0
    %2558 = vmatpush2.msra.mxu0 0.0
    %2559 = vmatprep.mubr.f32.mxu0 0.0
    %v2560 = vand.u32 %v2258, 4294901760
    %v2561 = vsub.f32 %v2258, %v2560
    %2562 = vmatmul.mubr.f32.gmra.mxu0 %v2561
    %v2563 = vpop.f32.mrf.mxu0
    %v2564 = vadd.f32 %v2466, %v2563
    %v2565 = vpop.f32.mrf.mxu0
    %2566 = vmatprep.mubr.f32.mxu0 0.0
    %v2567 = vand.u32 %v2261, 4294901760
    %v2568 = vsub.f32 %v2261, %v2567
    %2569 = vmatmul.mubr.f32.gmra.mxu0 %v2568
    %v2570 = vpop.f32.mrf.mxu0
    %v2571 = vadd.f32 %v2472, %v2570
    %v2572 = vpop.f32.mrf.mxu0
    %2573 = vmatprep.mubr.f32.mxu0 0.0
    %v2574 = vand.u32 %v2264, 4294901760
    %v2575 = vsub.f32 %v2264, %v2574
    %2576 = vmatmul.mubr.f32.gmra.mxu0 %v2575
    %v2577 = vpop.f32.mrf.mxu0
    %v2578 = vadd.f32 %v2478, %v2577
    %v2579 = vpop.f32.mrf.mxu0
    %2580 = vmatprep.mubr.f32.mxu0 0.0
    %v2581 = vand.u32 %v2267, 4294901760
    %v2582 = vsub.f32 %v2267, %v2581
    %2583 = vmatmul.mubr.f32.gmra.mxu0 %v2582
    %v2584 = vpop.f32.mrf.mxu0
    %v2585 = vadd.f32 %v2484, %v2584
    %v2586 = vpop.f32.mrf.mxu0
    %2587 = vdwg.mxu0
    %2588 = vmatprep.subr.mxu0 0.0
    %2589 = vmatpush1.msra.mxu0 0.0
    %2590 = vmatprep.subr.mxu0 0.0
    %2591 = vmatpush1.msra.mxu0 0.0
    %2592 = vmatprep.subr.mxu0 0.0
    %2593 = vmatpush1.msra.mxu0 0.0
    %2594 = vmatprep.subr.mxu0 0.0
    %2595 = vmatpush1.msra.mxu0 0.0
    %2596 = vmatprep.subr.mxu0 0.0
    %2597 = vmatpush1.msra.mxu0 0.0
    %2598 = vmatprep.subr.mxu0 0.0
    %2599 = vmatpush1.msra.mxu0 0.0
    %2600 = vmatprep.subr.mxu0 0.0
    %2601 = vmatpush1.msra.mxu0 0.0
    %2602 = vmatprep.subr.mxu0 0.0
    %2603 = vmatpush1.msra.mxu0 0.0
    %2604 = vmatprep.subr.mxu0 0.0
    %2605 = vmatpush1.msra.mxu0 0.0
    %2606 = vmatprep.subr.mxu0 0.0
    %2607 = vmatpush1.msra.mxu0 0.0
    %2608 = vmatprep.subr.mxu0 0.0
    %2609 = vmatpush1.msra.mxu0 0.0
    %2610 = vmatprep.subr.mxu0 0.0
    %2611 = vmatpush1.msra.mxu0 0.0
    %2612 = vmatprep.subr.mxu0 0.0
    %v2613 = vand.u32 %v2226, 4294901760
    %2614 = vmatpush1.msra.mxu0 %v2613
    %2615 = vmatprep.subr.mxu0 0.0
    %v2616 = vand.u32 %v2225, 4294901760
    %2617 = vmatpush1.msra.mxu0 %v2616
    %2618 = vmatprep.subr.mxu0 0.0
    %v2619 = vand.u32 %v2224, 4294901760
    %2620 = vmatpush1.msra.mxu0 %v2619
    %2621 = vmatprep.subr.mxu0 0.0
    %v2622 = vand.u32 %v2223, 4294901760
    %2623 = vmatpush1.msra.mxu0 %v2622
    %2624 = vmatprep.subr.mxu0 0.0
    %2625 = vmatpush2.msra.mxu0 0.0
    %2626 = vmatprep.subr.mxu0 0.0
    %2627 = vmatpush2.msra.mxu0 0.0
    %2628 = vmatprep.subr.mxu0 0.0
    %2629 = vmatpush2.msra.mxu0 0.0
    %2630 = vmatprep.subr.mxu0 0.0
    %2631 = vmatpush2.msra.mxu0 0.0
    %2632 = vmatprep.subr.mxu0 0.0
    %2633 = vmatpush2.msra.mxu0 0.0
    %2634 = vmatprep.subr.mxu0 0.0
    %2635 = vmatpush2.msra.mxu0 0.0
    %2636 = vmatprep.subr.mxu0 0.0
    %2637 = vmatpush2.msra.mxu0 0.0
    %2638 = vmatprep.subr.mxu0 0.0
    %2639 = vmatpush2.msra.mxu0 0.0
    %2640 = vmatprep.subr.mxu0 0.0
    %2641 = vmatpush2.msra.mxu0 0.0
    %2642 = vmatprep.subr.mxu0 0.0
    %2643 = vmatpush2.msra.mxu0 0.0
    %2644 = vmatprep.subr.mxu0 0.0
    %2645 = vmatpush2.msra.mxu0 0.0
    %2646 = vmatprep.subr.mxu0 0.0
    %2647 = vmatpush2.msra.mxu0 0.0
    %2648 = vmatprep.subr.mxu0 0.0
    %2649 = vmatpush2.msra.mxu0 0.0
    %2650 = vmatprep.subr.mxu0 0.0
    %2651 = vmatpush2.msra.mxu0 0.0
    %2652 = vmatprep.subr.mxu0 0.0
    %2653 = vmatpush2.msra.mxu0 0.0
    %2654 = vmatprep.subr.mxu0 0.0
    %2655 = vmatpush2.msra.mxu0 0.0
    %2656 = vmatprep.mubr.f32.mxu0 0.0
    %v2657 = vand.u32 %v2258, 4294901760
    %v2658 = vsub.f32 %v2258, %v2657
    %v2659 = vand.u32 %v2658, 4294901760
    %2660 = vmatmul.mubr.f32.gmra.mxu0 %v2659
    %v2661 = vpop.f32.mrf.mxu0
    %v2662 = vadd.f32 %v2564, %v2661
    %v2663 = vpop.f32.mrf.mxu0
    %2664 = vmatprep.mubr.f32.mxu0 0.0
    %v2665 = vand.u32 %v2261, 4294901760
    %v2666 = vsub.f32 %v2261, %v2665
    %v2667 = vand.u32 %v2666, 4294901760
    %2668 = vmatmul.mubr.f32.gmra.mxu0 %v2667
    %v2669 = vpop.f32.mrf.mxu0
    %v2670 = vadd.f32 %v2571, %v2669
    %v2671 = vpop.f32.mrf.mxu0
    %2672 = vmatprep.mubr.f32.mxu0 0.0
    %v2673 = vand.u32 %v2264, 4294901760
    %v2674 = vsub.f32 %v2264, %v2673
    %v2675 = vand.u32 %v2674, 4294901760
    %2676 = vmatmul.mubr.f32.gmra.mxu0 %v2675
    %v2677 = vpop.f32.mrf.mxu0
    %v2678 = vadd.f32 %v2578, %v2677
    %v2679 = vpop.f32.mrf.mxu0
    %2680 = vmatprep.mubr.f32.mxu0 0.0
    %v2681 = vand.u32 %v2267, 4294901760
    %v2682 = vsub.f32 %v2267, %v2681
    %v2683 = vand.u32 %v2682, 4294901760
    %2684 = vmatmul.mubr.f32.gmra.mxu0 %v2683
    %v2685 = vpop.f32.mrf.mxu0
    %v2686 = vadd.f32 %v2585, %v2685
    %v2687 = vpop.f32.mrf.mxu0
    %2688 = vdwg.mxu0
    %2689 = vmatprep.subr.mxu0 0.0
    %2690 = vmatpush1.msra.mxu0 0.0
    %2691 = vmatprep.subr.mxu0 0.0
    %2692 = vmatpush1.msra.mxu0 0.0
    %2693 = vmatprep.subr.mxu0 0.0
    %2694 = vmatpush1.msra.mxu0 0.0
    %2695 = vmatprep.subr.mxu0 0.0
    %2696 = vmatpush1.msra.mxu0 0.0
    %2697 = vmatprep.subr.mxu0 0.0
    %2698 = vmatpush1.msra.mxu0 0.0
    %2699 = vmatprep.subr.mxu0 0.0
    %2700 = vmatpush1.msra.mxu0 0.0
    %2701 = vmatprep.subr.mxu0 0.0
    %2702 = vmatpush1.msra.mxu0 0.0
    %2703 = vmatprep.subr.mxu0 0.0
    %2704 = vmatpush1.msra.mxu0 0.0
    %2705 = vmatprep.subr.mxu0 0.0
    %2706 = vmatpush1.msra.mxu0 0.0
    %2707 = vmatprep.subr.mxu0 0.0
    %2708 = vmatpush1.msra.mxu0 0.0
    %2709 = vmatprep.subr.mxu0 0.0
    %2710 = vmatpush1.msra.mxu0 0.0
    %2711 = vmatprep.subr.mxu0 0.0
    %2712 = vmatpush1.msra.mxu0 0.0
    %2713 = vmatprep.subr.mxu0 0.0
    %v2714 = vand.u32 %v2226, 4294901760
    %v2715 = vsub.f32 %v2226, %v2714
    %v2716 = vand.u32 %v2715, 4294901760
    %2717 = vmatpush1.msra.mxu0 %v2716
    %2718 = vmatprep.subr.mxu0 0.0
    %v2719 = vand.u32 %v2225, 4294901760
    %v2720 = vsub.f32 %v2225, %v2719
    %v2721 = vand.u32 %v2720, 4294901760
    %2722 = vmatpush1.msra.mxu0 %v2721
    %2723 = vmatprep.subr.mxu0 0.0
    %v2724 = vand.u32 %v2224, 4294901760
    %v2725 = vsub.f32 %v2224, %v2724
    %v2726 = vand.u32 %v2725, 4294901760
    %2727 = vmatpush1.msra.mxu0 %v2726
    %2728 = vmatprep.subr.mxu0 0.0
    %v2729 = vand.u32 %v2223, 4294901760
    %v2730 = vsub.f32 %v2223, %v2729
    %v2731 = vand.u32 %v2730, 4294901760
    %2732 = vmatpush1.msra.mxu0 %v2731
    %2733 = vmatprep.subr.mxu0 0.0
    %2734 = vmatpush2.msra.mxu0 0.0
    %2735 = vmatprep.subr.mxu0 0.0
    %2736 = vmatpush2.msra.mxu0 0.0
    %2737 = vmatprep.subr.mxu0 0.0
    %2738 = vmatpush2.msra.mxu0 0.0
    %2739 = vmatprep.subr.mxu0 0.0
    %2740 = vmatpush2.msra.mxu0 0.0
    %2741 = vmatprep.subr.mxu0 0.0
    %2742 = vmatpush2.msra.mxu0 0.0
    %2743 = vmatprep.subr.mxu0 0.0
    %2744 = vmatpush2.msra.mxu0 0.0
    %2745 = vmatprep.subr.mxu0 0.0
    %2746 = vmatpush2.msra.mxu0 0.0
    %2747 = vmatprep.subr.mxu0 0.0
    %2748 = vmatpush2.msra.mxu0 0.0
    %2749 = vmatprep.subr.mxu0 0.0
    %2750 = vmatpush2.msra.mxu0 0.0
    %2751 = vmatprep.subr.mxu0 0.0
    %2752 = vmatpush2.msra.mxu0 0.0
    %2753 = vmatprep.subr.mxu0 0.0
    %2754 = vmatpush2.msra.mxu0 0.0
    %2755 = vmatprep.subr.mxu0 0.0
    %2756 = vmatpush2.msra.mxu0 0.0
    %2757 = vmatprep.subr.mxu0 0.0
    %2758 = vmatpush2.msra.mxu0 0.0
    %2759 = vmatprep.subr.mxu0 0.0
    %2760 = vmatpush2.msra.mxu0 0.0
    %2761 = vmatprep.subr.mxu0 0.0
    %2762 = vmatpush2.msra.mxu0 0.0
    %2763 = vmatprep.subr.mxu0 0.0
    %2764 = vmatpush2.msra.mxu0 0.0
    %2765 = vmatprep.mubr.f32.mxu0 0.0
    %v2766 = vand.u32 %v2258, 4294901760
    %2767 = vmatmul.mubr.f32.gmra.mxu0 %v2766
    %v2768 = vpop.f32.mrf.mxu0
    %v2769 = vadd.f32 %v2662, %v2768
    %v2770 = vpop.f32.mrf.mxu0
    %2771 = vmatprep.mubr.f32.mxu0 0.0
    %v2772 = vand.u32 %v2261, 4294901760
    %2773 = vmatmul.mubr.f32.gmra.mxu0 %v2772
    %v2774 = vpop.f32.mrf.mxu0
    %v2775 = vadd.f32 %v2670, %v2774
    %v2776 = vpop.f32.mrf.mxu0
    %2777 = vmatprep.mubr.f32.mxu0 0.0
    %v2778 = vand.u32 %v2264, 4294901760
    %2779 = vmatmul.mubr.f32.gmra.mxu0 %v2778
    %v2780 = vpop.f32.mrf.mxu0
    %v2781 = vadd.f32 %v2678, %v2780
    %v2782 = vpop.f32.mrf.mxu0
    %2783 = vmatprep.mubr.f32.mxu0 0.0
    %v2784 = vand.u32 %v2267, 4294901760
    %2785 = vmatmul.mubr.f32.gmra.mxu0 %v2784
    %v2786 = vpop.f32.mrf.mxu0
    %v2787 = vadd.f32 %v2686, %v2786
    %v2788 = vpop.f32.mrf.mxu0
    %2789 = vdwg.mxu0
    %2790 = vmatprep.subr.mxu0 0.0
    %2791 = vmatpush1.msra.mxu0 0.0
    %2792 = vmatprep.subr.mxu0 0.0
    %2793 = vmatpush1.msra.mxu0 0.0
    %2794 = vmatprep.subr.mxu0 0.0
    %2795 = vmatpush1.msra.mxu0 0.0
    %2796 = vmatprep.subr.mxu0 0.0
    %2797 = vmatpush1.msra.mxu0 0.0
    %2798 = vmatprep.subr.mxu0 0.0
    %2799 = vmatpush1.msra.mxu0 0.0
    %2800 = vmatprep.subr.mxu0 0.0
    %2801 = vmatpush1.msra.mxu0 0.0
    %2802 = vmatprep.subr.mxu0 0.0
    %2803 = vmatpush1.msra.mxu0 0.0
    %2804 = vmatprep.subr.mxu0 0.0
    %2805 = vmatpush1.msra.mxu0 0.0
    %2806 = vmatprep.subr.mxu0 0.0
    %2807 = vmatpush1.msra.mxu0 0.0
    %2808 = vmatprep.subr.mxu0 0.0
    %2809 = vmatpush1.msra.mxu0 0.0
    %2810 = vmatprep.subr.mxu0 0.0
    %2811 = vmatpush1.msra.mxu0 0.0
    %2812 = vmatprep.subr.mxu0 0.0
    %2813 = vmatpush1.msra.mxu0 0.0
    %2814 = vmatprep.subr.mxu0 0.0
    %v2815 = vand.u32 %v2226, 4294901760
    %2816 = vmatpush1.msra.mxu0 %v2815
    %2817 = vmatprep.subr.mxu0 0.0
    %v2818 = vand.u32 %v2225, 4294901760
    %2819 = vmatpush1.msra.mxu0 %v2818
    %2820 = vmatprep.subr.mxu0 0.0
    %v2821 = vand.u32 %v2224, 4294901760
    %2822 = vmatpush1.msra.mxu0 %v2821
    %2823 = vmatprep.subr.mxu0 0.0
    %v2824 = vand.u32 %v2223, 4294901760
    %2825 = vmatpush1.msra.mxu0 %v2824
    %2826 = vmatprep.subr.mxu0 0.0
    %2827 = vmatpush2.msra.mxu0 0.0
    %2828 = vmatprep.subr.mxu0 0.0
    %2829 = vmatpush2.msra.mxu0 0.0
    %2830 = vmatprep.subr.mxu0 0.0
    %2831 = vmatpush2.msra.mxu0 0.0
    %2832 = vmatprep.subr.mxu0 0.0
    %2833 = vmatpush2.msra.mxu0 0.0
    %2834 = vmatprep.subr.mxu0 0.0
    %2835 = vmatpush2.msra.mxu0 0.0
    %2836 = vmatprep.subr.mxu0 0.0
    %2837 = vmatpush2.msra.mxu0 0.0
    %2838 = vmatprep.subr.mxu0 0.0
    %2839 = vmatpush2.msra.mxu0 0.0
    %2840 = vmatprep.subr.mxu0 0.0
    %2841 = vmatpush2.msra.mxu0 0.0
    %2842 = vmatprep.subr.mxu0 0.0
    %2843 = vmatpush2.msra.mxu0 0.0
    %2844 = vmatprep.subr.mxu0 0.0
    %2845 = vmatpush2.msra.mxu0 0.0
    %2846 = vmatprep.subr.mxu0 0.0
    %2847 = vmatpush2.msra.mxu0 0.0
    %2848 = vmatprep.subr.mxu0 0.0
    %2849 = vmatpush2.msra.mxu0 0.0
    %2850 = vmatprep.subr.mxu0 0.0
    %2851 = vmatpush2.msra.mxu0 0.0
    %2852 = vmatprep.subr.mxu0 0.0
    %2853 = vmatpush2.msra.mxu0 0.0
    %2854 = vmatprep.subr.mxu0 0.0
    %2855 = vmatpush2.msra.mxu0 0.0
    %2856 = vmatprep.subr.mxu0 0.0
    %2857 = vmatpush2.msra.mxu0 0.0
    %2858 = vmatprep.mubr.f32.mxu0 0.0
    %v2859 = vand.u32 %v2258, 4294901760
    %2860 = vmatmul.mubr.f32.gmra.mxu0 %v2859
    %v2861 = vpop.f32.mrf.mxu0
    %v2862 = vadd.f32 %v2769, %v2861
    %v2863 = vpop.f32.mrf.mxu0
    %2864 = vmatprep.mubr.f32.mxu0 0.0
    %v2865 = vand.u32 %v2261, 4294901760
    %2866 = vmatmul.mubr.f32.gmra.mxu0 %v2865
    %v2867 = vpop.f32.mrf.mxu0
    %v2868 = vadd.f32 %v2775, %v2867
    %v2869 = vpop.f32.mrf.mxu0
    %2870 = vmatprep.mubr.f32.mxu0 0.0
    %v2871 = vand.u32 %v2264, 4294901760
    %2872 = vmatmul.mubr.f32.gmra.mxu0 %v2871
    %v2873 = vpop.f32.mrf.mxu0
    %v2874 = vadd.f32 %v2781, %v2873
    %v2875 = vpop.f32.mrf.mxu0
    %2876 = vmatprep.mubr.f32.mxu0 0.0
    %v2877 = vand.u32 %v2267, 4294901760
    %2878 = vmatmul.mubr.f32.gmra.mxu0 %v2877
    %v2879 = vpop.f32.mrf.mxu0
    %v2880 = vadd.f32 %v2787, %v2879
    %v2881 = vpop.f32.mrf.mxu0
    %2882 = vdwg.mxu0
    %v2883 = vtanh.pop %v2862
    %v2884 = vtanh.pop %v2868
    %v2885 = vtanh.pop %v2874
    %v2886 = vtanh.pop %v2880
    %v2887 = vld [vmem:[%s5] sm:$0x1]
    %v2888 = vld [vmem:[#allocation2] sm:$0x1]
    %2890 = vset.pattern.permute.xlu0 0
    %2891 = vperm.xlu0 %2890, %v2888
    %v2892 = vpop.permute.xlu0 %2891
    %v2894 = vlaneseq
    %v2895 = vshrl.u32 %v2894, 7
    %v2896 = vsub.s32 0, %v2895
    %v2897 = vrot.slane %v2892, %v2896
    %v2899 = vsel %vm936, %v2887, 0
    %2901 = vmatprep.subr.mxu0 0.0
    %2902 = vmatpush1.msra.mxu0 0.0
    %2903 = vmatprep.subr.mxu0 0.0
    %2904 = vmatpush1.msra.mxu0 0.0
    %2905 = vmatprep.subr.mxu0 0.0
    %2906 = vmatpush1.msra.mxu0 0.0
    %2907 = vmatprep.subr.mxu0 0.0
    %2908 = vmatpush1.msra.mxu0 0.0
    %2909 = vmatprep.subr.mxu0 0.0
    %2910 = vmatpush1.msra.mxu0 0.0
    %2911 = vmatprep.subr.mxu0 0.0
    %2912 = vmatpush1.msra.mxu0 0.0
    %2913 = vmatprep.subr.mxu0 0.0
    %2914 = vmatpush1.msra.mxu0 0.0
    %2915 = vmatprep.subr.mxu0 0.0
    %2916 = vmatpush1.msra.mxu0 0.0
    %2917 = vmatprep.subr.mxu0 0.0
    %2918 = vmatpush1.msra.mxu0 0.0
    %2919 = vmatprep.subr.mxu0 0.0
    %2920 = vmatpush1.msra.mxu0 0.0
    %2921 = vmatprep.subr.mxu0 0.0
    %2922 = vmatpush1.msra.mxu0 0.0
    %2923 = vmatprep.subr.mxu0 0.0
    %2924 = vmatpush1.msra.mxu0 0.0
    %2925 = vmatprep.subr.mxu0 0.0
    %v2926 = vand.u32 %v2886, 4294901760
    %2927 = vmatpush1.msra.mxu0 %v2926
    %2928 = vmatprep.subr.mxu0 0.0
    %v2929 = vand.u32 %v2885, 4294901760
    %2930 = vmatpush1.msra.mxu0 %v2929
    %2931 = vmatprep.subr.mxu0 0.0
    %v2932 = vand.u32 %v2884, 4294901760
    %2933 = vmatpush1.msra.mxu0 %v2932
    %2934 = vmatprep.subr.mxu0 0.0
    %v2935 = vand.u32 %v2883, 4294901760
    %2936 = vmatpush1.msra.mxu0 %v2935
    %2937 = vmatprep.subr.mxu0 0.0
    %2938 = vmatpush2.msra.mxu0 0.0
    %2939 = vmatprep.subr.mxu0 0.0
    %2940 = vmatpush2.msra.mxu0 0.0
    %2941 = vmatprep.subr.mxu0 0.0
    %2942 = vmatpush2.msra.mxu0 0.0
    %2943 = vmatprep.subr.mxu0 0.0
    %2944 = vmatpush2.msra.mxu0 0.0
    %2945 = vmatprep.subr.mxu0 0.0
    %2946 = vmatpush2.msra.mxu0 0.0
    %2947 = vmatprep.subr.mxu0 0.0
    %2948 = vmatpush2.msra.mxu0 0.0
    %2949 = vmatprep.subr.mxu0 0.0
    %2950 = vmatpush2.msra.mxu0 0.0
    %2951 = vmatprep.subr.mxu0 0.0
    %2952 = vmatpush2.msra.mxu0 0.0
    %2953 = vmatprep.subr.mxu0 0.0
    %2954 = vmatpush2.msra.mxu0 0.0
    %2955 = vmatprep.subr.mxu0 0.0
    %2956 = vmatpush2.msra.mxu0 0.0
    %2957 = vmatprep.subr.mxu0 0.0
    %2958 = vmatpush2.msra.mxu0 0.0
    %2959 = vmatprep.subr.mxu0 0.0
    %2960 = vmatpush2.msra.mxu0 0.0
    %2961 = vmatprep.subr.mxu0 0.0
    %2962 = vmatpush2.msra.mxu0 0.0
    %2963 = vmatprep.subr.mxu0 0.0
    %2964 = vmatpush2.msra.mxu0 0.0
    %2965 = vmatprep.subr.mxu0 0.0
    %2966 = vmatpush2.msra.mxu0 0.0
    %2967 = vmatprep.subr.mxu0 0.0
    %2968 = vmatpush2.msra.mxu0 0.0
    %2969 = vmatprep.mubr.f32.mxu0 0.0
    %v2970 = vand.u32 %v2899, 4294901760
    %v2971 = vsub.f32 %v2899, %v2970
    %v2972 = vand.u32 %v2971, 4294901760
    %v2973 = vsub.f32 %v2971, %v2972
    %v2974 = vand.u32 %v2973, 4294901760
    %2975 = vmatmul.mubr.f32.gmra.mxu0 %v2974
    %v2976 = vpop.f32.mrf.mxu0
    %v2977 = vadd.f32 %v2897, %v2976
    %v2978 = vpop.f32.mrf.mxu0
    %2979 = vdwg.mxu0
    %2980 = vmatprep.subr.mxu0 0.0
    %2981 = vmatpush1.msra.mxu0 0.0
    %2982 = vmatprep.subr.mxu0 0.0
    %2983 = vmatpush1.msra.mxu0 0.0
    %2984 = vmatprep.subr.mxu0 0.0
    %2985 = vmatpush1.msra.mxu0 0.0
    %2986 = vmatprep.subr.mxu0 0.0
    %2987 = vmatpush1.msra.mxu0 0.0
    %2988 = vmatprep.subr.mxu0 0.0
    %2989 = vmatpush1.msra.mxu0 0.0
    %2990 = vmatprep.subr.mxu0 0.0
    %2991 = vmatpush1.msra.mxu0 0.0
    %2992 = vmatprep.subr.mxu0 0.0
    %2993 = vmatpush1.msra.mxu0 0.0
    %2994 = vmatprep.subr.mxu0 0.0
    %2995 = vmatpush1.msra.mxu0 0.0
    %2996 = vmatprep.subr.mxu0 0.0
    %2997 = vmatpush1.msra.mxu0 0.0
    %2998 = vmatprep.subr.mxu0 0.0
    %2999 = vmatpush1.msra.mxu0 0.0
    %3000 = vmatprep.subr.mxu0 0.0
    %3001 = vmatpush1.msra.mxu0 0.0
    %3002 = vmatprep.subr.mxu0 0.0
    %3003 = vmatpush1.msra.mxu0 0.0
    %3004 = vmatprep.subr.mxu0 0.0
    %v3005 = vand.u32 %v2886, 4294901760
    %v3006 = vsub.f32 %v2886, %v3005
    %v3007 = vand.u32 %v3006, 4294901760
    %v3008 = vsub.f32 %v3006, %v3007
    %v3009 = vand.u32 %v3008, 4294901760
    %3010 = vmatpush1.msra.mxu0 %v3009
    %3011 = vmatprep.subr.mxu0 0.0
    %v3012 = vand.u32 %v2885, 4294901760
    %v3013 = vsub.f32 %v2885, %v3012
    %v3014 = vand.u32 %v3013, 4294901760
    %v3015 = vsub.f32 %v3013, %v3014
    %v3016 = vand.u32 %v3015, 4294901760
    %3017 = vmatpush1.msra.mxu0 %v3016
    %3018 = vmatprep.subr.mxu0 0.0
    %v3019 = vand.u32 %v2884, 4294901760
    %v3020 = vsub.f32 %v2884, %v3019
    %v3021 = vand.u32 %v3020, 4294901760
    %v3022 = vsub.f32 %v3020, %v3021
    %v3023 = vand.u32 %v3022, 4294901760
    %3024 = vmatpush1.msra.mxu0 %v3023
    %3025 = vmatprep.subr.mxu0 0.0
    %v3026 = vand.u32 %v2883, 4294901760
    %v3027 = vsub.f32 %v2883, %v3026
    %v3028 = vand.u32 %v3027, 4294901760
    %v3029 = vsub.f32 %v3027, %v3028
    %v3030 = vand.u32 %v3029, 4294901760
    %3031 = vmatpush1.msra.mxu0 %v3030
    %3032 = vmatprep.subr.mxu0 0.0
    %3033 = vmatpush2.msra.mxu0 0.0
    %3034 = vmatprep.subr.mxu0 0.0
    %3035 = vmatpush2.msra.mxu0 0.0
    %3036 = vmatprep.subr.mxu0 0.0
    %3037 = vmatpush2.msra.mxu0 0.0
    %3038 = vmatprep.subr.mxu0 0.0
    %3039 = vmatpush2.msra.mxu0 0.0
    %3040 = vmatprep.subr.mxu0 0.0
    %3041 = vmatpush2.msra.mxu0 0.0
    %3042 = vmatprep.subr.mxu0 0.0
    %3043 = vmatpush2.msra.mxu0 0.0
    %3044 = vmatprep.subr.mxu0 0.0
    %3045 = vmatpush2.msra.mxu0 0.0
    %3046 = vmatprep.subr.mxu0 0.0
    %3047 = vmatpush2.msra.mxu0 0.0
    %3048 = vmatprep.subr.mxu0 0.0
    %3049 = vmatpush2.msra.mxu0 0.0
    %3050 = vmatprep.subr.mxu0 0.0
    %3051 = vmatpush2.msra.mxu0 0.0
    %3052 = vmatprep.subr.mxu0 0.0
    %3053 = vmatpush2.msra.mxu0 0.0
    %3054 = vmatprep.subr.mxu0 0.0
    %3055 = vmatpush2.msra.mxu0 0.0
    %3056 = vmatprep.subr.mxu0 0.0
    %3057 = vmatpush2.msra.mxu0 0.0
    %3058 = vmatprep.subr.mxu0 0.0
    %3059 = vmatpush2.msra.mxu0 0.0
    %3060 = vmatprep.subr.mxu0 0.0
    %3061 = vmatpush2.msra.mxu0 0.0
    %3062 = vmatprep.subr.mxu0 0.0
    %3063 = vmatpush2.msra.mxu0 0.0
    %3064 = vmatprep.mubr.f32.mxu0 0.0
    %v3065 = vand.u32 %v2899, 4294901760
    %3066 = vmatmul.mubr.f32.gmra.mxu0 %v3065
    %v3067 = vpop.f32.mrf.mxu0
    %v3068 = vadd.f32 %v2977, %v3067
    %v3069 = vpop.f32.mrf.mxu0
    %3070 = vdwg.mxu0
    %3071 = vmatprep.subr.mxu0 0.0
    %3072 = vmatpush1.msra.mxu0 0.0
    %3073 = vmatprep.subr.mxu0 0.0
    %3074 = vmatpush1.msra.mxu0 0.0
    %3075 = vmatprep.subr.mxu0 0.0
    %3076 = vmatpush1.msra.mxu0 0.0
    %3077 = vmatprep.subr.mxu0 0.0
    %3078 = vmatpush1.msra.mxu0 0.0
    %3079 = vmatprep.subr.mxu0 0.0
    %3080 = vmatpush1.msra.mxu0 0.0
    %3081 = vmatprep.subr.mxu0 0.0
    %3082 = vmatpush1.msra.mxu0 0.0
    %3083 = vmatprep.subr.mxu0 0.0
    %3084 = vmatpush1.msra.mxu0 0.0
    %3085 = vmatprep.subr.mxu0 0.0
    %3086 = vmatpush1.msra.mxu0 0.0
    %3087 = vmatprep.subr.mxu0 0.0
    %3088 = vmatpush1.msra.mxu0 0.0
    %3089 = vmatprep.subr.mxu0 0.0
    %3090 = vmatpush1.msra.mxu0 0.0
    %3091 = vmatprep.subr.mxu0 0.0
    %3092 = vmatpush1.msra.mxu0 0.0
    %3093 = vmatprep.subr.mxu0 0.0
    %3094 = vmatpush1.msra.mxu0 0.0
    %3095 = vmatprep.subr.mxu0 0.0
    %v3096 = vand.u32 %v2886, 4294901760
    %v3097 = vsub.f32 %v2886, %v3096
    %3098 = vmatpush1.msra.mxu0 %v3097
    %3099 = vmatprep.subr.mxu0 0.0
    %v3100 = vand.u32 %v2885, 4294901760
    %v3101 = vsub.f32 %v2885, %v3100
    %3102 = vmatpush1.msra.mxu0 %v3101
    %3103 = vmatprep.subr.mxu0 0.0
    %v3104 = vand.u32 %v2884, 4294901760
    %v3105 = vsub.f32 %v2884, %v3104
    %3106 = vmatpush1.msra.mxu0 %v3105
    %3107 = vmatprep.subr.mxu0 0.0
    %v3108 = vand.u32 %v2883, 4294901760
    %v3109 = vsub.f32 %v2883, %v3108
    %3110 = vmatpush1.msra.mxu0 %v3109
    %3111 = vmatprep.subr.mxu0 0.0
    %3112 = vmatpush2.msra.mxu0 0.0
    %3113 = vmatprep.subr.mxu0 0.0
    %3114 = vmatpush2.msra.mxu0 0.0
    %3115 = vmatprep.subr.mxu0 0.0
    %3116 = vmatpush2.msra.mxu0 0.0
    %3117 = vmatprep.subr.mxu0 0.0
    %3118 = vmatpush2.msra.mxu0 0.0
    %3119 = vmatprep.subr.mxu0 0.0
    %3120 = vmatpush2.msra.mxu0 0.0
    %3121 = vmatprep.subr.mxu0 0.0
    %3122 = vmatpush2.msra.mxu0 0.0
    %3123 = vmatprep.subr.mxu0 0.0
    %3124 = vmatpush2.msra.mxu0 0.0
    %3125 = vmatprep.subr.mxu0 0.0
    %3126 = vmatpush2.msra.mxu0 0.0
    %3127 = vmatprep.subr.mxu0 0.0
    %3128 = vmatpush2.msra.mxu0 0.0
    %3129 = vmatprep.subr.mxu0 0.0
    %3130 = vmatpush2.msra.mxu0 0.0
    %3131 = vmatprep.subr.mxu0 0.0
    %3132 = vmatpush2.msra.mxu0 0.0
    %3133 = vmatprep.subr.mxu0 0.0
    %3134 = vmatpush2.msra.mxu0 0.0
    %3135 = vmatprep.subr.mxu0 0.0
    %3136 = vmatpush2.msra.mxu0 0.0
    %3137 = vmatprep.subr.mxu0 0.0
    %3138 = vmatpush2.msra.mxu0 0.0
    %3139 = vmatprep.subr.mxu0 0.0
    %3140 = vmatpush2.msra.mxu0 0.0
    %3141 = vmatprep.subr.mxu0 0.0
    %3142 = vmatpush2.msra.mxu0 0.0
    %3143 = vmatprep.mubr.f32.mxu0 0.0
    %v3144 = vand.u32 %v2899, 4294901760
    %v3145 = vsub.f32 %v2899, %v3144
    %3146 = vmatmul.mubr.f32.gmra.mxu0 %v3145
    %v3147 = vpop.f32.mrf.mxu0
    %v3148 = vadd.f32 %v3068, %v3147
    %v3149 = vpop.f32.mrf.mxu0
    %3150 = vdwg.mxu0
    %3151 = vmatprep.subr.mxu0 0.0
    %3152 = vmatpush1.msra.mxu0 0.0
    %3153 = vmatprep.subr.mxu0 0.0
    %3154 = vmatpush1.msra.mxu0 0.0
    %3155 = vmatprep.subr.mxu0 0.0
    %3156 = vmatpush1.msra.mxu0 0.0
    %3157 = vmatprep.subr.mxu0 0.0
    %3158 = vmatpush1.msra.mxu0 0.0
    %3159 = vmatprep.subr.mxu0 0.0
    %3160 = vmatpush1.msra.mxu0 0.0
    %3161 = vmatprep.subr.mxu0 0.0
    %3162 = vmatpush1.msra.mxu0 0.0
    %3163 = vmatprep.subr.mxu0 0.0
    %3164 = vmatpush1.msra.mxu0 0.0
    %3165 = vmatprep.subr.mxu0 0.0
    %3166 = vmatpush1.msra.mxu0 0.0
    %3167 = vmatprep.subr.mxu0 0.0
    %3168 = vmatpush1.msra.mxu0 0.0
    %3169 = vmatprep.subr.mxu0 0.0
    %3170 = vmatpush1.msra.mxu0 0.0
    %3171 = vmatprep.subr.mxu0 0.0
    %3172 = vmatpush1.msra.mxu0 0.0
    %3173 = vmatprep.subr.mxu0 0.0
    %3174 = vmatpush1.msra.mxu0 0.0
    %3175 = vmatprep.subr.mxu0 0.0
    %v3176 = vand.u32 %v2886, 4294901760
    %3177 = vmatpush1.msra.mxu0 %v3176
    %3178 = vmatprep.subr.mxu0 0.0
    %v3179 = vand.u32 %v2885, 4294901760
    %3180 = vmatpush1.msra.mxu0 %v3179
    %3181 = vmatprep.subr.mxu0 0.0
    %v3182 = vand.u32 %v2884, 4294901760
    %3183 = vmatpush1.msra.mxu0 %v3182
    %3184 = vmatprep.subr.mxu0 0.0
    %v3185 = vand.u32 %v2883, 4294901760
    %3186 = vmatpush1.msra.mxu0 %v3185
    %3187 = vmatprep.subr.mxu0 0.0
    %3188 = vmatpush2.msra.mxu0 0.0
    %3189 = vmatprep.subr.mxu0 0.0
    %3190 = vmatpush2.msra.mxu0 0.0
    %3191 = vmatprep.subr.mxu0 0.0
    %3192 = vmatpush2.msra.mxu0 0.0
    %3193 = vmatprep.subr.mxu0 0.0
    %3194 = vmatpush2.msra.mxu0 0.0
    %3195 = vmatprep.subr.mxu0 0.0
    %3196 = vmatpush2.msra.mxu0 0.0
    %3197 = vmatprep.subr.mxu0 0.0
    %3198 = vmatpush2.msra.mxu0 0.0
    %3199 = vmatprep.subr.mxu0 0.0
    %3200 = vmatpush2.msra.mxu0 0.0
    %3201 = vmatprep.subr.mxu0 0.0
    %3202 = vmatpush2.msra.mxu0 0.0
    %3203 = vmatprep.subr.mxu0 0.0
    %3204 = vmatpush2.msra.mxu0 0.0
    %3205 = vmatprep.subr.mxu0 0.0
    %3206 = vmatpush2.msra.mxu0 0.0
    %3207 = vmatprep.subr.mxu0 0.0
    %3208 = vmatpush2.msra.mxu0 0.0
    %3209 = vmatprep.subr.mxu0 0.0
    %3210 = vmatpush2.msra.mxu0 0.0
    %3211 = vmatprep.subr.mxu0 0.0
    %3212 = vmatpush2.msra.mxu0 0.0
    %3213 = vmatprep.subr.mxu0 0.0
    %3214 = vmatpush2.msra.mxu0 0.0
    %3215 = vmatprep.subr.mxu0 0.0
    %3216 = vmatpush2.msra.mxu0 0.0
    %3217 = vmatprep.subr.mxu0 0.0
    %3218 = vmatpush2.msra.mxu0 0.0
    %3219 = vmatprep.mubr.f32.mxu0 0.0
    %v3220 = vand.u32 %v2899, 4294901760
    %v3221 = vsub.f32 %v2899, %v3220
    %v3222 = vand.u32 %v3221, 4294901760
    %3223 = vmatmul.mubr.f32.gmra.mxu0 %v3222
    %v3224 = vpop.f32.mrf.mxu0
    %v3225 = vadd.f32 %v3148, %v3224
    %v3226 = vpop.f32.mrf.mxu0
    %3227 = vdwg.mxu0
    %3228 = vmatprep.subr.mxu0 0.0
    %3229 = vmatpush1.msra.mxu0 0.0
    %3230 = vmatprep.subr.mxu0 0.0
    %3231 = vmatpush1.msra.mxu0 0.0
    %3232 = vmatprep.subr.mxu0 0.0
    %3233 = vmatpush1.msra.mxu0 0.0
    %3234 = vmatprep.subr.mxu0 0.0
    %3235 = vmatpush1.msra.mxu0 0.0
    %3236 = vmatprep.subr.mxu0 0.0
    %3237 = vmatpush1.msra.mxu0 0.0
    %3238 = vmatprep.subr.mxu0 0.0
    %3239 = vmatpush1.msra.mxu0 0.0
    %3240 = vmatprep.subr.mxu0 0.0
    %3241 = vmatpush1.msra.mxu0 0.0
    %3242 = vmatprep.subr.mxu0 0.0
    %3243 = vmatpush1.msra.mxu0 0.0
    %3244 = vmatprep.subr.mxu0 0.0
    %3245 = vmatpush1.msra.mxu0 0.0
    %3246 = vmatprep.subr.mxu0 0.0
    %3247 = vmatpush1.msra.mxu0 0.0
    %3248 = vmatprep.subr.mxu0 0.0
    %3249 = vmatpush1.msra.mxu0 0.0
    %3250 = vmatprep.subr.mxu0 0.0
    %3251 = vmatpush1.msra.mxu0 0.0
    %3252 = vmatprep.subr.mxu0 0.0
    %v3253 = vand.u32 %v2886, 4294901760
    %v3254 = vsub.f32 %v2886, %v3253
    %v3255 = vand.u32 %v3254, 4294901760
    %3256 = vmatpush1.msra.mxu0 %v3255
    %3257 = vmatprep.subr.mxu0 0.0
    %v3258 = vand.u32 %v2885, 4294901760
    %v3259 = vsub.f32 %v2885, %v3258
    %v3260 = vand.u32 %v3259, 4294901760
    %3261 = vmatpush1.msra.mxu0 %v3260
    %3262 = vmatprep.subr.mxu0 0.0
    %v3263 = vand.u32 %v2884, 4294901760
    %v3264 = vsub.f32 %v2884, %v3263
    %v3265 = vand.u32 %v3264, 4294901760
    %3266 = vmatpush1.msra.mxu0 %v3265
    %3267 = vmatprep.subr.mxu0 0.0
    %v3268 = vand.u32 %v2883, 4294901760
    %v3269 = vsub.f32 %v2883, %v3268
    %v3270 = vand.u32 %v3269, 4294901760
    %3271 = vmatpush1.msra.mxu0 %v3270
    %3272 = vmatprep.subr.mxu0 0.0
    %3273 = vmatpush2.msra.mxu0 0.0
    %3274 = vmatprep.subr.mxu0 0.0
    %3275 = vmatpush2.msra.mxu0 0.0
    %3276 = vmatprep.subr.mxu0 0.0
    %3277 = vmatpush2.msra.mxu0 0.0
    %3278 = vmatprep.subr.mxu0 0.0
    %3279 = vmatpush2.msra.mxu0 0.0
    %3280 = vmatprep.subr.mxu0 0.0
    %3281 = vmatpush2.msra.mxu0 0.0
    %3282 = vmatprep.subr.mxu0 0.0
    %3283 = vmatpush2.msra.mxu0 0.0
    %3284 = vmatprep.subr.mxu0 0.0
    %3285 = vmatpush2.msra.mxu0 0.0
    %3286 = vmatprep.subr.mxu0 0.0
    %3287 = vmatpush2.msra.mxu0 0.0
    %3288 = vmatprep.subr.mxu0 0.0
    %3289 = vmatpush2.msra.mxu0 0.0
    %3290 = vmatprep.subr.mxu0 0.0
    %3291 = vmatpush2.msra.mxu0 0.0
    %3292 = vmatprep.subr.mxu0 0.0
    %3293 = vmatpush2.msra.mxu0 0.0
    %3294 = vmatprep.subr.mxu0 0.0
    %3295 = vmatpush2.msra.mxu0 0.0
    %3296 = vmatprep.subr.mxu0 0.0
    %3297 = vmatpush2.msra.mxu0 0.0
    %3298 = vmatprep.subr.mxu0 0.0
    %3299 = vmatpush2.msra.mxu0 0.0
    %3300 = vmatprep.subr.mxu0 0.0
    %3301 = vmatpush2.msra.mxu0 0.0
    %3302 = vmatprep.subr.mxu0 0.0
    %3303 = vmatpush2.msra.mxu0 0.0
    %3304 = vmatprep.mubr.f32.mxu0 0.0
    %v3305 = vand.u32 %v2899, 4294901760
    %3306 = vmatmul.mubr.f32.gmra.mxu0 %v3305
    %v3307 = vpop.f32.mrf.mxu0
    %v3308 = vadd.f32 %v3225, %v3307
    %v3309 = vpop.f32.mrf.mxu0
    %3310 = vdwg.mxu0
    %3311 = vmatprep.subr.mxu0 0.0
    %3312 = vmatpush1.msra.mxu0 0.0
    %3313 = vmatprep.subr.mxu0 0.0
    %3314 = vmatpush1.msra.mxu0 0.0
    %3315 = vmatprep.subr.mxu0 0.0
    %3316 = vmatpush1.msra.mxu0 0.0
    %3317 = vmatprep.subr.mxu0 0.0
    %3318 = vmatpush1.msra.mxu0 0.0
    %3319 = vmatprep.subr.mxu0 0.0
    %3320 = vmatpush1.msra.mxu0 0.0
    %3321 = vmatprep.subr.mxu0 0.0
    %3322 = vmatpush1.msra.mxu0 0.0
    %3323 = vmatprep.subr.mxu0 0.0
    %3324 = vmatpush1.msra.mxu0 0.0
    %3325 = vmatprep.subr.mxu0 0.0
    %3326 = vmatpush1.msra.mxu0 0.0
    %3327 = vmatprep.subr.mxu0 0.0
    %3328 = vmatpush1.msra.mxu0 0.0
    %3329 = vmatprep.subr.mxu0 0.0
    %3330 = vmatpush1.msra.mxu0 0.0
    %3331 = vmatprep.subr.mxu0 0.0
    %3332 = vmatpush1.msra.mxu0 0.0
    %3333 = vmatprep.subr.mxu0 0.0
    %3334 = vmatpush1.msra.mxu0 0.0
    %3335 = vmatprep.subr.mxu0 0.0
    %v3336 = vand.u32 %v2886, 4294901760
    %3337 = vmatpush1.msra.mxu0 %v3336
    %3338 = vmatprep.subr.mxu0 0.0
    %v3339 = vand.u32 %v2885, 4294901760
    %3340 = vmatpush1.msra.mxu0 %v3339
    %3341 = vmatprep.subr.mxu0 0.0
    %v3342 = vand.u32 %v2884, 4294901760
    %3343 = vmatpush1.msra.mxu0 %v3342
    %3344 = vmatprep.subr.mxu0 0.0
    %v3345 = vand.u32 %v2883, 4294901760
    %3346 = vmatpush1.msra.mxu0 %v3345
    %3347 = vmatprep.subr.mxu0 0.0
    %3348 = vmatpush2.msra.mxu0 0.0
    %3349 = vmatprep.subr.mxu0 0.0
    %3350 = vmatpush2.msra.mxu0 0.0
    %3351 = vmatprep.subr.mxu0 0.0
    %3352 = vmatpush2.msra.mxu0 0.0
    %3353 = vmatprep.subr.mxu0 0.0
    %3354 = vmatpush2.msra.mxu0 0.0
    %3355 = vmatprep.subr.mxu0 0.0
    %3356 = vmatpush2.msra.mxu0 0.0
    %3357 = vmatprep.subr.mxu0 0.0
    %3358 = vmatpush2.msra.mxu0 0.0
    %3359 = vmatprep.subr.mxu0 0.0
    %3360 = vmatpush2.msra.mxu0 0.0
    %3361 = vmatprep.subr.mxu0 0.0
    %3362 = vmatpush2.msra.mxu0 0.0
    %3363 = vmatprep.subr.mxu0 0.0
    %3364 = vmatpush2.msra.mxu0 0.0
    %3365 = vmatprep.subr.mxu0 0.0
    %3366 = vmatpush2.msra.mxu0 0.0
    %3367 = vmatprep.subr.mxu0 0.0
    %3368 = vmatpush2.msra.mxu0 0.0
    %3369 = vmatprep.subr.mxu0 0.0
    %3370 = vmatpush2.msra.mxu0 0.0
    %3371 = vmatprep.subr.mxu0 0.0
    %3372 = vmatpush2.msra.mxu0 0.0
    %3373 = vmatprep.subr.mxu0 0.0
    %3374 = vmatpush2.msra.mxu0 0.0
    %3375 = vmatprep.subr.mxu0 0.0
    %3376 = vmatpush2.msra.mxu0 0.0
    %3377 = vmatprep.subr.mxu0 0.0
    %3378 = vmatpush2.msra.mxu0 0.0
    %3379 = vmatprep.mubr.f32.mxu0 0.0
    %v3380 = vand.u32 %v2899, 4294901760
    %3381 = vmatmul.mubr.f32.gmra.mxu0 %v3380
    %v3382 = vpop.f32.mrf.mxu0
    %v3383 = vadd.f32 %v3308, %v3382
    %v3384 = vpop.f32.mrf.mxu0
    %3385 = vdwg.mxu0
    %3386 = vst [vmem:[#allocation3] sm:$0x1] %v3383
    // Predicated region
    $region30: #{tpu_custom_call.1} parent=1 // pred_check
      _
    $region31: #{tpu_custom_call.1} parent=1 // pred_check_branch
      %3388 = sbr.rel (0) target = $region33
    $region32: #{tpu_custom_call.1} parent=1 // pred_region
      %s3390 = ssub.s32 16, 16
      %3391 = vsyncadd [#allocation4], %s3390
      %s3393 = sshll.u32 [#allocation3], 4
      %s3394 = int_to_ptr.vmem [resolvable:$true] %s3393
      %3396 = dma.vmem_to_hbm [thread:$0]  %s3394, 16, %s7, [#allocation4]
    $region33: #{tpu_custom_call.1} parent=1 // pred_fallthru
      _
    // Predicated region
    $region34: #{tpu_custom_call.1} parent=1 // pred_check
      _
    $region35: #{tpu_custom_call.1} parent=1 // pred_check_branch
      %3398 = sbr.rel (0) target = $region37
    $region36: #{tpu_custom_call.1} parent=1 // pred_region
      %3399 = dma.done [#allocation4], 16
    $region37: #{tpu_custom_call.1} parent=1 // pred_fallthru
      _
    %3400 = vsyncpa [#allocation4], 1

</llo_original>
